<compile_context>
chip_gen: v5e
topology: v5e:2x2
jax: 0.10.0
libtpu: 0.0.40
codegen_flags: <defaults>
</compile_context>

<pallas_src>
import functools

import jax
import jax.numpy as jnp
from jax import lax
from jax.experimental import pallas as pl
from jax.experimental.pallas import tpu as pltpu

EPS = 1e-09
BN_EPS = 1e-05  # PyTorch BatchNorm1d default


def _decoder_b_kernel(
    z_ref, attr_ref,
    w1_ref, w2_hbm, w3_hbm, w4_hbm,
    vec_ref,
    out_ref,
    w2_buf, w3_buf, w4_buf, sem,
    *, num_attr,
):
    # Kick off the layer-2/3/4 weight DMAs immediately; they overlap the
    # layer-1 matmul + BN (manual double-buffer-style overlap, P4 pattern).
    cp2 = pltpu.make_async_copy(w2_hbm, w2_buf, sem.at[0])
    cp3 = pltpu.make_async_copy(w3_hbm, w3_buf, sem.at[1])
    cp4 = pltpu.make_async_copy(w4_hbm, w4_buf, sem.at[2])
    cp2.start()
    cp3.start()
    cp4.start()

    vecs = vec_ref[...]                 # [10, H] f32 packed biases/gammas/betas
    out_cols = out_ref.shape[1]         # 128 (lane-dense, padded)
    inv_b = 1.0 / z_ref.shape[0]

    def bn_relu(y, r):
        # BatchNorm1d, training mode (biased batch stats), single-pass:
        # sum(y) and sum(y*y) are independent reductions -> overlap in the XLU.
        g = vecs[r + 1:r + 2, :]        # BN gamma [1, H]
        be = vecs[r + 2:r + 3, :]       # BN beta  [1, H]
        mu = jnp.sum(y, axis=0, keepdims=True) * inv_b
        ex2 = jnp.sum(y * y, axis=0, keepdims=True) * inv_b
        var = ex2 - mu * mu
        scale = g * lax.rsqrt(var + BN_EPS)
        shift = be - mu * scale
        return jnp.maximum(y * scale + shift, 0.0)

    # Layer 1 (z already bf16; f32 MXU accumulation).
    y = jnp.dot(z_ref[...], w1_ref[...],
                preferred_element_type=jnp.float32) + vecs[0:1, :]
    h = bn_relu(y, 0)

    cp2.wait()
    y = jnp.dot(h.astype(jnp.bfloat16), w2_buf[...],
                preferred_element_type=jnp.float32) + vecs[3:4, :]
    h = bn_relu(y, 3)

    cp3.wait()
    y = jnp.dot(h.astype(jnp.bfloat16), w3_buf[...],
                preferred_element_type=jnp.float32) + vecs[6:7, :]
    h = bn_relu(y, 6)

    cp4.wait()
    b4 = vec_ref[pl.ds(9, 1), pl.ds(0, out_cols)]                  # [1, 128]
    logits = jnp.dot(h.astype(jnp.bfloat16), w4_buf[...],
                     preferred_element_type=jnp.float32) + b4      # [B, 128]

    # pred_labels = logsigmoid(logits + EPS)   (numerically stable form)
    zl = logits + EPS
    pred = jnp.minimum(zl, 0.0) - jnp.log1p(jnp.exp(-jnp.abs(zl)))

    # F.binary_cross_entropy_with_logits(pred, attrs, reduction='none').sum(1)
    # NOTE: applied to pred (the log-sigmoid output), faithfully matching the
    # original PyTorch code -- do not "fix" to raw logits.
    col = lax.broadcasted_iota(jnp.int32, pred.shape, 1)
    valid = col < num_attr
    t = attr_ref[...]                                              # [B,128] zero-padded
    bce = jnp.maximum(pred, 0.0) - pred * t + jnp.log1p(jnp.exp(-jnp.abs(pred)))
    loss_row = jnp.sum(jnp.where(valid, bce, 0.0), axis=1, keepdims=True)  # [B,1]

    # One lane-dense [B, 128] store: cols [0, A) = pred_labels, col A = loss.
    out = jnp.where(valid, pred, 0.0) + jnp.where(col == num_attr, loss_row, 0.0)
    out_ref[...] = out.astype(out_ref.dtype)


@functools.partial(jax.jit, static_argnames=("num_attr",))
def decoder_b_forward(z_shared, attributes, kparams, *, num_attr):
    """Fused DecoderB forward.

    Pass the full minibatch in one call (weight DMA amortizes over B; keep B a
    multiple of 16 for bf16 sublane packing).  Returns
    (pred_labels [B, num_attr], per-sample BCE loss [B]).
    """
    B = z_shared.shape[0]
    H = kparams["w1"].shape[1]
    out_cols = kparams["w4"].shape[1]        # lane-dense padded width (>num_attr)

    z_bf16 = z_shared.astype(jnp.bfloat16)
    attr_pad = jnp.pad(attributes.astype(jnp.float32),
                       ((0, 0), (0, out_cols - attributes.shape[1])))

    vmem = pl.BlockSpec(memory_space=pltpu.MemorySpace.VMEM)
    hbm = pl.BlockSpec(memory_space=pl.ANY)  # raw ref; DMA'd manually in-kernel

    out = pl.pallas_call(
        functools.partial(_decoder_b_kernel, num_attr=num_attr),
        out_shape=jax.ShapeDtypeStruct((B, out_cols), jnp.float32),
        in_specs=[vmem, vmem, vmem, hbm, hbm, hbm, vmem],
        out_specs=vmem,
        scratch_shapes=[
            pltpu.VMEM((H, H), jnp.bfloat16),          # w2 landing buffer
            pltpu.VMEM((H, H), jnp.bfloat16),          # w3 landing buffer
            pltpu.VMEM((H, out_cols), jnp.bfloat16),   # w4 landing buffer (padded)
            pltpu.SemaphoreType.DMA((3,)),
        ],
    )(
        z_bf16, attr_pad,
        kparams["w1"], kparams["w2"], kparams["w3"], kparams["w4"],
        kparams["vecs"],
    )
    return out[:, :num_attr], out[:, num_attr]


def _kaiming_like(key, fan_in, fan_out):
    # Deterministic stand-in for kaiming_init: He-normal, stored as [in, out].
    std = jnp.sqrt(2.0 / fan_in)
    return jax.random.normal(key, (fan_in, fan_out), jnp.float32) * std


def make_params(key, z_dim=18, hidden=512, num_attr=18):
    """Full-precision (f32) parameter dict, PyTorch-equivalent layout."""
    ks = jax.random.split(key, 4)
    return {
        "w1": _kaiming_like(ks[0], z_dim, hidden),
        "b1": jnp.zeros((1, hidden), jnp.float32),
        "g1": jnp.ones((1, hidden), jnp.float32),
        "be1": jnp.zeros((1, hidden), jnp.float32),
        "w2": _kaiming_like(ks[1], hidden, hidden),
        "b2": jnp.zeros((1, hidden), jnp.float32),
        "g2": jnp.ones((1, hidden), jnp.float32),
        "be2": jnp.zeros((1, hidden), jnp.float32),
        "w3": _kaiming_like(ks[2], hidden, hidden),
        "b3": jnp.zeros((1, hidden), jnp.float32),
        "g3": jnp.ones((1, hidden), jnp.float32),
        "be3": jnp.zeros((1, hidden), jnp.float32),
        "w4": _kaiming_like(ks[3], hidden, num_attr),
        "b4": jnp.zeros((1, num_attr), jnp.float32),
    }


def pack_params(p):
    """Kernel-ready params: bf16 weights (w4 lane-padded to 128 cols) plus one
    packed [10, hidden] f32 vector buffer (biases / BN gamma / BN beta / b4)."""
    hidden = p["w1"].shape[1]
    num_attr = p["w4"].shape[1]
    out_cols = (num_attr // 128 + 1) * 128    # strictly > num_attr, lane-dense
    assert out_cols <= hidden

    def row(v):
        v = v.reshape(1, -1).astype(jnp.float32)
        return jnp.pad(v, ((0, 0), (0, hidden - v.shape[1])))

    vecs = jnp.concatenate(
        [row(p[k]) for k in
         ("b1", "g1", "be1", "b2", "g2", "be2", "b3", "g3", "be3", "b4")],
        axis=0,
    )  # [10, hidden]

    w4_pad = jnp.pad(p["w4"], ((0, 0), (0, out_cols - num_attr)))

    return {
        "w1": p["w1"].astype(jnp.bfloat16),
        "w2": p["w2"].astype(jnp.bfloat16),
        "w3": p["w3"].astype(jnp.bfloat16),
        "w4": w4_pad.astype(jnp.bfloat16),
        "vecs": vecs,
    }


def _reference_forward(z, attrs, p):
    """Plain-JAX reference (same bf16 weight quantization as the kernel)."""
    def lbr(h, w, b, g, be):
        y = jnp.dot(h.astype(jnp.bfloat16), w.astype(jnp.bfloat16),
                    preferred_element_type=jnp.float32) + b
        mu = jnp.mean(y, axis=0, keepdims=True)
        var = jnp.mean((y - mu) ** 2, axis=0, keepdims=True)
        return jnp.maximum(g * (y - mu) * lax.rsqrt(var + BN_EPS) + be, 0.0)

    h = lbr(z, p["w1"], p["b1"], p["g1"], p["be1"])
    h = lbr(h, p["w2"], p["b2"], p["g2"], p["be2"])
    h = lbr(h, p["w3"], p["b3"], p["g3"], p["be3"])
    logits = jnp.dot(h.astype(jnp.bfloat16), p["w4"].astype(jnp.bfloat16),
                     preferred_element_type=jnp.float32) + p["b4"] + EPS
    pred = jax.nn.log_sigmoid(logits)
    bce = jnp.maximum(pred, 0.0) - pred * attrs + jnp.log1p(jnp.exp(-jnp.abs(pred)))
    return pred, jnp.sum(bce, axis=1)


if __name__ == "__main__":
    # TODO(synk): probtorch Trace construction (p.normal / p.loss registration)
    # is framework bookkeeping with no Pallas equivalent; only its numerical
    # outputs (pred_labels, per-sample BCE loss) are produced here.
    B, Z_DIM, HIDDEN, NUM_ATTR = 64, 18, 512, 18   # B multiple of 16 (bf16 LHS)

    key = jax.random.PRNGKey(0)
    k_z, k_a, k_p = jax.random.split(key, 3)

    z_shared = jax.random.normal(k_z, (B, Z_DIM), jnp.float32)
    attributes = (jax.random.uniform(k_a, (B, NUM_ATTR)) > 0.5).astype(jnp.float32)
    params = make_params(k_p, Z_DIM, HIDDEN, NUM_ATTR)
    kparams = pack_params(params)

    pred, loss = decoder_b_forward(z_shared, attributes, kparams, num_attr=NUM_ATTR)
    jax.block_until_ready((pred, loss))

    ref_pred, ref_loss = _reference_forward(z_shared, attributes, params)
    assert pred.shape == (B, NUM_ATTR) and loss.shape == (B,)
    # bf16 weights/activations in both paths (plus single- vs two-pass BN
    # variance ordering); tolerances loosened accordingly.
    assert jnp.allclose(pred, ref_pred, atol=5e-3, rtol=5e-3)
    assert jnp.allclose(loss, ref_loss, atol=5e-2, rtol=5e-3)

    print("KERNEL_OK")
</pallas_src>

<mosaic_0001>
module attributes {stable_mosaic.version = 11 : i64} {
  func.func @_decoder_b_kernel(%arg0: memref<64x18xbf16, #tpu.memory_space<vmem>>, %arg1: memref<64x128xf32, #tpu.memory_space<vmem>>, %arg2: memref<18x512xbf16, #tpu.memory_space<vmem>>, %arg3: memref<512x512xbf16, #tpu.memory_space<any>>, %arg4: memref<512x512xbf16, #tpu.memory_space<any>>, %arg5: memref<512x128xbf16, #tpu.memory_space<any>>, %arg6: memref<10x512xf32, #tpu.memory_space<vmem>>, %arg7: memref<64x128xf32, #tpu.memory_space<vmem>>, %arg8: memref<512x512xbf16, #tpu.memory_space<vmem>>, %arg9: memref<512x512xbf16, #tpu.memory_space<vmem>>, %arg10: memref<512x128xbf16, #tpu.memory_space<vmem>>, %arg11: memref<3x!tpu.dma_semaphore, #tpu.memory_space<semaphore_mem>>) attributes {dimension_semantics = [], scalar_prefetch = 0 : i64, scratch_operands = 4 : i64, tpu.core_type = #tpu.core_type<tc>} {
    %c0_i32 = arith.constant 0 : i32
    %0 = tpu.memref_slice %arg11[%c0_i32] : memref<3x!tpu.dma_semaphore, #tpu.memory_space<semaphore_mem>> -> memref<1x!tpu.dma_semaphore, #tpu.memory_space<semaphore_mem>>
    %1 = tpu.memref_squeeze %0 : memref<1x!tpu.dma_semaphore, #tpu.memory_space<semaphore_mem>> -> memref<!tpu.dma_semaphore, #tpu.memory_space<semaphore_mem>>
    tpu.enqueue_dma source(%arg3 : memref<512x512xbf16, #tpu.memory_space<any>>) target(%arg8 : memref<512x512xbf16, #tpu.memory_space<vmem>>) target_semaphore(%1 : memref<!tpu.dma_semaphore, #tpu.memory_space<semaphore_mem>>)
    %c1_i32 = arith.constant 1 : i32
    %2 = tpu.memref_slice %arg11[%c1_i32] : memref<3x!tpu.dma_semaphore, #tpu.memory_space<semaphore_mem>> -> memref<1x!tpu.dma_semaphore, #tpu.memory_space<semaphore_mem>>
    %3 = tpu.memref_squeeze %2 : memref<1x!tpu.dma_semaphore, #tpu.memory_space<semaphore_mem>> -> memref<!tpu.dma_semaphore, #tpu.memory_space<semaphore_mem>>
    tpu.enqueue_dma source(%arg4 : memref<512x512xbf16, #tpu.memory_space<any>>) target(%arg9 : memref<512x512xbf16, #tpu.memory_space<vmem>>) target_semaphore(%3 : memref<!tpu.dma_semaphore, #tpu.memory_space<semaphore_mem>>)
    %c2_i32 = arith.constant 2 : i32
    %4 = tpu.memref_slice %arg11[%c2_i32] : memref<3x!tpu.dma_semaphore, #tpu.memory_space<semaphore_mem>> -> memref<1x!tpu.dma_semaphore, #tpu.memory_space<semaphore_mem>>
    %5 = tpu.memref_squeeze %4 : memref<1x!tpu.dma_semaphore, #tpu.memory_space<semaphore_mem>> -> memref<!tpu.dma_semaphore, #tpu.memory_space<semaphore_mem>>
    tpu.enqueue_dma source(%arg5 : memref<512x128xbf16, #tpu.memory_space<any>>) target(%arg10 : memref<512x128xbf16, #tpu.memory_space<vmem>>) target_semaphore(%5 : memref<!tpu.dma_semaphore, #tpu.memory_space<semaphore_mem>>)
    %c0 = arith.constant 0 : index
    %c0_0 = arith.constant 0 : index
    %6 = vector.load %arg6[%c0, %c0_0] : memref<10x512xf32, #tpu.memory_space<vmem>>, vector<10x512xf32>
    %c0_1 = arith.constant 0 : index
    %c0_2 = arith.constant 0 : index
    %7 = vector.load %arg0[%c0_1, %c0_2] : memref<64x18xbf16, #tpu.memory_space<vmem>>, vector<64x18xbf16>
    %c0_3 = arith.constant 0 : index
    %c0_4 = arith.constant 0 : index
    %8 = vector.load %arg2[%c0_3, %c0_4] : memref<18x512xbf16, #tpu.memory_space<vmem>>, vector<18x512xbf16>
    %cst = arith.constant dense<0.000000e+00> : vector<64x512xf32>
    %9 = tpu.matmul %7, %8, %cst {dimension_numbers = #tpu.dot_dimension_numbers<[1], [0], [0], [1], [0, 0, 1, 1], [], []>} : vector<64x18xbf16>, vector<18x512xbf16>, vector<64x512xf32> -> vector<64x512xf32>
    %10 = vector.extract_strided_slice %6 {offsets = [0, 0], sizes = [1, 512], strides = [1, 1]} : vector<10x512xf32> to vector<1x512xf32>
    %11 = vector.broadcast %10 : vector<1x512xf32> to vector<64x512xf32>
    %12 = arith.addf %9, %11 : vector<64x512xf32>
    %13 = vector.extract_strided_slice %6 {offsets = [1, 0], sizes = [1, 512], strides = [1, 1]} : vector<10x512xf32> to vector<1x512xf32>
    %14 = vector.extract_strided_slice %6 {offsets = [2, 0], sizes = [1, 512], strides = [1, 1]} : vector<10x512xf32> to vector<1x512xf32>
    %cst_5 = arith.constant dense<0.000000e+00> : vector<512xf32>
    %15 = vector.multi_reduction <add>, %12, %cst_5 [0] : vector<64x512xf32> to vector<512xf32>
    %16 = vector.shape_cast %15 : vector<512xf32> to vector<1x512xf32>
    %cst_6 = arith.constant 1.562500e-02 : f32
    %17 = vector.broadcast %cst_6 : f32 to vector<1x512xf32>
    %18 = arith.mulf %16, %17 : vector<1x512xf32>
    %19 = arith.mulf %12, %12 : vector<64x512xf32>
    %cst_7 = arith.constant dense<0.000000e+00> : vector<512xf32>
    %20 = vector.multi_reduction <add>, %19, %cst_7 [0] : vector<64x512xf32> to vector<512xf32>
    %21 = vector.shape_cast %20 : vector<512xf32> to vector<1x512xf32>
    %cst_8 = arith.constant 1.562500e-02 : f32
    %22 = vector.broadcast %cst_8 : f32 to vector<1x512xf32>
    %23 = arith.mulf %21, %22 : vector<1x512xf32>
    %24 = arith.mulf %18, %18 : vector<1x512xf32>
    %25 = arith.subf %23, %24 : vector<1x512xf32>
    %cst_9 = arith.constant 9.99999974E-6 : f32
    %26 = vector.broadcast %cst_9 : f32 to vector<1x512xf32>
    %27 = arith.addf %25, %26 : vector<1x512xf32>
    %28 = math.rsqrt %27 : vector<1x512xf32>
    %29 = arith.mulf %13, %28 : vector<1x512xf32>
    %30 = arith.mulf %18, %29 : vector<1x512xf32>
    %31 = arith.subf %14, %30 : vector<1x512xf32>
    %32 = vector.broadcast %29 : vector<1x512xf32> to vector<64x512xf32>
    %33 = arith.mulf %12, %32 : vector<64x512xf32>
    %34 = vector.broadcast %31 : vector<1x512xf32> to vector<64x512xf32>
    %35 = arith.addf %33, %34 : vector<64x512xf32>
    %cst_10 = arith.constant 0.000000e+00 : f32
    %36 = vector.broadcast %cst_10 : f32 to vector<64x512xf32>
    %37 = arith.maximumf %35, %36 : vector<64x512xf32>
    %c0_i32_11 = arith.constant 0 : i32
    %38 = tpu.memref_slice %arg11[%c0_i32_11] : memref<3x!tpu.dma_semaphore, #tpu.memory_space<semaphore_mem>> -> memref<1x!tpu.dma_semaphore, #tpu.memory_space<semaphore_mem>>
    %39 = tpu.memref_squeeze %38 : memref<1x!tpu.dma_semaphore, #tpu.memory_space<semaphore_mem>> -> memref<!tpu.dma_semaphore, #tpu.memory_space<semaphore_mem>>
    tpu.wait_dma2 semaphore(%39 : memref<!tpu.dma_semaphore, #tpu.memory_space<semaphore_mem>>) src(%arg3 : memref<512x512xbf16, #tpu.memory_space<any>>) dst(%arg8 : memref<512x512xbf16, #tpu.memory_space<vmem>>)
    %40 = arith.truncf %37 : vector<64x512xf32> to vector<64x512xbf16>
    %c0_12 = arith.constant 0 : index
    %c0_13 = arith.constant 0 : index
    %41 = vector.load %arg8[%c0_12, %c0_13] : memref<512x512xbf16, #tpu.memory_space<vmem>>, vector<512x512xbf16>
    %cst_14 = arith.constant dense<0.000000e+00> : vector<64x512xf32>
    %42 = tpu.matmul %40, %41, %cst_14 {dimension_numbers = #tpu.dot_dimension_numbers<[1], [0], [0], [1], [0, 0, 1, 1], [], []>} : vector<64x512xbf16>, vector<512x512xbf16>, vector<64x512xf32> -> vector<64x512xf32>
    %43 = vector.extract_strided_slice %6 {offsets = [3, 0], sizes = [1, 512], strides = [1, 1]} : vector<10x512xf32> to vector<1x512xf32>
    %44 = vector.broadcast %43 : vector<1x512xf32> to vector<64x512xf32>
    %45 = arith.addf %42, %44 : vector<64x512xf32>
    %46 = vector.extract_strided_slice %6 {offsets = [4, 0], sizes = [1, 512], strides = [1, 1]} : vector<10x512xf32> to vector<1x512xf32>
    %47 = vector.extract_strided_slice %6 {offsets = [5, 0], sizes = [1, 512], strides = [1, 1]} : vector<10x512xf32> to vector<1x512xf32>
    %cst_15 = arith.constant dense<0.000000e+00> : vector<512xf32>
    %48 = vector.multi_reduction <add>, %45, %cst_15 [0] : vector<64x512xf32> to vector<512xf32>
    %49 = vector.shape_cast %48 : vector<512xf32> to vector<1x512xf32>
    %cst_16 = arith.constant 1.562500e-02 : f32
    %50 = vector.broadcast %cst_16 : f32 to vector<1x512xf32>
    %51 = arith.mulf %49, %50 : vector<1x512xf32>
    %52 = arith.mulf %45, %45 : vector<64x512xf32>
    %cst_17 = arith.constant dense<0.000000e+00> : vector<512xf32>
    %53 = vector.multi_reduction <add>, %52, %cst_17 [0] : vector<64x512xf32> to vector<512xf32>
    %54 = vector.shape_cast %53 : vector<512xf32> to vector<1x512xf32>
    %cst_18 = arith.constant 1.562500e-02 : f32
    %55 = vector.broadcast %cst_18 : f32 to vector<1x512xf32>
    %56 = arith.mulf %54, %55 : vector<1x512xf32>
    %57 = arith.mulf %51, %51 : vector<1x512xf32>
    %58 = arith.subf %56, %57 : vector<1x512xf32>
    %cst_19 = arith.constant 9.99999974E-6 : f32
    %59 = vector.broadcast %cst_19 : f32 to vector<1x512xf32>
    %60 = arith.addf %58, %59 : vector<1x512xf32>
    %61 = math.rsqrt %60 : vector<1x512xf32>
    %62 = arith.mulf %46, %61 : vector<1x512xf32>
    %63 = arith.mulf %51, %62 : vector<1x512xf32>
    %64 = arith.subf %47, %63 : vector<1x512xf32>
    %65 = vector.broadcast %62 : vector<1x512xf32> to vector<64x512xf32>
    %66 = arith.mulf %45, %65 : vector<64x512xf32>
    %67 = vector.broadcast %64 : vector<1x512xf32> to vector<64x512xf32>
    %68 = arith.addf %66, %67 : vector<64x512xf32>
    %cst_20 = arith.constant 0.000000e+00 : f32
    %69 = vector.broadcast %cst_20 : f32 to vector<64x512xf32>
    %70 = arith.maximumf %68, %69 : vector<64x512xf32>
    %c1_i32_21 = arith.constant 1 : i32
    %71 = tpu.memref_slice %arg11[%c1_i32_21] : memref<3x!tpu.dma_semaphore, #tpu.memory_space<semaphore_mem>> -> memref<1x!tpu.dma_semaphore, #tpu.memory_space<semaphore_mem>>
    %72 = tpu.memref_squeeze %71 : memref<1x!tpu.dma_semaphore, #tpu.memory_space<semaphore_mem>> -> memref<!tpu.dma_semaphore, #tpu.memory_space<semaphore_mem>>
    tpu.wait_dma2 semaphore(%72 : memref<!tpu.dma_semaphore, #tpu.memory_space<semaphore_mem>>) src(%arg4 : memref<512x512xbf16, #tpu.memory_space<any>>) dst(%arg9 : memref<512x512xbf16, #tpu.memory_space<vmem>>)
    %73 = arith.truncf %70 : vector<64x512xf32> to vector<64x512xbf16>
    %c0_22 = arith.constant 0 : index
    %c0_23 = arith.constant 0 : index
    %74 = vector.load %arg9[%c0_22, %c0_23] : memref<512x512xbf16, #tpu.memory_space<vmem>>, vector<512x512xbf16>
    %cst_24 = arith.constant dense<0.000000e+00> : vector<64x512xf32>
    %75 = tpu.matmul %73, %74, %cst_24 {dimension_numbers = #tpu.dot_dimension_numbers<[1], [0], [0], [1], [0, 0, 1, 1], [], []>} : vector<64x512xbf16>, vector<512x512xbf16>, vector<64x512xf32> -> vector<64x512xf32>
    %76 = vector.extract_strided_slice %6 {offsets = [6, 0], sizes = [1, 512], strides = [1, 1]} : vector<10x512xf32> to vector<1x512xf32>
    %77 = vector.broadcast %76 : vector<1x512xf32> to vector<64x512xf32>
    %78 = arith.addf %75, %77 : vector<64x512xf32>
    %79 = vector.extract_strided_slice %6 {offsets = [7, 0], sizes = [1, 512], strides = [1, 1]} : vector<10x512xf32> to vector<1x512xf32>
    %80 = vector.extract_strided_slice %6 {offsets = [8, 0], sizes = [1, 512], strides = [1, 1]} : vector<10x512xf32> to vector<1x512xf32>
    %cst_25 = arith.constant dense<0.000000e+00> : vector<512xf32>
    %81 = vector.multi_reduction <add>, %78, %cst_25 [0] : vector<64x512xf32> to vector<512xf32>
    %82 = vector.shape_cast %81 : vector<512xf32> to vector<1x512xf32>
    %cst_26 = arith.constant 1.562500e-02 : f32
    %83 = vector.broadcast %cst_26 : f32 to vector<1x512xf32>
    %84 = arith.mulf %82, %83 : vector<1x512xf32>
    %85 = arith.mulf %78, %78 : vector<64x512xf32>
    %cst_27 = arith.constant dense<0.000000e+00> : vector<512xf32>
    %86 = vector.multi_reduction <add>, %85, %cst_27 [0] : vector<64x512xf32> to vector<512xf32>
    %87 = vector.shape_cast %86 : vector<512xf32> to vector<1x512xf32>
    %cst_28 = arith.constant 1.562500e-02 : f32
    %88 = vector.broadcast %cst_28 : f32 to vector<1x512xf32>
    %89 = arith.mulf %87, %88 : vector<1x512xf32>
    %90 = arith.mulf %84, %84 : vector<1x512xf32>
    %91 = arith.subf %89, %90 : vector<1x512xf32>
    %cst_29 = arith.constant 9.99999974E-6 : f32
    %92 = vector.broadcast %cst_29 : f32 to vector<1x512xf32>
    %93 = arith.addf %91, %92 : vector<1x512xf32>
    %94 = math.rsqrt %93 : vector<1x512xf32>
    %95 = arith.mulf %79, %94 : vector<1x512xf32>
    %96 = arith.mulf %84, %95 : vector<1x512xf32>
    %97 = arith.subf %80, %96 : vector<1x512xf32>
    %98 = vector.broadcast %95 : vector<1x512xf32> to vector<64x512xf32>
    %99 = arith.mulf %78, %98 : vector<64x512xf32>
    %100 = vector.broadcast %97 : vector<1x512xf32> to vector<64x512xf32>
    %101 = arith.addf %99, %100 : vector<64x512xf32>
    %cst_30 = arith.constant 0.000000e+00 : f32
    %102 = vector.broadcast %cst_30 : f32 to vector<64x512xf32>
    %103 = arith.maximumf %101, %102 : vector<64x512xf32>
    %c2_i32_31 = arith.constant 2 : i32
    %104 = tpu.memref_slice %arg11[%c2_i32_31] : memref<3x!tpu.dma_semaphore, #tpu.memory_space<semaphore_mem>> -> memref<1x!tpu.dma_semaphore, #tpu.memory_space<semaphore_mem>>
    %105 = tpu.memref_squeeze %104 : memref<1x!tpu.dma_semaphore, #tpu.memory_space<semaphore_mem>> -> memref<!tpu.dma_semaphore, #tpu.memory_space<semaphore_mem>>
    tpu.wait_dma2 semaphore(%105 : memref<!tpu.dma_semaphore, #tpu.memory_space<semaphore_mem>>) src(%arg5 : memref<512x128xbf16, #tpu.memory_space<any>>) dst(%arg10 : memref<512x128xbf16, #tpu.memory_space<vmem>>)
    %c9 = arith.constant 9 : index
    %c0_32 = arith.constant 0 : index
    %106 = vector.load %arg6[%c9, %c0_32] : memref<10x512xf32, #tpu.memory_space<vmem>>, vector<1x128xf32>
    %107 = arith.truncf %103 : vector<64x512xf32> to vector<64x512xbf16>
    %c0_33 = arith.constant 0 : index
    %c0_34 = arith.constant 0 : index
    %108 = vector.load %arg10[%c0_33, %c0_34] : memref<512x128xbf16, #tpu.memory_space<vmem>>, vector<512x128xbf16>
    %cst_35 = arith.constant dense<0.000000e+00> : vector<64x128xf32>
    %109 = tpu.matmul %107, %108, %cst_35 {dimension_numbers = #tpu.dot_dimension_numbers<[1], [0], [0], [1], [0, 0, 1, 1], [], []>} : vector<64x512xbf16>, vector<512x128xbf16>, vector<64x128xf32> -> vector<64x128xf32>
    %110 = vector.broadcast %106 : vector<1x128xf32> to vector<64x128xf32>
    %111 = arith.addf %109, %110 : vector<64x128xf32>
    %cst_36 = arith.constant 9.99999971E-10 : f32
    %112 = vector.broadcast %cst_36 : f32 to vector<64x128xf32>
    %113 = arith.addf %111, %112 : vector<64x128xf32>
    %cst_37 = arith.constant 0.000000e+00 : f32
    %114 = vector.broadcast %cst_37 : f32 to vector<64x128xf32>
    %115 = arith.minimumf %113, %114 : vector<64x128xf32>
    %116 = math.absf %113 : vector<64x128xf32>
    %cst_38 = arith.constant 0.000000e+00 : f32
    %117 = vector.broadcast %cst_38 : f32 to vector<64x128xf32>
    %118 = arith.subf %117, %116 : vector<64x128xf32>
    %119 = math.exp %118 : vector<64x128xf32>
    %120 = math.log1p %119 : vector<64x128xf32>
    %121 = arith.subf %115, %120 : vector<64x128xf32>
    %122 = tpu.iota {dimensions = array<i32: 1>} : vector<64x128xi32>
    %c18_i32 = arith.constant 18 : i32
    %123 = vector.broadcast %c18_i32 : i32 to vector<64x128xi32>
    %124 = arith.cmpi slt, %122, %123 : vector<64x128xi32>
    %c0_39 = arith.constant 0 : index
    %c0_40 = arith.constant 0 : index
    %125 = vector.load %arg1[%c0_39, %c0_40] : memref<64x128xf32, #tpu.memory_space<vmem>>, vector<64x128xf32>
    %cst_41 = arith.constant 0.000000e+00 : f32
    %126 = vector.broadcast %cst_41 : f32 to vector<64x128xf32>
    %127 = arith.maximumf %121, %126 : vector<64x128xf32>
    %128 = arith.mulf %121, %125 : vector<64x128xf32>
    %129 = arith.subf %127, %128 : vector<64x128xf32>
    %130 = math.absf %121 : vector<64x128xf32>
    %cst_42 = arith.constant 0.000000e+00 : f32
    %131 = vector.broadcast %cst_42 : f32 to vector<64x128xf32>
    %132 = arith.subf %131, %130 : vector<64x128xf32>
    %133 = math.exp %132 : vector<64x128xf32>
    %134 = math.log1p %133 : vector<64x128xf32>
    %135 = arith.addf %129, %134 : vector<64x128xf32>
    %cst_43 = arith.constant 0.000000e+00 : f32
    %136 = vector.broadcast %cst_43 : f32 to vector<64x128xf32>
    %137 = arith.select %124, %135, %136 : vector<64x128xi1>, vector<64x128xf32>
    %cst_44 = arith.constant dense<0.000000e+00> : vector<64xf32>
    %138 = vector.multi_reduction <add>, %137, %cst_44 [1] : vector<64x128xf32> to vector<64xf32>
    %139 = vector.shape_cast %138 : vector<64xf32> to vector<64x1xf32>
    %cst_45 = arith.constant 0.000000e+00 : f32
    %140 = vector.broadcast %cst_45 : f32 to vector<64x128xf32>
    %141 = arith.select %124, %121, %140 : vector<64x128xi1>, vector<64x128xf32>
    %c18_i32_46 = arith.constant 18 : i32
    %142 = vector.broadcast %c18_i32_46 : i32 to vector<64x128xi32>
    %143 = arith.cmpi eq, %122, %142 : vector<64x128xi32>
    %cst_47 = arith.constant 0.000000e+00 : f32
    %144 = vector.shape_cast %139 : vector<64x1xf32> to vector<64x1xf32>
    %145 = vector.broadcast %144 : vector<64x1xf32> to vector<64x128xf32>
    %146 = vector.broadcast %cst_47 : f32 to vector<64x128xf32>
    %147 = arith.select %143, %145, %146 : vector<64x128xi1>, vector<64x128xf32>
    %148 = arith.addf %141, %147 : vector<64x128xf32>
    %c0_48 = arith.constant 0 : index
    %c0_49 = arith.constant 0 : index
    %149 = vector.load %arg7[%c0_48, %c0_49] : memref<64x128xf32, #tpu.memory_space<vmem>>, vector<64x128xf32>
    tpu.vector_store %arg7[%c0_48, %c0_49], %148 {strides = array<i32>} : memref<64x128xf32, #tpu.memory_space<vmem>>, vector<64x128xf32>,
    return
  }
}

</mosaic_0001>

<llo_original>
// kernel: decoder_b_forward.1
$region0: #{decoder_b_forward.1}
  #allocation0 [shape = 'u32[]', space=smem, size = 0x4, offset = 0x4, fixed_abs, tag = 'smem constant byte address 0x4 - core index']
  #allocation1 [shape = 'u32[72,128]{1,0:T(1,128)}', space=vmem, size = 0x9000, scoped, tag = 'internal scratch']
  #allocation2 [shape = 'bf16[512,512]{1,0:T(8,128)(2,1)}', space=vmem, size = 0x80000, scoped, tag = 'scratch operand']
  #allocation3 [shape = 'bf16[512,512]{1,0:T(8,128)(2,1)}', space=vmem, size = 0x80000, scoped, tag = 'scratch operand']
  #allocation4 [shape = 'bf16[512,128]{1,0:T(8,128)(2,1)}', space=vmem, size = 0x20000, scoped, tag = 'scratch operand']
  #allocation5 [shape = 's32[3]{0}', space=sflag, size = 0xc, scoped, tag = 'scratch operand']
  #allocation6 [shape = 's32[]', space=sflag, size = 0x4, offset = 0, fixed_abs, tag = 'sflag constant byte address 0x0 - dummy sync flag']
  #allocation7 [shape = 's32[]', space=sflag, size = 0x4, offset = 0, fixed_abs, tag = 'sflag constant byte address 0x0 - dummy sync flag']
  #allocation8 [shape = 'u32[]', space=smem, size = 0x4, offset = 0x44, fixed_abs, tag = 'smem constant byte address 0x44 - assertion arg 0']
  #allocation9 [shape = 'u32[]', space=smem, size = 0x4, offset = 0x48, fixed_abs, tag = 'smem constant byte address 0x48 - assertion arg 1']
  #allocation10 [shape = 's32[]', space=sflag, size = 0x4, offset = 0, fixed_abs, tag = 'sflag constant byte address 0x0 - dummy sync flag']
  #allocation11 [shape = 's32[]', space=sflag, size = 0x4, offset = 0, fixed_abs, tag = 'sflag constant byte address 0x0 - dummy sync flag']
  #allocation12 [shape = 's32[]', space=sflag, size = 0x4, offset = 0, fixed_abs, tag = 'sflag constant byte address 0x0 - dummy sync flag']
  #allocation13 [shape = 's32[]', space=sflag, size = 0x4, offset = 0, fixed_abs, tag = 'sflag constant byte address 0x0 - dummy sync flag']
  %s0 = inlined_call_operand.vmem [shape: bf16[64,18], index: 0, kind: input, shape index: {}]
  %s1 = inlined_call_operand.vmem [shape: f32[64,128], index: 1, kind: input, shape index: {}]
  %s2 = inlined_call_operand.vmem [shape: bf16[18,512], index: 2, kind: input, shape index: {}]
  %s3 = inlined_call_operand.hbm [shape: bf16[512,512], index: 3, kind: input, shape index: {}]
  %s4 = inlined_call_operand.hbm [shape: bf16[512,512], index: 4, kind: input, shape index: {}]
  %s5 = inlined_call_operand.hbm [shape: bf16[512,128], index: 5, kind: input, shape index: {}]
  %s6 = inlined_call_operand.vmem [shape: f32[10,512], index: 6, kind: input, shape index: {}]
  %s7 = inlined_call_operand.vmem [shape: f32[64,128], index: 7, kind: output, shape index: {}]
  %s8 = sld [smem:[#allocation0]]
  $region38: #{decoder_b_forward.1} parent=0
    _
  %s10 = ssub.s32 1, %s8
  %s11 = scalar_select 0, %s10, %s8
  // Predicated region
  $region2: #{decoder_b_forward.1} parent=0 // pred_check
    _
  $region3: #{decoder_b_forward.1} parent=0 // pred_check_branch
    %13 = sbr.rel (0) target = $region5
  $region4: #{decoder_b_forward.1} parent=0 // pred_region
    _
  $region5: #{decoder_b_forward.1} parent=0 // pred_fallthru
    _
  // Predicated region
  $region6: #{decoder_b_forward.1} parent=0 // pred_check
    _
  $region7: #{decoder_b_forward.1} parent=0 // pred_check_branch
    %15 = sbr.rel (0) target = $region9
  $region8: #{decoder_b_forward.1} parent=0 // pred_region
    _
  $region9: #{decoder_b_forward.1} parent=0 // pred_fallthru
    _
  // Predicated region
  $region10: #{decoder_b_forward.1} parent=0 // pred_check
    _
  $region11: #{decoder_b_forward.1} parent=0 // pred_check_branch
    %17 = sbr.rel (0) target = $region13
  $region12: #{decoder_b_forward.1} parent=0 // pred_region
    _
  $region13: #{decoder_b_forward.1} parent=0 // pred_fallthru
    _
  // Predicated region
  $region14: #{decoder_b_forward.1} parent=0 // pred_check
    _
  $region15: #{decoder_b_forward.1} parent=0 // pred_check_branch
    %19 = sbr.rel (0) target = $region17
  $region16: #{decoder_b_forward.1} parent=0 // pred_region
    _
  $region17: #{decoder_b_forward.1} parent=0 // pred_fallthru
    _
  // Predicated region
  $region18: #{decoder_b_forward.1} parent=0 // pred_check
    _
  $region19: #{decoder_b_forward.1} parent=0 // pred_check_branch
    %22 = sbr.rel target = $region21
  $region20: #{decoder_b_forward.1} parent=0 // pred_region
    %23 = sst [smem:[#allocation8]] [#allocation7]
    %24 = sst [smem:[#allocation9]] [#allocation6]
  $region21: #{decoder_b_forward.1} parent=0 // pred_fallthru
    _
  %26 = shalt.err (0)
  %s28 = sshll.u32 %s3, 4
  %s29 = int_to_ptr.hbm [resolvable:$true] %s28
  %s30 = sshll.u32 [#allocation2], 4
  %s31 = int_to_ptr.vmem [resolvable:$true] %s30
  %33 = dma.hbm_to_vmem [thread:$0]  %s29, 16384, %s31, [#allocation5]
  %s34 = scalar_lea.sflag [#allocation5], 1
  // Predicated region
  $region22: #{decoder_b_forward.1} parent=0 // pred_check
    _
  $region23: #{decoder_b_forward.1} parent=0 // pred_check_branch
    %36 = sbr.rel target = $region25
  $region24: #{decoder_b_forward.1} parent=0 // pred_region
    %37 = sst [smem:[#allocation8]] [#allocation11]
    %38 = sst [smem:[#allocation9]] [#allocation10]
  $region25: #{decoder_b_forward.1} parent=0 // pred_fallthru
    _
  %40 = shalt.err (0)
  %s42 = sshll.u32 %s4, 4
  %s43 = int_to_ptr.hbm [resolvable:$true] %s42
  %s44 = sshll.u32 [#allocation3], 4
  %s45 = int_to_ptr.vmem [resolvable:$true] %s44
  %47 = dma.hbm_to_vmem [thread:$0]  %s43, 16384, %s45, %s34
  %s48 = scalar_lea.sflag [#allocation5], 2
  // Predicated region
  $region26: #{decoder_b_forward.1} parent=0 // pred_check
    _
  $region27: #{decoder_b_forward.1} parent=0 // pred_check_branch
    %50 = sbr.rel target = $region29
  $region28: #{decoder_b_forward.1} parent=0 // pred_region
    %51 = sst [smem:[#allocation8]] [#allocation13]
    %52 = sst [smem:[#allocation9]] [#allocation12]
  $region29: #{decoder_b_forward.1} parent=0 // pred_fallthru
    _
  %54 = shalt.err (0)
  %s56 = sshll.u32 %s5, 4
  %s57 = int_to_ptr.hbm [resolvable:$true] %s56
  %s58 = sshll.u32 [#allocation4], 4
  %s59 = int_to_ptr.vmem [resolvable:$true] %s58
  %61 = dma.hbm_to_vmem [thread:$0]  %s57, 4096, %s59, %s48
  %v62 = vld [vmem:[%s6] sm:$0xff]
  %v63 = vld [vmem:[%s6 + $0x8] sm:$0xff]
  %v64 = vld [vmem:[%s6 + $0x10] sm:$0xff]
  %v65 = vld [vmem:[%s6 + $0x18] sm:$0xff]
  %v66 = vld [vmem:[%s6 + $0x20] sm:$0x3]
  %v67 = vld [vmem:[%s6 + $0x28] sm:$0x3]
  %v68 = vld [vmem:[%s6 + $0x30] sm:$0x3]
  %v69 = vld [vmem:[%s6 + $0x38] sm:$0x3]
  %v70 = vld [vmem:[%s0] sm:$0xf]
  %v71 = vld [vmem:[%s0 + $0x4] sm:$0xf]
  %v72 = vld [vmem:[%s0 + $0x8] sm:$0xf]
  %v73 = vld [vmem:[%s0 + $0xc] sm:$0xf]
  %v74 = vld [vmem:[%s0 + $0x10] sm:$0xf]
  %v75 = vld [vmem:[%s0 + $0x14] sm:$0xf]
  %v76 = vld [vmem:[%s0 + $0x18] sm:$0xf]
  %v77 = vld [vmem:[%s0 + $0x1c] sm:$0xf]
  %v78 = vld [vmem:[%s2] sm:$0xff]
  %v79 = vld [vmem:[%s2 + $0x8] sm:$0xff]
  %v80 = vld [vmem:[%s2 + $0x10] sm:$0xff]
  %v81 = vld [vmem:[%s2 + $0x18] sm:$0xff]
  %v82 = vld [vmem:[%s2 + $0x20] sm:$0x11]
  %v83 = vld [vmem:[%s2 + $0x28] sm:$0x11]
  %v84 = vperm.slane %v62, 0
  %v85 = vperm.slane %v63, 0
  %v86 = vperm.slane %v64, 0
  %v87 = vperm.slane %v65, 0
  %v96 = vunpack.c.l.b16 %v70
  %v97 = vunpack.c.l.b16 %v71
  %v98 = vunpack.c.l.b16 %v72
  %v99 = vunpack.c.l.b16 %v73
  %v100 = vunpack.c.l.b16 %v74
  %v101 = vunpack.c.l.b16 %v75
  %v102 = vunpack.c.l.b16 %v76
  %v103 = vunpack.c.l.b16 %v77
  %v104 = vpack.c.b16 %v97, %v96
  %v105 = vpack.c.b16 %v99, %v98
  %v106 = vpack.c.b16 %v101, %v100
  %v107 = vpack.c.b16 %v103, %v102
  %v114 = vunpack.c.l.b16 %v78
  %v115 = vunpack.c.h.b16 %v78
  %v116 = vunpack.c.l.b16 %v79
  %v117 = vunpack.c.h.b16 %v79
  %v118 = vunpack.c.l.b16 %v80
  %v119 = vunpack.c.h.b16 %v80
  %v120 = vunpack.c.l.b16 %v81
  %v121 = vunpack.c.h.b16 %v81
  %v122 = vunpack.c.l.b16 %v82
  %v123 = vunpack.c.h.b16 %v82
  %v124 = vunpack.c.l.b16 %v83
  %v125 = vunpack.c.h.b16 %v83
  %v126 = vpack.c.b16 %v118, %v114
  %v127 = vpack.c.b16 %v119, %v115
  %v128 = vpack.c.b16 %v120, %v116
  %v129 = vpack.c.b16 %v121, %v117
  %v130 = vpack.c.b16 %v122, %v122
  %v131 = vpack.c.b16 %v123, %v123
  %v132 = vpack.c.b16 %v124, %v124
  %v133 = vpack.c.b16 %v125, %v125
  %vm138 = vcmask 146432
  %v140 = vsel %vm138, %v104, 0
  %v143 = vsel %vm138, %v105, 0
  %v146 = vsel %vm138, %v106, 0
  %v149 = vsel %vm138, %v107, 0
  %vm151 = vcmask 1040384
  %v153 = vsel %vm151, %v130, 0
  %v156 = vsel %vm151, %v131, 0
  %v159 = vsel %vm151, %v132, 0
  %v162 = vsel %vm151, %v133, 0
  %164 = vmatpush.bf16.msra.mxu0 0
  %165 = vmatpush.bf16.msra.mxu0 0
  %166 = vmatpush.bf16.msra.mxu0 0
  %167 = vmatpush.bf16.msra.mxu0 0
  %168 = vmatpush.bf16.msra.mxu0 0
  %169 = vmatpush.bf16.msra.mxu0 0
  %170 = vmatpush.bf16.msra.mxu0 %v153
  %171 = vmatpush.bf16.msra.mxu0 %v126
  %172 = vmatmul.bf16.gmra.mxu0 %v140
  %v173 = vpop.f32.mrf.mxu0
  %v174 = vadd.f32 %v84, %v173
  %v175 = vpop.f32.mrf.mxu0
  %v176 = vadd.f32 %v84, %v175
  %177 = vmatmul.bf16.gmra.mxu0 %v143
  %v178 = vpop.f32.mrf.mxu0
  %v179 = vadd.f32 %v84, %v178
  %v180 = vpop.f32.mrf.mxu0
  %v181 = vadd.f32 %v84, %v180
  %182 = vmatmul.bf16.gmra.mxu0 %v146
  %v183 = vpop.f32.mrf.mxu0
  %v184 = vadd.f32 %v84, %v183
  %v185 = vpop.f32.mrf.mxu0
  %v186 = vadd.f32 %v84, %v185
  %187 = vmatmul.bf16.gmra.mxu0 %v149
  %v188 = vpop.f32.mrf.mxu0
  %v189 = vadd.f32 %v84, %v188
  %v190 = vpop.f32.mrf.mxu0
  %v191 = vadd.f32 %v84, %v190
  %192 = vdwg.mxu0
  %193 = vmatpush.bf16.msra.mxu0 0
  %194 = vmatpush.bf16.msra.mxu0 0
  %195 = vmatpush.bf16.msra.mxu0 0
  %196 = vmatpush.bf16.msra.mxu0 0
  %197 = vmatpush.bf16.msra.mxu0 0
  %198 = vmatpush.bf16.msra.mxu0 0
  %199 = vmatpush.bf16.msra.mxu0 %v156
  %200 = vmatpush.bf16.msra.mxu0 %v127
  %201 = vmatmul.bf16.gmra.mxu0 %v140
  %v202 = vpop.f32.mrf.mxu0
  %v203 = vadd.f32 %v85, %v202
  %v204 = vpop.f32.mrf.mxu0
  %v205 = vadd.f32 %v85, %v204
  %206 = vmatmul.bf16.gmra.mxu0 %v143
  %v207 = vpop.f32.mrf.mxu0
  %v208 = vadd.f32 %v85, %v207
  %v209 = vpop.f32.mrf.mxu0
  %v210 = vadd.f32 %v85, %v209
  %211 = vmatmul.bf16.gmra.mxu0 %v146
  %v212 = vpop.f32.mrf.mxu0
  %v213 = vadd.f32 %v85, %v212
  %v214 = vpop.f32.mrf.mxu0
  %v215 = vadd.f32 %v85, %v214
  %216 = vmatmul.bf16.gmra.mxu0 %v149
  %v217 = vpop.f32.mrf.mxu0
  %v218 = vadd.f32 %v85, %v217
  %v219 = vpop.f32.mrf.mxu0
  %v220 = vadd.f32 %v85, %v219
  %221 = vdwg.mxu0
  %222 = vmatpush.bf16.msra.mxu0 0
  %223 = vmatpush.bf16.msra.mxu0 0
  %224 = vmatpush.bf16.msra.mxu0 0
  %225 = vmatpush.bf16.msra.mxu0 0
  %226 = vmatpush.bf16.msra.mxu0 0
  %227 = vmatpush.bf16.msra.mxu0 0
  %228 = vmatpush.bf16.msra.mxu0 %v159
  %229 = vmatpush.bf16.msra.mxu0 %v128
  %230 = vmatmul.bf16.gmra.mxu0 %v140
  %v231 = vpop.f32.mrf.mxu0
  %v232 = vadd.f32 %v86, %v231
  %v233 = vpop.f32.mrf.mxu0
  %v234 = vadd.f32 %v86, %v233
  %235 = vmatmul.bf16.gmra.mxu0 %v143
  %v236 = vpop.f32.mrf.mxu0
  %v237 = vadd.f32 %v86, %v236
  %v238 = vpop.f32.mrf.mxu0
  %v239 = vadd.f32 %v86, %v238
  %240 = vmatmul.bf16.gmra.mxu0 %v146
  %v241 = vpop.f32.mrf.mxu0
  %v242 = vadd.f32 %v86, %v241
  %v243 = vpop.f32.mrf.mxu0
  %v244 = vadd.f32 %v86, %v243
  %245 = vmatmul.bf16.gmra.mxu0 %v149
  %v246 = vpop.f32.mrf.mxu0
  %v247 = vadd.f32 %v86, %v246
  %v248 = vpop.f32.mrf.mxu0
  %v249 = vadd.f32 %v86, %v248
  %250 = vdwg.mxu0
  %251 = vmatpush.bf16.msra.mxu0 0
  %252 = vmatpush.bf16.msra.mxu0 0
  %253 = vmatpush.bf16.msra.mxu0 0
  %254 = vmatpush.bf16.msra.mxu0 0
  %255 = vmatpush.bf16.msra.mxu0 0
  %256 = vmatpush.bf16.msra.mxu0 0
  %257 = vmatpush.bf16.msra.mxu0 %v162
  %258 = vmatpush.bf16.msra.mxu0 %v129
  %259 = vmatmul.bf16.gmra.mxu0 %v140
  %v260 = vpop.f32.mrf.mxu0
  %v261 = vadd.f32 %v87, %v260
  %v262 = vpop.f32.mrf.mxu0
  %v263 = vadd.f32 %v87, %v262
  %264 = vmatmul.bf16.gmra.mxu0 %v143
  %v265 = vpop.f32.mrf.mxu0
  %v266 = vadd.f32 %v87, %v265
  %v267 = vpop.f32.mrf.mxu0
  %v268 = vadd.f32 %v87, %v267
  %269 = vmatmul.bf16.gmra.mxu0 %v146
  %v270 = vpop.f32.mrf.mxu0
  %v271 = vadd.f32 %v87, %v270
  %v272 = vpop.f32.mrf.mxu0
  %v273 = vadd.f32 %v87, %v272
  %274 = vmatmul.bf16.gmra.mxu0 %v149
  %v275 = vpop.f32.mrf.mxu0
  %v276 = vadd.f32 %v87, %v275
  %v277 = vpop.f32.mrf.mxu0
  %v278 = vadd.f32 %v87, %v277
  %279 = vdwg.mxu0
  %v280 = vadd.f32 %v174, %v176
  %v281 = vadd.f32 %v280, %v179
  %v282 = vadd.f32 %v281, %v181
  %v283 = vadd.f32 %v282, %v184
  %v284 = vadd.f32 %v283, %v186
  %v285 = vadd.f32 %v284, %v189
  %v286 = vadd.f32 %v285, %v191
  %v287 = vrot.slane %v286, 4
  %v288 = vadd.f32 %v286, %v287
  %v289 = vrot.slane %v288, 2
  %v290 = vadd.f32 %v288, %v289
  %v291 = vrot.slane %v290, 1
  %v292 = vadd.f32 %v290, %v291
  %v293 = vadd.f32 %v203, %v205
  %v294 = vadd.f32 %v293, %v208
  %v295 = vadd.f32 %v294, %v210
  %v296 = vadd.f32 %v295, %v213
  %v297 = vadd.f32 %v296, %v215
  %v298 = vadd.f32 %v297, %v218
  %v299 = vadd.f32 %v298, %v220
  %v300 = vrot.slane %v299, 4
  %v301 = vadd.f32 %v299, %v300
  %v302 = vrot.slane %v301, 2
  %v303 = vadd.f32 %v301, %v302
  %v304 = vrot.slane %v303, 1
  %v305 = vadd.f32 %v303, %v304
  %v306 = vadd.f32 %v232, %v234
  %v307 = vadd.f32 %v306, %v237
  %v308 = vadd.f32 %v307, %v239
  %v309 = vadd.f32 %v308, %v242
  %v310 = vadd.f32 %v309, %v244
  %v311 = vadd.f32 %v310, %v247
  %v312 = vadd.f32 %v311, %v249
  %v313 = vrot.slane %v312, 4
  %v314 = vadd.f32 %v312, %v313
  %v315 = vrot.slane %v314, 2
  %v316 = vadd.f32 %v314, %v315
  %v317 = vrot.slane %v316, 1
  %v318 = vadd.f32 %v316, %v317
  %v319 = vadd.f32 %v261, %v263
  %v320 = vadd.f32 %v319, %v266
  %v321 = vadd.f32 %v320, %v268
  %v322 = vadd.f32 %v321, %v271
  %v323 = vadd.f32 %v322, %v273
  %v324 = vadd.f32 %v323, %v276
  %v325 = vadd.f32 %v324, %v278
  %v326 = vrot.slane %v325, 4
  %v327 = vadd.f32 %v325, %v326
  %v328 = vrot.slane %v327, 2
  %v329 = vadd.f32 %v327, %v328
  %v330 = vrot.slane %v329, 1
  %v331 = vadd.f32 %v329, %v330
  %v332 = vmul.f32 %v292, 0.015625
  %v333 = vmul.f32 %v305, 0.015625
  %v334 = vmul.f32 %v318, 0.015625
  %v335 = vmul.f32 %v331, 0.015625
  %v336 = vmul.f32 %v174, %v174
  %v337 = vmul.f32 %v203, %v203
  %v338 = vmul.f32 %v232, %v232
  %v339 = vmul.f32 %v261, %v261
  %v340 = vmul.f32 %v176, %v176
  %v341 = vmul.f32 %v205, %v205
  %v342 = vmul.f32 %v234, %v234
  %v343 = vmul.f32 %v263, %v263
  %v344 = vmul.f32 %v179, %v179
  %v345 = vmul.f32 %v208, %v208
  %v346 = vmul.f32 %v237, %v237
  %v347 = vmul.f32 %v266, %v266
  %v348 = vmul.f32 %v181, %v181
  %v349 = vmul.f32 %v210, %v210
  %v350 = vmul.f32 %v239, %v239
  %v351 = vmul.f32 %v268, %v268
  %v352 = vmul.f32 %v184, %v184
  %v353 = vmul.f32 %v213, %v213
  %v354 = vmul.f32 %v242, %v242
  %v355 = vmul.f32 %v271, %v271
  %v356 = vmul.f32 %v186, %v186
  %v357 = vmul.f32 %v215, %v215
  %v358 = vmul.f32 %v244, %v244
  %v359 = vmul.f32 %v273, %v273
  %v360 = vmul.f32 %v189, %v189
  %v361 = vmul.f32 %v218, %v218
  %v362 = vmul.f32 %v247, %v247
  %v363 = vmul.f32 %v276, %v276
  %v364 = vmul.f32 %v191, %v191
  %v365 = vmul.f32 %v220, %v220
  %v366 = vmul.f32 %v249, %v249
  %v367 = vmul.f32 %v278, %v278
  %v368 = vadd.f32 %v336, %v340
  %v369 = vadd.f32 %v368, %v344
  %v370 = vadd.f32 %v369, %v348
  %v371 = vadd.f32 %v370, %v352
  %v372 = vadd.f32 %v371, %v356
  %v373 = vadd.f32 %v372, %v360
  %v374 = vadd.f32 %v373, %v364
  %v375 = vrot.slane %v374, 4
  %v376 = vadd.f32 %v374, %v375
  %v377 = vrot.slane %v376, 2
  %v378 = vadd.f32 %v376, %v377
  %v379 = vrot.slane %v378, 1
  %v380 = vadd.f32 %v378, %v379
  %v381 = vadd.f32 %v337, %v341
  %v382 = vadd.f32 %v381, %v345
  %v383 = vadd.f32 %v382, %v349
  %v384 = vadd.f32 %v383, %v353
  %v385 = vadd.f32 %v384, %v357
  %v386 = vadd.f32 %v385, %v361
  %v387 = vadd.f32 %v386, %v365
  %v388 = vrot.slane %v387, 4
  %v389 = vadd.f32 %v387, %v388
  %v390 = vrot.slane %v389, 2
  %v391 = vadd.f32 %v389, %v390
  %v392 = vrot.slane %v391, 1
  %v393 = vadd.f32 %v391, %v392
  %v394 = vadd.f32 %v338, %v342
  %v395 = vadd.f32 %v394, %v346
  %v396 = vadd.f32 %v395, %v350
  %v397 = vadd.f32 %v396, %v354
  %v398 = vadd.f32 %v397, %v358
  %v399 = vadd.f32 %v398, %v362
  %v400 = vadd.f32 %v399, %v366
  %v401 = vrot.slane %v400, 4
  %v402 = vadd.f32 %v400, %v401
  %v403 = vrot.slane %v402, 2
  %v404 = vadd.f32 %v402, %v403
  %v405 = vrot.slane %v404, 1
  %v406 = vadd.f32 %v404, %v405
  %v407 = vadd.f32 %v339, %v343
  %v408 = vadd.f32 %v407, %v347
  %v409 = vadd.f32 %v408, %v351
  %v410 = vadd.f32 %v409, %v355
  %v411 = vadd.f32 %v410, %v359
  %v412 = vadd.f32 %v411, %v363
  %v413 = vadd.f32 %v412, %v367
  %v414 = vrot.slane %v413, 4
  %v415 = vadd.f32 %v413, %v414
  %v416 = vrot.slane %v415, 2
  %v417 = vadd.f32 %v415, %v416
  %v418 = vrot.slane %v417, 1
  %v419 = vadd.f32 %v417, %v418
  %v420 = vmul.f32 %v380, 0.015625
  %v421 = vmul.f32 %v393, 0.015625
  %v422 = vmul.f32 %v406, 0.015625
  %v423 = vmul.f32 %v419, 0.015625
  %v424 = vmul.f32 %v332, %v332
  %v425 = vmul.f32 %v333, %v333
  %v426 = vmul.f32 %v334, %v334
  %v427 = vmul.f32 %v335, %v335
  %v428 = vsub.f32 %v420, %v424
  %v429 = vsub.f32 %v421, %v425
  %v430 = vsub.f32 %v422, %v426
  %v431 = vsub.f32 %v423, %v427
  %v432 = vadd.f32 %v428, 1e-05
  %v433 = vadd.f32 %v429, 1e-05
  %v434 = vadd.f32 %v430, 1e-05
  %v435 = vadd.f32 %v431, 1e-05
  %v436 = vrsqrt.pop %v432
  %v437 = vmul.f32 %v436, %v432
  %v438 = vmul.f32 %v437, %v436
  %v439 = vmul.f32 0.5, %v438
  %v440 = vsub.f32 1.5, %v439
  %v441 = vmul.f32 %v436, %v440
  %vm442 = vweird.f32 %v432
  %vm443 = vweird.f32 %v436
  %vm444 = vmor %vm442, %vm443
  %v445 = vsel %vm444, %v436, %v441
  %v446 = vrsqrt.pop %v433
  %v447 = vmul.f32 %v446, %v433
  %v448 = vmul.f32 %v447, %v446
  %v449 = vmul.f32 0.5, %v448
  %v450 = vsub.f32 1.5, %v449
  %v451 = vmul.f32 %v446, %v450
  %vm452 = vweird.f32 %v433
  %vm453 = vweird.f32 %v446
  %vm454 = vmor %vm452, %vm453
  %v455 = vsel %vm454, %v446, %v451
  %v456 = vrsqrt.pop %v434
  %v457 = vmul.f32 %v456, %v434
  %v458 = vmul.f32 %v457, %v456
  %v459 = vmul.f32 0.5, %v458
  %v460 = vsub.f32 1.5, %v459
  %v461 = vmul.f32 %v456, %v460
  %vm462 = vweird.f32 %v434
  %vm463 = vweird.f32 %v456
  %vm464 = vmor %vm462, %vm463
  %v465 = vsel %vm464, %v456, %v461
  %v466 = vrsqrt.pop %v435
  %v467 = vmul.f32 %v466, %v435
  %v468 = vmul.f32 %v467, %v466
  %v469 = vmul.f32 0.5, %v468
  %v470 = vsub.f32 1.5, %v469
  %v471 = vmul.f32 %v466, %v470
  %vm472 = vweird.f32 %v435
  %vm473 = vweird.f32 %v466
  %vm474 = vmor %vm472, %vm473
  %v475 = vsel %vm474, %v466, %v471
  %v476 = vmul.f32 %v62, %v445
  %v477 = vmul.f32 %v63, %v455
  %v478 = vmul.f32 %v64, %v465
  %v479 = vmul.f32 %v65, %v475
  %v480 = vmul.f32 %v332, %v476
  %v481 = vmul.f32 %v333, %v477
  %v482 = vmul.f32 %v334, %v478
  %v483 = vmul.f32 %v335, %v479
  %v488 = vrot.slane %v480, 7
  %v489 = vrot.slane %v481, 7
  %v490 = vrot.slane %v482, 7
  %v491 = vrot.slane %v483, 7
  %v496 = vsub.f32 %v62, %v488
  %v497 = vsub.f32 %v63, %v489
  %v498 = vsub.f32 %v64, %v490
  %v499 = vsub.f32 %v65, %v491
  %v500 = vperm.slane %v476, 1
  %v501 = vperm.slane %v477, 1
  %v502 = vperm.slane %v478, 1
  %v503 = vperm.slane %v479, 1
  %v504 = vmul.f32 %v174, %v500
  %v505 = vmul.f32 %v203, %v501
  %v506 = vmul.f32 %v232, %v502
  %v507 = vmul.f32 %v261, %v503
  %v508 = vmul.f32 %v176, %v500
  %v509 = vmul.f32 %v205, %v501
  %v510 = vmul.f32 %v234, %v502
  %v511 = vmul.f32 %v263, %v503
  %v512 = vmul.f32 %v179, %v500
  %v513 = vmul.f32 %v208, %v501
  %v514 = vmul.f32 %v237, %v502
  %v515 = vmul.f32 %v266, %v503
  %v516 = vmul.f32 %v181, %v500
  %v517 = vmul.f32 %v210, %v501
  %v518 = vmul.f32 %v239, %v502
  %v519 = vmul.f32 %v268, %v503
  %v520 = vmul.f32 %v184, %v500
  %v521 = vmul.f32 %v213, %v501
  %v522 = vmul.f32 %v242, %v502
  %v523 = vmul.f32 %v271, %v503
  %v524 = vmul.f32 %v186, %v500
  %v525 = vmul.f32 %v215, %v501
  %v526 = vmul.f32 %v244, %v502
  %v527 = vmul.f32 %v273, %v503
  %v528 = vmul.f32 %v189, %v500
  %v529 = vmul.f32 %v218, %v501
  %v530 = vmul.f32 %v247, %v502
  %v531 = vmul.f32 %v276, %v503
  %v532 = vmul.f32 %v191, %v500
  %v533 = vmul.f32 %v220, %v501
  %v534 = vmul.f32 %v249, %v502
  %v535 = vmul.f32 %v278, %v503
  %v536 = vperm.slane %v496, 2
  %v537 = vperm.slane %v497, 2
  %v538 = vperm.slane %v498, 2
  %v539 = vperm.slane %v499, 2
  %v540 = vadd.f32 %v504, %v536
  %v541 = vadd.f32 %v505, %v537
  %v542 = vadd.f32 %v506, %v538
  %v543 = vadd.f32 %v507, %v539
  %v544 = vadd.f32 %v508, %v536
  %v545 = vadd.f32 %v509, %v537
  %v546 = vadd.f32 %v510, %v538
  %v547 = vadd.f32 %v511, %v539
  %v548 = vadd.f32 %v512, %v536
  %v549 = vadd.f32 %v513, %v537
  %v550 = vadd.f32 %v514, %v538
  %v551 = vadd.f32 %v515, %v539
  %v552 = vadd.f32 %v516, %v536
  %v553 = vadd.f32 %v517, %v537
  %v554 = vadd.f32 %v518, %v538
  %v555 = vadd.f32 %v519, %v539
  %v556 = vadd.f32 %v520, %v536
  %v557 = vadd.f32 %v521, %v537
  %v558 = vadd.f32 %v522, %v538
  %v559 = vadd.f32 %v523, %v539
  %v560 = vadd.f32 %v524, %v536
  %v561 = vadd.f32 %v525, %v537
  %v562 = vadd.f32 %v526, %v538
  %v563 = vadd.f32 %v527, %v539
  %v564 = vadd.f32 %v528, %v536
  %v565 = vadd.f32 %v529, %v537
  %v566 = vadd.f32 %v530, %v538
  %v567 = vadd.f32 %v531, %v539
  %v568 = vadd.f32 %v532, %v536
  %v569 = vadd.f32 %v533, %v537
  %v570 = vadd.f32 %v534, %v538
  %v571 = vadd.f32 %v535, %v539
  %v572 = vmax.f32 %v540, 0.0
  %v573 = vmax.f32 %v541, 0.0
  %v574 = vmax.f32 %v542, 0.0
  %v575 = vmax.f32 %v543, 0.0
  %v576 = vmax.f32 %v544, 0.0
  %v577 = vmax.f32 %v545, 0.0
  %v578 = vmax.f32 %v546, 0.0
  %v579 = vmax.f32 %v547, 0.0
  %v580 = vmax.f32 %v548, 0.0
  %v581 = vmax.f32 %v549, 0.0
  %v582 = vmax.f32 %v550, 0.0
  %v583 = vmax.f32 %v551, 0.0
  %v584 = vmax.f32 %v552, 0.0
  %v585 = vmax.f32 %v553, 0.0
  %v586 = vmax.f32 %v554, 0.0
  %v587 = vmax.f32 %v555, 0.0
  %v588 = vmax.f32 %v556, 0.0
  %v589 = vmax.f32 %v557, 0.0
  %v590 = vmax.f32 %v558, 0.0
  %v591 = vmax.f32 %v559, 0.0
  %v592 = vmax.f32 %v560, 0.0
  %v593 = vmax.f32 %v561, 0.0
  %v594 = vmax.f32 %v562, 0.0
  %v595 = vmax.f32 %v563, 0.0
  %v596 = vmax.f32 %v564, 0.0
  %v597 = vmax.f32 %v565, 0.0
  %v598 = vmax.f32 %v566, 0.0
  %v599 = vmax.f32 %v567, 0.0
  %v600 = vmax.f32 %v568, 0.0
  %v601 = vmax.f32 %v569, 0.0
  %v602 = vmax.f32 %v570, 0.0
  %v603 = vmax.f32 %v571, 0.0
  %s604 = smul.u32 4, 64
  %s605 = smul.u32 %s604, 4
  %s606 = sshll.u32 %s605, 4
  %607 = dma.done [#allocation5], %s606
  %v608 = vpack.c.bf16 %v576, %v572
  %v609 = vpack.c.bf16 %v577, %v573
  %v610 = vpack.c.bf16 %v578, %v574
  %v611 = vpack.c.bf16 %v579, %v575
  %v612 = vpack.c.bf16 %v584, %v580
  %v613 = vpack.c.bf16 %v585, %v581
  %v614 = vpack.c.bf16 %v586, %v582
  %v615 = vpack.c.bf16 %v587, %v583
  %v616 = vpack.c.bf16 %v592, %v588
  %v617 = vpack.c.bf16 %v593, %v589
  %v618 = vpack.c.bf16 %v594, %v590
  %v619 = vpack.c.bf16 %v595, %v591
  %v620 = vpack.c.bf16 %v600, %v596
  %v621 = vpack.c.bf16 %v601, %v597
  %v622 = vpack.c.bf16 %v602, %v598
  %v623 = vpack.c.bf16 %v603, %v599
  %v624 = vld [vmem:[#allocation2] sm:$0xff]
  %v625 = vld [vmem:[#allocation2 + $0x8] sm:$0xff]
  %v626 = vld [vmem:[#allocation2 + $0x10] sm:$0xff]
  %v627 = vld [vmem:[#allocation2 + $0x18] sm:$0xff]
  %v628 = vld [vmem:[#allocation2 + $0x20] sm:$0xff]
  %v629 = vld [vmem:[#allocation2 + $0x28] sm:$0xff]
  %v630 = vld [vmem:[#allocation2 + $0x30] sm:$0xff]
  %v631 = vld [vmem:[#allocation2 + $0x38] sm:$0xff]
  %v632 = vld [vmem:[#allocation2 + $0x40] sm:$0xff]
  %v633 = vld [vmem:[#allocation2 + $0x48] sm:$0xff]
  %v634 = vld [vmem:[#allocation2 + $0x50] sm:$0xff]
  %v635 = vld [vmem:[#allocation2 + $0x58] sm:$0xff]
  %v636 = vld [vmem:[#allocation2 + $0x60] sm:$0xff]
  %v637 = vld [vmem:[#allocation2 + $0x68] sm:$0xff]
  %v638 = vld [vmem:[#allocation2 + $0x70] sm:$0xff]
  %v639 = vld [vmem:[#allocation2 + $0x78] sm:$0xff]
  %v640 = vld [vmem:[#allocation2 + $0x80] sm:$0xff]
  %v641 = vld [vmem:[#allocation2 + $0x88] sm:$0xff]
  %v642 = vld [vmem:[#allocation2 + $0x90] sm:$0xff]
  %v643 = vld [vmem:[#allocation2 + $0x98] sm:$0xff]
  %v644 = vld [vmem:[#allocation2 + $0xa0] sm:$0xff]
  %v645 = vld [vmem:[#allocation2 + $0xa8] sm:$0xff]
  %v646 = vld [vmem:[#allocation2 + $0xb0] sm:$0xff]
  %v647 = vld [vmem:[#allocation2 + $0xb8] sm:$0xff]
  %v648 = vld [vmem:[#allocation2 + $0xc0] sm:$0xff]
  %v649 = vld [vmem:[#allocation2 + $0xc8] sm:$0xff]
  %v650 = vld [vmem:[#allocation2 + $0xd0] sm:$0xff]
  %v651 = vld [vmem:[#allocation2 + $0xd8] sm:$0xff]
  %v652 = vld [vmem:[#allocation2 + $0xe0] sm:$0xff]
  %v653 = vld [vmem:[#allocation2 + $0xe8] sm:$0xff]
  %v654 = vld [vmem:[#allocation2 + $0xf0] sm:$0xff]
  %v655 = vld [vmem:[#allocation2 + $0xf8] sm:$0xff]
  %v656 = vld [vmem:[#allocation2 + $0x100] sm:$0xff]
  %v657 = vld [vmem:[#allocation2 + $0x108] sm:$0xff]
  %v658 = vld [vmem:[#allocation2 + $0x110] sm:$0xff]
  %v659 = vld [vmem:[#allocation2 + $0x118] sm:$0xff]
  %v660 = vld [vmem:[#allocation2 + $0x120] sm:$0xff]
  %v661 = vld [vmem:[#allocation2 + $0x128] sm:$0xff]
  %v662 = vld [vmem:[#allocation2 + $0x130] sm:$0xff]
  %v663 = vld [vmem:[#allocation2 + $0x138] sm:$0xff]
  %v664 = vld [vmem:[#allocation2 + $0x140] sm:$0xff]
  %v665 = vld [vmem:[#allocation2 + $0x148] sm:$0xff]
  %v666 = vld [vmem:[#allocation2 + $0x150] sm:$0xff]
  %v667 = vld [vmem:[#allocation2 + $0x158] sm:$0xff]
  %v668 = vld [vmem:[#allocation2 + $0x160] sm:$0xff]
  %v669 = vld [vmem:[#allocation2 + $0x168] sm:$0xff]
  %v670 = vld [vmem:[#allocation2 + $0x170] sm:$0xff]
  %v671 = vld [vmem:[#allocation2 + $0x178] sm:$0xff]
  %v672 = vld [vmem:[#allocation2 + $0x180] sm:$0xff]
  %v673 = vld [vmem:[#allocation2 + $0x188] sm:$0xff]
  %v674 = vld [vmem:[#allocation2 + $0x190] sm:$0xff]
  %v675 = vld [vmem:[#allocation2 + $0x198] sm:$0xff]
  %v676 = vld [vmem:[#allocation2 + $0x1a0] sm:$0xff]
  %v677 = vld [vmem:[#allocation2 + $0x1a8] sm:$0xff]
  %v678 = vld [vmem:[#allocation2 + $0x1b0] sm:$0xff]
  %v679 = vld [vmem:[#allocation2 + $0x1b8] sm:$0xff]
  %v680 = vld [vmem:[#allocation2 + $0x1c0] sm:$0xff]
  %v681 = vld [vmem:[#allocation2 + $0x1c8] sm:$0xff]
  %v682 = vld [vmem:[#allocation2 + $0x1d0] sm:$0xff]
  %v683 = vld [vmem:[#allocation2 + $0x1d8] sm:$0xff]
  %v684 = vld [vmem:[#allocation2 + $0x1e0] sm:$0xff]
  %v685 = vld [vmem:[#allocation2 + $0x1e8] sm:$0xff]
  %v686 = vld [vmem:[#allocation2 + $0x1f0] sm:$0xff]
  %v687 = vld [vmem:[#allocation2 + $0x1f8] sm:$0xff]
  %v688 = vld [vmem:[#allocation2 + $0x200] sm:$0xff]
  %v689 = vld [vmem:[#allocation2 + $0x208] sm:$0xff]
  %v690 = vld [vmem:[#allocation2 + $0x210] sm:$0xff]
  %v691 = vld [vmem:[#allocation2 + $0x218] sm:$0xff]
  %v692 = vld [vmem:[#allocation2 + $0x220] sm:$0xff]
  %v693 = vld [vmem:[#allocation2 + $0x228] sm:$0xff]
  %v694 = vld [vmem:[#allocation2 + $0x230] sm:$0xff]
  %v695 = vld [vmem:[#allocation2 + $0x238] sm:$0xff]
  %v696 = vld [vmem:[#allocation2 + $0x240] sm:$0xff]
  %v697 = vld [vmem:[#allocation2 + $0x248] sm:$0xff]
  %v698 = vld [vmem:[#allocation2 + $0x250] sm:$0xff]
  %v699 = vld [vmem:[#allocation2 + $0x258] sm:$0xff]
  %v700 = vld [vmem:[#allocation2 + $0x260] sm:$0xff]
  %v701 = vld [vmem:[#allocation2 + $0x268] sm:$0xff]
  %v702 = vld [vmem:[#allocation2 + $0x270] sm:$0xff]
  %v703 = vld [vmem:[#allocation2 + $0x278] sm:$0xff]
  %v704 = vld [vmem:[#allocation2 + $0x280] sm:$0xff]
  %v705 = vld [vmem:[#allocation2 + $0x288] sm:$0xff]
  %v706 = vld [vmem:[#allocation2 + $0x290] sm:$0xff]
  %v707 = vld [vmem:[#allocation2 + $0x298] sm:$0xff]
  %v708 = vld [vmem:[#allocation2 + $0x2a0] sm:$0xff]
  %v709 = vld [vmem:[#allocation2 + $0x2a8] sm:$0xff]
  %v710 = vld [vmem:[#allocation2 + $0x2b0] sm:$0xff]
  %v711 = vld [vmem:[#allocation2 + $0x2b8] sm:$0xff]
  %v712 = vld [vmem:[#allocation2 + $0x2c0] sm:$0xff]
  %v713 = vld [vmem:[#allocation2 + $0x2c8] sm:$0xff]
  %v714 = vld [vmem:[#allocation2 + $0x2d0] sm:$0xff]
  %v715 = vld [vmem:[#allocation2 + $0x2d8] sm:$0xff]
  %v716 = vld [vmem:[#allocation2 + $0x2e0] sm:$0xff]
  %v717 = vld [vmem:[#allocation2 + $0x2e8] sm:$0xff]
  %v718 = vld [vmem:[#allocation2 + $0x2f0] sm:$0xff]
  %v719 = vld [vmem:[#allocation2 + $0x2f8] sm:$0xff]
  %v720 = vld [vmem:[#allocation2 + $0x300] sm:$0xff]
  %v721 = vld [vmem:[#allocation2 + $0x308] sm:$0xff]
  %v722 = vld [vmem:[#allocation2 + $0x310] sm:$0xff]
  %v723 = vld [vmem:[#allocation2 + $0x318] sm:$0xff]
  %v724 = vld [vmem:[#allocation2 + $0x320] sm:$0xff]
  %v725 = vld [vmem:[#allocation2 + $0x328] sm:$0xff]
  %v726 = vld [vmem:[#allocation2 + $0x330] sm:$0xff]
  %v727 = vld [vmem:[#allocation2 + $0x338] sm:$0xff]
  %v728 = vld [vmem:[#allocation2 + $0x340] sm:$0xff]
  %v729 = vld [vmem:[#allocation2 + $0x348] sm:$0xff]
  %v730 = vld [vmem:[#allocation2 + $0x350] sm:$0xff]
  %v731 = vld [vmem:[#allocation2 + $0x358] sm:$0xff]
  %v732 = vld [vmem:[#allocation2 + $0x360] sm:$0xff]
  %v733 = vld [vmem:[#allocation2 + $0x368] sm:$0xff]
  %v734 = vld [vmem:[#allocation2 + $0x370] sm:$0xff]
  %v735 = vld [vmem:[#allocation2 + $0x378] sm:$0xff]
  %v736 = vld [vmem:[#allocation2 + $0x380] sm:$0xff]
  %v737 = vld [vmem:[#allocation2 + $0x388] sm:$0xff]
  %v738 = vld [vmem:[#allocation2 + $0x390] sm:$0xff]
  %v739 = vld [vmem:[#allocation2 + $0x398] sm:$0xff]
  %v740 = vld [vmem:[#allocation2 + $0x3a0] sm:$0xff]
  %v741 = vld [vmem:[#allocation2 + $0x3a8] sm:$0xff]
  %v742 = vld [vmem:[#allocation2 + $0x3b0] sm:$0xff]
  %v743 = vld [vmem:[#allocation2 + $0x3b8] sm:$0xff]
  %v744 = vld [vmem:[#allocation2 + $0x3c0] sm:$0xff]
  %v745 = vld [vmem:[#allocation2 + $0x3c8] sm:$0xff]
  %v746 = vld [vmem:[#allocation2 + $0x3d0] sm:$0xff]
  %v747 = vld [vmem:[#allocation2 + $0x3d8] sm:$0xff]
  %v748 = vld [vmem:[#allocation2 + $0x3e0] sm:$0xff]
  %v749 = vld [vmem:[#allocation2 + $0x3e8] sm:$0xff]
  %v750 = vld [vmem:[#allocation2 + $0x3f0] sm:$0xff]
  %v751 = vld [vmem:[#allocation2 + $0x3f8] sm:$0xff]
  %v752 = vperm.slane %v62, 3
  %v753 = vperm.slane %v63, 3
  %v754 = vperm.slane %v64, 3
  %v755 = vperm.slane %v65, 3
  %v884 = vunpack.c.l.b16 %v624
  %v885 = vunpack.c.h.b16 %v624
  %v886 = vunpack.c.l.b16 %v625
  %v887 = vunpack.c.h.b16 %v625
  %v888 = vunpack.c.l.b16 %v626
  %v889 = vunpack.c.h.b16 %v626
  %v890 = vunpack.c.l.b16 %v627
  %v891 = vunpack.c.h.b16 %v627
  %v892 = vunpack.c.l.b16 %v628
  %v893 = vunpack.c.h.b16 %v628
  %v894 = vunpack.c.l.b16 %v629
  %v895 = vunpack.c.h.b16 %v629
  %v896 = vunpack.c.l.b16 %v630
  %v897 = vunpack.c.h.b16 %v630
  %v898 = vunpack.c.l.b16 %v631
  %v899 = vunpack.c.h.b16 %v631
  %v900 = vunpack.c.l.b16 %v632
  %v901 = vunpack.c.h.b16 %v632
  %v902 = vunpack.c.l.b16 %v633
  %v903 = vunpack.c.h.b16 %v633
  %v904 = vunpack.c.l.b16 %v634
  %v905 = vunpack.c.h.b16 %v634
  %v906 = vunpack.c.l.b16 %v635
  %v907 = vunpack.c.h.b16 %v635
  %v908 = vunpack.c.l.b16 %v636
  %v909 = vunpack.c.h.b16 %v636
  %v910 = vunpack.c.l.b16 %v637
  %v911 = vunpack.c.h.b16 %v637
  %v912 = vunpack.c.l.b16 %v638
  %v913 = vunpack.c.h.b16 %v638
  %v914 = vunpack.c.l.b16 %v639
  %v915 = vunpack.c.h.b16 %v639
  %v916 = vunpack.c.l.b16 %v640
  %v917 = vunpack.c.h.b16 %v640
  %v918 = vunpack.c.l.b16 %v641
  %v919 = vunpack.c.h.b16 %v641
  %v920 = vunpack.c.l.b16 %v642
  %v921 = vunpack.c.h.b16 %v642
  %v922 = vunpack.c.l.b16 %v643
  %v923 = vunpack.c.h.b16 %v643
  %v924 = vunpack.c.l.b16 %v644
  %v925 = vunpack.c.h.b16 %v644
  %v926 = vunpack.c.l.b16 %v645
  %v927 = vunpack.c.h.b16 %v645
  %v928 = vunpack.c.l.b16 %v646
  %v929 = vunpack.c.h.b16 %v646
  %v930 = vunpack.c.l.b16 %v647
  %v931 = vunpack.c.h.b16 %v647
  %v932 = vunpack.c.l.b16 %v648
  %v933 = vunpack.c.h.b16 %v648
  %v934 = vunpack.c.l.b16 %v649
  %v935 = vunpack.c.h.b16 %v649
  %v936 = vunpack.c.l.b16 %v650
  %v937 = vunpack.c.h.b16 %v650
  %v938 = vunpack.c.l.b16 %v651
  %v939 = vunpack.c.h.b16 %v651
  %v940 = vunpack.c.l.b16 %v652
  %v941 = vunpack.c.h.b16 %v652
  %v942 = vunpack.c.l.b16 %v653
  %v943 = vunpack.c.h.b16 %v653
  %v944 = vunpack.c.l.b16 %v654
  %v945 = vunpack.c.h.b16 %v654
  %v946 = vunpack.c.l.b16 %v655
  %v947 = vunpack.c.h.b16 %v655
  %v948 = vunpack.c.l.b16 %v656
  %v949 = vunpack.c.h.b16 %v656
  %v950 = vunpack.c.l.b16 %v657
  %v951 = vunpack.c.h.b16 %v657
  %v952 = vunpack.c.l.b16 %v658
  %v953 = vunpack.c.h.b16 %v658
  %v954 = vunpack.c.l.b16 %v659
  %v955 = vunpack.c.h.b16 %v659
  %v956 = vunpack.c.l.b16 %v660
  %v957 = vunpack.c.h.b16 %v660
  %v958 = vunpack.c.l.b16 %v661
  %v959 = vunpack.c.h.b16 %v661
  %v960 = vunpack.c.l.b16 %v662
  %v961 = vunpack.c.h.b16 %v662
  %v962 = vunpack.c.l.b16 %v663
  %v963 = vunpack.c.h.b16 %v663
  %v964 = vunpack.c.l.b16 %v664
  %v965 = vunpack.c.h.b16 %v664
  %v966 = vunpack.c.l.b16 %v665
  %v967 = vunpack.c.h.b16 %v665
  %v968 = vunpack.c.l.b16 %v666
  %v969 = vunpack.c.h.b16 %v666
  %v970 = vunpack.c.l.b16 %v667
  %v971 = vunpack.c.h.b16 %v667
  %v972 = vunpack.c.l.b16 %v668
  %v973 = vunpack.c.h.b16 %v668
  %v974 = vunpack.c.l.b16 %v669
  %v975 = vunpack.c.h.b16 %v669
  %v976 = vunpack.c.l.b16 %v670
  %v977 = vunpack.c.h.b16 %v670
  %v978 = vunpack.c.l.b16 %v671
  %v979 = vunpack.c.h.b16 %v671
  %v980 = vunpack.c.l.b16 %v672
  %v981 = vunpack.c.h.b16 %v672
  %v982 = vunpack.c.l.b16 %v673
  %v983 = vunpack.c.h.b16 %v673
  %v984 = vunpack.c.l.b16 %v674
  %v985 = vunpack.c.h.b16 %v674
  %v986 = vunpack.c.l.b16 %v675
  %v987 = vunpack.c.h.b16 %v675
  %v988 = vunpack.c.l.b16 %v676
  %v989 = vunpack.c.h.b16 %v676
  %v990 = vunpack.c.l.b16 %v677
  %v991 = vunpack.c.h.b16 %v677
  %v992 = vunpack.c.l.b16 %v678
  %v993 = vunpack.c.h.b16 %v678
  %v994 = vunpack.c.l.b16 %v679
  %v995 = vunpack.c.h.b16 %v679
  %v996 = vunpack.c.l.b16 %v680
  %v997 = vunpack.c.h.b16 %v680
  %v998 = vunpack.c.l.b16 %v681
  %v999 = vunpack.c.h.b16 %v681
  %v1000 = vunpack.c.l.b16 %v682
  %v1001 = vunpack.c.h.b16 %v682
  %v1002 = vunpack.c.l.b16 %v683
  %v1003 = vunpack.c.h.b16 %v683
  %v1004 = vunpack.c.l.b16 %v684
  %v1005 = vunpack.c.h.b16 %v684
  %v1006 = vunpack.c.l.b16 %v685
  %v1007 = vunpack.c.h.b16 %v685
  %v1008 = vunpack.c.l.b16 %v686
  %v1009 = vunpack.c.h.b16 %v686
  %v1010 = vunpack.c.l.b16 %v687
  %v1011 = vunpack.c.h.b16 %v687
  %v1012 = vunpack.c.l.b16 %v688
  %v1013 = vunpack.c.h.b16 %v688
  %v1014 = vunpack.c.l.b16 %v689
  %v1015 = vunpack.c.h.b16 %v689
  %v1016 = vunpack.c.l.b16 %v690
  %v1017 = vunpack.c.h.b16 %v690
  %v1018 = vunpack.c.l.b16 %v691
  %v1019 = vunpack.c.h.b16 %v691
  %v1020 = vunpack.c.l.b16 %v692
  %v1021 = vunpack.c.h.b16 %v692
  %v1022 = vunpack.c.l.b16 %v693
  %v1023 = vunpack.c.h.b16 %v693
  %v1024 = vunpack.c.l.b16 %v694
  %v1025 = vunpack.c.h.b16 %v694
  %v1026 = vunpack.c.l.b16 %v695
  %v1027 = vunpack.c.h.b16 %v695
  %v1028 = vunpack.c.l.b16 %v696
  %v1029 = vunpack.c.h.b16 %v696
  %v1030 = vunpack.c.l.b16 %v697
  %v1031 = vunpack.c.h.b16 %v697
  %v1032 = vunpack.c.l.b16 %v698
  %v1033 = vunpack.c.h.b16 %v698
  %v1034 = vunpack.c.l.b16 %v699
  %v1035 = vunpack.c.h.b16 %v699
  %v1036 = vunpack.c.l.b16 %v700
  %v1037 = vunpack.c.h.b16 %v700
  %v1038 = vunpack.c.l.b16 %v701
  %v1039 = vunpack.c.h.b16 %v701
  %v1040 = vunpack.c.l.b16 %v702
  %v1041 = vunpack.c.h.b16 %v702
  %v1042 = vunpack.c.l.b16 %v703
  %v1043 = vunpack.c.h.b16 %v703
  %v1044 = vunpack.c.l.b16 %v704
  %v1045 = vunpack.c.h.b16 %v704
  %v1046 = vunpack.c.l.b16 %v705
  %v1047 = vunpack.c.h.b16 %v705
  %v1048 = vunpack.c.l.b16 %v706
  %v1049 = vunpack.c.h.b16 %v706
  %v1050 = vunpack.c.l.b16 %v707
  %v1051 = vunpack.c.h.b16 %v707
  %v1052 = vunpack.c.l.b16 %v708
  %v1053 = vunpack.c.h.b16 %v708
  %v1054 = vunpack.c.l.b16 %v709
  %v1055 = vunpack.c.h.b16 %v709
  %v1056 = vunpack.c.l.b16 %v710
  %v1057 = vunpack.c.h.b16 %v710
  %v1058 = vunpack.c.l.b16 %v711
  %v1059 = vunpack.c.h.b16 %v711
  %v1060 = vunpack.c.l.b16 %v712
  %v1061 = vunpack.c.h.b16 %v712
  %v1062 = vunpack.c.l.b16 %v713
  %v1063 = vunpack.c.h.b16 %v713
  %v1064 = vunpack.c.l.b16 %v714
  %v1065 = vunpack.c.h.b16 %v714
  %v1066 = vunpack.c.l.b16 %v715
  %v1067 = vunpack.c.h.b16 %v715
  %v1068 = vunpack.c.l.b16 %v716
  %v1069 = vunpack.c.h.b16 %v716
  %v1070 = vunpack.c.l.b16 %v717
  %v1071 = vunpack.c.h.b16 %v717
  %v1072 = vunpack.c.l.b16 %v718
  %v1073 = vunpack.c.h.b16 %v718
  %v1074 = vunpack.c.l.b16 %v719
  %v1075 = vunpack.c.h.b16 %v719
  %v1076 = vunpack.c.l.b16 %v720
  %v1077 = vunpack.c.h.b16 %v720
  %v1078 = vunpack.c.l.b16 %v721
  %v1079 = vunpack.c.h.b16 %v721
  %v1080 = vunpack.c.l.b16 %v722
  %v1081 = vunpack.c.h.b16 %v722
  %v1082 = vunpack.c.l.b16 %v723
  %v1083 = vunpack.c.h.b16 %v723
  %v1084 = vunpack.c.l.b16 %v724
  %v1085 = vunpack.c.h.b16 %v724
  %v1086 = vunpack.c.l.b16 %v725
  %v1087 = vunpack.c.h.b16 %v725
  %v1088 = vunpack.c.l.b16 %v726
  %v1089 = vunpack.c.h.b16 %v726
  %v1090 = vunpack.c.l.b16 %v727
  %v1091 = vunpack.c.h.b16 %v727
  %v1092 = vunpack.c.l.b16 %v728
  %v1093 = vunpack.c.h.b16 %v728
  %v1094 = vunpack.c.l.b16 %v729
  %v1095 = vunpack.c.h.b16 %v729
  %v1096 = vunpack.c.l.b16 %v730
  %v1097 = vunpack.c.h.b16 %v730
  %v1098 = vunpack.c.l.b16 %v731
  %v1099 = vunpack.c.h.b16 %v731
  %v1100 = vunpack.c.l.b16 %v732
  %v1101 = vunpack.c.h.b16 %v732
  %v1102 = vunpack.c.l.b16 %v733
  %v1103 = vunpack.c.h.b16 %v733
  %v1104 = vunpack.c.l.b16 %v734
  %v1105 = vunpack.c.h.b16 %v734
  %v1106 = vunpack.c.l.b16 %v735
  %v1107 = vunpack.c.h.b16 %v735
  %v1108 = vunpack.c.l.b16 %v736
  %v1109 = vunpack.c.h.b16 %v736
  %v1110 = vunpack.c.l.b16 %v737
  %v1111 = vunpack.c.h.b16 %v737
  %v1112 = vunpack.c.l.b16 %v738
  %v1113 = vunpack.c.h.b16 %v738
  %v1114 = vunpack.c.l.b16 %v739
  %v1115 = vunpack.c.h.b16 %v739
  %v1116 = vunpack.c.l.b16 %v740
  %v1117 = vunpack.c.h.b16 %v740
  %v1118 = vunpack.c.l.b16 %v741
  %v1119 = vunpack.c.h.b16 %v741
  %v1120 = vunpack.c.l.b16 %v742
  %v1121 = vunpack.c.h.b16 %v742
  %v1122 = vunpack.c.l.b16 %v743
  %v1123 = vunpack.c.h.b16 %v743
  %v1124 = vunpack.c.l.b16 %v744
  %v1125 = vunpack.c.h.b16 %v744
  %v1126 = vunpack.c.l.b16 %v745
  %v1127 = vunpack.c.h.b16 %v745
  %v1128 = vunpack.c.l.b16 %v746
  %v1129 = vunpack.c.h.b16 %v746
  %v1130 = vunpack.c.l.b16 %v747
  %v1131 = vunpack.c.h.b16 %v747
  %v1132 = vunpack.c.l.b16 %v748
  %v1133 = vunpack.c.h.b16 %v748
  %v1134 = vunpack.c.l.b16 %v749
  %v1135 = vunpack.c.h.b16 %v749
  %v1136 = vunpack.c.l.b16 %v750
  %v1137 = vunpack.c.h.b16 %v750
  %v1138 = vunpack.c.l.b16 %v751
  %v1139 = vunpack.c.h.b16 %v751
  %v1140 = vpack.c.b16 %v888, %v884
  %v1141 = vpack.c.b16 %v889, %v885
  %v1142 = vpack.c.b16 %v890, %v886
  %v1143 = vpack.c.b16 %v891, %v887
  %v1144 = vpack.c.b16 %v896, %v892
  %v1145 = vpack.c.b16 %v897, %v893
  %v1146 = vpack.c.b16 %v898, %v894
  %v1147 = vpack.c.b16 %v899, %v895
  %v1148 = vpack.c.b16 %v904, %v900
  %v1149 = vpack.c.b16 %v905, %v901
  %v1150 = vpack.c.b16 %v906, %v902
  %v1151 = vpack.c.b16 %v907, %v903
  %v1152 = vpack.c.b16 %v912, %v908
  %v1153 = vpack.c.b16 %v913, %v909
  %v1154 = vpack.c.b16 %v914, %v910
  %v1155 = vpack.c.b16 %v915, %v911
  %v1156 = vpack.c.b16 %v920, %v916
  %v1157 = vpack.c.b16 %v921, %v917
  %v1158 = vpack.c.b16 %v922, %v918
  %v1159 = vpack.c.b16 %v923, %v919
  %v1160 = vpack.c.b16 %v928, %v924
  %v1161 = vpack.c.b16 %v929, %v925
  %v1162 = vpack.c.b16 %v930, %v926
  %v1163 = vpack.c.b16 %v931, %v927
  %v1164 = vpack.c.b16 %v936, %v932
  %v1165 = vpack.c.b16 %v937, %v933
  %v1166 = vpack.c.b16 %v938, %v934
  %v1167 = vpack.c.b16 %v939, %v935
  %v1168 = vpack.c.b16 %v944, %v940
  %v1169 = vpack.c.b16 %v945, %v941
  %v1170 = vpack.c.b16 %v946, %v942
  %v1171 = vpack.c.b16 %v947, %v943
  %v1172 = vpack.c.b16 %v952, %v948
  %v1173 = vpack.c.b16 %v953, %v949
  %v1174 = vpack.c.b16 %v954, %v950
  %v1175 = vpack.c.b16 %v955, %v951
  %v1176 = vpack.c.b16 %v960, %v956
  %v1177 = vpack.c.b16 %v961, %v957
  %v1178 = vpack.c.b16 %v962, %v958
  %v1179 = vpack.c.b16 %v963, %v959
  %v1180 = vpack.c.b16 %v968, %v964
  %v1181 = vpack.c.b16 %v969, %v965
  %v1182 = vpack.c.b16 %v970, %v966
  %v1183 = vpack.c.b16 %v971, %v967
  %v1184 = vpack.c.b16 %v976, %v972
  %v1185 = vpack.c.b16 %v977, %v973
  %v1186 = vpack.c.b16 %v978, %v974
  %v1187 = vpack.c.b16 %v979, %v975
  %v1188 = vpack.c.b16 %v984, %v980
  %v1189 = vpack.c.b16 %v985, %v981
  %v1190 = vpack.c.b16 %v986, %v982
  %v1191 = vpack.c.b16 %v987, %v983
  %v1192 = vpack.c.b16 %v992, %v988
  %v1193 = vpack.c.b16 %v993, %v989
  %v1194 = vpack.c.b16 %v994, %v990
  %v1195 = vpack.c.b16 %v995, %v991
  %v1196 = vpack.c.b16 %v1000, %v996
  %v1197 = vpack.c.b16 %v1001, %v997
  %v1198 = vpack.c.b16 %v1002, %v998
  %v1199 = vpack.c.b16 %v1003, %v999
  %v1200 = vpack.c.b16 %v1008, %v1004
  %v1201 = vpack.c.b16 %v1009, %v1005
  %v1202 = vpack.c.b16 %v1010, %v1006
  %v1203 = vpack.c.b16 %v1011, %v1007
  %v1204 = vpack.c.b16 %v1016, %v1012
  %v1205 = vpack.c.b16 %v1017, %v1013
  %v1206 = vpack.c.b16 %v1018, %v1014
  %v1207 = vpack.c.b16 %v1019, %v1015
  %v1208 = vpack.c.b16 %v1024, %v1020
  %v1209 = vpack.c.b16 %v1025, %v1021
  %v1210 = vpack.c.b16 %v1026, %v1022
  %v1211 = vpack.c.b16 %v1027, %v1023
  %v1212 = vpack.c.b16 %v1032, %v1028
  %v1213 = vpack.c.b16 %v1033, %v1029
  %v1214 = vpack.c.b16 %v1034, %v1030
  %v1215 = vpack.c.b16 %v1035, %v1031
  %v1216 = vpack.c.b16 %v1040, %v1036
  %v1217 = vpack.c.b16 %v1041, %v1037
  %v1218 = vpack.c.b16 %v1042, %v1038
  %v1219 = vpack.c.b16 %v1043, %v1039
  %v1220 = vpack.c.b16 %v1048, %v1044
  %v1221 = vpack.c.b16 %v1049, %v1045
  %v1222 = vpack.c.b16 %v1050, %v1046
  %v1223 = vpack.c.b16 %v1051, %v1047
  %v1224 = vpack.c.b16 %v1056, %v1052
  %v1225 = vpack.c.b16 %v1057, %v1053
  %v1226 = vpack.c.b16 %v1058, %v1054
  %v1227 = vpack.c.b16 %v1059, %v1055
  %v1228 = vpack.c.b16 %v1064, %v1060
  %v1229 = vpack.c.b16 %v1065, %v1061
  %v1230 = vpack.c.b16 %v1066, %v1062
  %v1231 = vpack.c.b16 %v1067, %v1063
  %v1232 = vpack.c.b16 %v1072, %v1068
  %v1233 = vpack.c.b16 %v1073, %v1069
  %v1234 = vpack.c.b16 %v1074, %v1070
  %v1235 = vpack.c.b16 %v1075, %v1071
  %v1236 = vpack.c.b16 %v1080, %v1076
  %v1237 = vpack.c.b16 %v1081, %v1077
  %v1238 = vpack.c.b16 %v1082, %v1078
  %v1239 = vpack.c.b16 %v1083, %v1079
  %v1240 = vpack.c.b16 %v1088, %v1084
  %v1241 = vpack.c.b16 %v1089, %v1085
  %v1242 = vpack.c.b16 %v1090, %v1086
  %v1243 = vpack.c.b16 %v1091, %v1087
  %v1244 = vpack.c.b16 %v1096, %v1092
  %v1245 = vpack.c.b16 %v1097, %v1093
  %v1246 = vpack.c.b16 %v1098, %v1094
  %v1247 = vpack.c.b16 %v1099, %v1095
  %v1248 = vpack.c.b16 %v1104, %v1100
  %v1249 = vpack.c.b16 %v1105, %v1101
  %v1250 = vpack.c.b16 %v1106, %v1102
  %v1251 = vpack.c.b16 %v1107, %v1103
  %v1252 = vpack.c.b16 %v1112, %v1108
  %v1253 = vpack.c.b16 %v1113, %v1109
  %v1254 = vpack.c.b16 %v1114, %v1110
  %v1255 = vpack.c.b16 %v1115, %v1111
  %v1256 = vpack.c.b16 %v1120, %v1116
  %v1257 = vpack.c.b16 %v1121, %v1117
  %v1258 = vpack.c.b16 %v1122, %v1118
  %v1259 = vpack.c.b16 %v1123, %v1119
  %v1260 = vpack.c.b16 %v1128, %v1124
  %v1261 = vpack.c.b16 %v1129, %v1125
  %v1262 = vpack.c.b16 %v1130, %v1126
  %v1263 = vpack.c.b16 %v1131, %v1127
  %v1264 = vpack.c.b16 %v1136, %v1132
  %v1265 = vpack.c.b16 %v1137, %v1133
  %v1266 = vpack.c.b16 %v1138, %v1134
  %v1267 = vpack.c.b16 %v1139, %v1135
  %1396 = vmatpush.bf16.msra.mxu0 %v1168
  %1397 = vmatpush.bf16.msra.mxu0 %v1164
  %1398 = vmatpush.bf16.msra.mxu0 %v1160
  %1399 = vmatpush.bf16.msra.mxu0 %v1156
  %1400 = vmatpush.bf16.msra.mxu0 %v1152
  %1401 = vmatpush.bf16.msra.mxu0 %v1148
  %1402 = vmatpush.bf16.msra.mxu0 %v1144
  %1403 = vmatpush.bf16.msra.mxu0 %v1140
  %1404 = vmatmul.bf16.gmra.mxu0 %v608
  %v1405 = vpop.f32.mrf.mxu0
  %v1406 = vadd.f32 %v752, %v1405
  %v1407 = vpop.f32.mrf.mxu0
  %v1408 = vadd.f32 %v752, %v1407
  %1409 = vmatmul.bf16.gmra.mxu0 %v612
  %v1410 = vpop.f32.mrf.mxu0
  %v1411 = vadd.f32 %v752, %v1410
  %v1412 = vpop.f32.mrf.mxu0
  %v1413 = vadd.f32 %v752, %v1412
  %1414 = vmatmul.bf16.gmra.mxu0 %v616
  %v1415 = vpop.f32.mrf.mxu0
  %v1416 = vadd.f32 %v752, %v1415
  %v1417 = vpop.f32.mrf.mxu0
  %v1418 = vadd.f32 %v752, %v1417
  %1419 = vmatmul.bf16.gmra.mxu0 %v620
  %v1420 = vpop.f32.mrf.mxu0
  %v1421 = vadd.f32 %v752, %v1420
  %v1422 = vpop.f32.mrf.mxu0
  %v1423 = vadd.f32 %v752, %v1422
  %1424 = vdwg.mxu0
  %1425 = vmatpush.bf16.msra.mxu0 %v1200
  %1426 = vmatpush.bf16.msra.mxu0 %v1196
  %1427 = vmatpush.bf16.msra.mxu0 %v1192
  %1428 = vmatpush.bf16.msra.mxu0 %v1188
  %1429 = vmatpush.bf16.msra.mxu0 %v1184
  %1430 = vmatpush.bf16.msra.mxu0 %v1180
  %1431 = vmatpush.bf16.msra.mxu0 %v1176
  %1432 = vmatpush.bf16.msra.mxu0 %v1172
  %1433 = vmatmul.bf16.gmra.mxu0 %v609
  %v1434 = vpop.f32.mrf.mxu0
  %v1435 = vadd.f32 %v1406, %v1434
  %v1436 = vpop.f32.mrf.mxu0
  %v1437 = vadd.f32 %v1408, %v1436
  %1438 = vmatmul.bf16.gmra.mxu0 %v613
  %v1439 = vpop.f32.mrf.mxu0
  %v1440 = vadd.f32 %v1411, %v1439
  %v1441 = vpop.f32.mrf.mxu0
  %v1442 = vadd.f32 %v1413, %v1441
  %1443 = vmatmul.bf16.gmra.mxu0 %v617
  %v1444 = vpop.f32.mrf.mxu0
  %v1445 = vadd.f32 %v1416, %v1444
  %v1446 = vpop.f32.mrf.mxu0
  %v1447 = vadd.f32 %v1418, %v1446
  %1448 = vmatmul.bf16.gmra.mxu0 %v621
  %v1449 = vpop.f32.mrf.mxu0
  %v1450 = vadd.f32 %v1421, %v1449
  %v1451 = vpop.f32.mrf.mxu0
  %v1452 = vadd.f32 %v1423, %v1451
  %1453 = vdwg.mxu0
  %1454 = vmatpush.bf16.msra.mxu0 %v1232
  %1455 = vmatpush.bf16.msra.mxu0 %v1228
  %1456 = vmatpush.bf16.msra.mxu0 %v1224
  %1457 = vmatpush.bf16.msra.mxu0 %v1220
  %1458 = vmatpush.bf16.msra.mxu0 %v1216
  %1459 = vmatpush.bf16.msra.mxu0 %v1212
  %1460 = vmatpush.bf16.msra.mxu0 %v1208
  %1461 = vmatpush.bf16.msra.mxu0 %v1204
  %1462 = vmatmul.bf16.gmra.mxu0 %v610
  %v1463 = vpop.f32.mrf.mxu0
  %v1464 = vadd.f32 %v1435, %v1463
  %v1465 = vpop.f32.mrf.mxu0
  %v1466 = vadd.f32 %v1437, %v1465
  %1467 = vmatmul.bf16.gmra.mxu0 %v614
  %v1468 = vpop.f32.mrf.mxu0
  %v1469 = vadd.f32 %v1440, %v1468
  %v1470 = vpop.f32.mrf.mxu0
  %v1471 = vadd.f32 %v1442, %v1470
  %1472 = vmatmul.bf16.gmra.mxu0 %v618
  %v1473 = vpop.f32.mrf.mxu0
  %v1474 = vadd.f32 %v1445, %v1473
  %v1475 = vpop.f32.mrf.mxu0
  %v1476 = vadd.f32 %v1447, %v1475
  %1477 = vmatmul.bf16.gmra.mxu0 %v622
  %v1478 = vpop.f32.mrf.mxu0
  %v1479 = vadd.f32 %v1450, %v1478
  %v1480 = vpop.f32.mrf.mxu0
  %v1481 = vadd.f32 %v1452, %v1480
  %1482 = vdwg.mxu0
  %1483 = vmatpush.bf16.msra.mxu0 %v1264
  %1484 = vmatpush.bf16.msra.mxu0 %v1260
  %1485 = vmatpush.bf16.msra.mxu0 %v1256
  %1486 = vmatpush.bf16.msra.mxu0 %v1252
  %1487 = vmatpush.bf16.msra.mxu0 %v1248
  %1488 = vmatpush.bf16.msra.mxu0 %v1244
  %1489 = vmatpush.bf16.msra.mxu0 %v1240
  %1490 = vmatpush.bf16.msra.mxu0 %v1236
  %1491 = vmatmul.bf16.gmra.mxu0 %v611
  %v1492 = vpop.f32.mrf.mxu0
  %v1493 = vadd.f32 %v1464, %v1492
  %v1494 = vpop.f32.mrf.mxu0
  %v1495 = vadd.f32 %v1466, %v1494
  %1496 = vmatmul.bf16.gmra.mxu0 %v615
  %v1497 = vpop.f32.mrf.mxu0
  %v1498 = vadd.f32 %v1469, %v1497
  %v1499 = vpop.f32.mrf.mxu0
  %v1500 = vadd.f32 %v1471, %v1499
  %1501 = vmatmul.bf16.gmra.mxu0 %v619
  %v1502 = vpop.f32.mrf.mxu0
  %v1503 = vadd.f32 %v1474, %v1502
  %v1504 = vpop.f32.mrf.mxu0
  %v1505 = vadd.f32 %v1476, %v1504
  %1506 = vmatmul.bf16.gmra.mxu0 %v623
  %v1507 = vpop.f32.mrf.mxu0
  %v1508 = vadd.f32 %v1479, %v1507
  %v1509 = vpop.f32.mrf.mxu0
  %v1510 = vadd.f32 %v1481, %v1509
  %1511 = vdwg.mxu0
  %1512 = vmatpush.bf16.msra.mxu0 %v1169
  %1513 = vmatpush.bf16.msra.mxu0 %v1165
  %1514 = vmatpush.bf16.msra.mxu0 %v1161
  %1515 = vmatpush.bf16.msra.mxu0 %v1157
  %1516 = vmatpush.bf16.msra.mxu0 %v1153
  %1517 = vmatpush.bf16.msra.mxu0 %v1149
  %1518 = vmatpush.bf16.msra.mxu0 %v1145
  %1519 = vmatpush.bf16.msra.mxu0 %v1141
  %1520 = vmatmul.bf16.gmra.mxu0 %v608
  %v1521 = vpop.f32.mrf.mxu0
  %v1522 = vadd.f32 %v753, %v1521
  %v1523 = vpop.f32.mrf.mxu0
  %v1524 = vadd.f32 %v753, %v1523
  %1525 = vmatmul.bf16.gmra.mxu0 %v612
  %v1526 = vpop.f32.mrf.mxu0
  %v1527 = vadd.f32 %v753, %v1526
  %v1528 = vpop.f32.mrf.mxu0
  %v1529 = vadd.f32 %v753, %v1528
  %1530 = vmatmul.bf16.gmra.mxu0 %v616
  %v1531 = vpop.f32.mrf.mxu0
  %v1532 = vadd.f32 %v753, %v1531
  %v1533 = vpop.f32.mrf.mxu0
  %v1534 = vadd.f32 %v753, %v1533
  %1535 = vmatmul.bf16.gmra.mxu0 %v620
  %v1536 = vpop.f32.mrf.mxu0
  %v1537 = vadd.f32 %v753, %v1536
  %v1538 = vpop.f32.mrf.mxu0
  %v1539 = vadd.f32 %v753, %v1538
  %1540 = vdwg.mxu0
  %1541 = vmatpush.bf16.msra.mxu0 %v1201
  %1542 = vmatpush.bf16.msra.mxu0 %v1197
  %1543 = vmatpush.bf16.msra.mxu0 %v1193
  %1544 = vmatpush.bf16.msra.mxu0 %v1189
  %1545 = vmatpush.bf16.msra.mxu0 %v1185
  %1546 = vmatpush.bf16.msra.mxu0 %v1181
  %1547 = vmatpush.bf16.msra.mxu0 %v1177
  %1548 = vmatpush.bf16.msra.mxu0 %v1173
  %1549 = vmatmul.bf16.gmra.mxu0 %v609
  %v1550 = vpop.f32.mrf.mxu0
  %v1551 = vadd.f32 %v1522, %v1550
  %v1552 = vpop.f32.mrf.mxu0
  %v1553 = vadd.f32 %v1524, %v1552
  %1554 = vmatmul.bf16.gmra.mxu0 %v613
  %v1555 = vpop.f32.mrf.mxu0
  %v1556 = vadd.f32 %v1527, %v1555
  %v1557 = vpop.f32.mrf.mxu0
  %v1558 = vadd.f32 %v1529, %v1557
  %1559 = vmatmul.bf16.gmra.mxu0 %v617
  %v1560 = vpop.f32.mrf.mxu0
  %v1561 = vadd.f32 %v1532, %v1560
  %v1562 = vpop.f32.mrf.mxu0
  %v1563 = vadd.f32 %v1534, %v1562
  %1564 = vmatmul.bf16.gmra.mxu0 %v621
  %v1565 = vpop.f32.mrf.mxu0
  %v1566 = vadd.f32 %v1537, %v1565
  %v1567 = vpop.f32.mrf.mxu0
  %v1568 = vadd.f32 %v1539, %v1567
  %1569 = vdwg.mxu0
  %1570 = vmatpush.bf16.msra.mxu0 %v1233
  %1571 = vmatpush.bf16.msra.mxu0 %v1229
  %1572 = vmatpush.bf16.msra.mxu0 %v1225
  %1573 = vmatpush.bf16.msra.mxu0 %v1221
  %1574 = vmatpush.bf16.msra.mxu0 %v1217
  %1575 = vmatpush.bf16.msra.mxu0 %v1213
  %1576 = vmatpush.bf16.msra.mxu0 %v1209
  %1577 = vmatpush.bf16.msra.mxu0 %v1205
  %1578 = vmatmul.bf16.gmra.mxu0 %v610
  %v1579 = vpop.f32.mrf.mxu0
  %v1580 = vadd.f32 %v1551, %v1579
  %v1581 = vpop.f32.mrf.mxu0
  %v1582 = vadd.f32 %v1553, %v1581
  %1583 = vmatmul.bf16.gmra.mxu0 %v614
  %v1584 = vpop.f32.mrf.mxu0
  %v1585 = vadd.f32 %v1556, %v1584
  %v1586 = vpop.f32.mrf.mxu0
  %v1587 = vadd.f32 %v1558, %v1586
  %1588 = vmatmul.bf16.gmra.mxu0 %v618
  %v1589 = vpop.f32.mrf.mxu0
  %v1590 = vadd.f32 %v1561, %v1589
  %v1591 = vpop.f32.mrf.mxu0
  %v1592 = vadd.f32 %v1563, %v1591
  %1593 = vmatmul.bf16.gmra.mxu0 %v622
  %v1594 = vpop.f32.mrf.mxu0
  %v1595 = vadd.f32 %v1566, %v1594
  %v1596 = vpop.f32.mrf.mxu0
  %v1597 = vadd.f32 %v1568, %v1596
  %1598 = vdwg.mxu0
  %1599 = vmatpush.bf16.msra.mxu0 %v1265
  %1600 = vmatpush.bf16.msra.mxu0 %v1261
  %1601 = vmatpush.bf16.msra.mxu0 %v1257
  %1602 = vmatpush.bf16.msra.mxu0 %v1253
  %1603 = vmatpush.bf16.msra.mxu0 %v1249
  %1604 = vmatpush.bf16.msra.mxu0 %v1245
  %1605 = vmatpush.bf16.msra.mxu0 %v1241
  %1606 = vmatpush.bf16.msra.mxu0 %v1237
  %1607 = vmatmul.bf16.gmra.mxu0 %v611
  %v1608 = vpop.f32.mrf.mxu0
  %v1609 = vadd.f32 %v1580, %v1608
  %v1610 = vpop.f32.mrf.mxu0
  %v1611 = vadd.f32 %v1582, %v1610
  %1612 = vmatmul.bf16.gmra.mxu0 %v615
  %v1613 = vpop.f32.mrf.mxu0
  %v1614 = vadd.f32 %v1585, %v1613
  %v1615 = vpop.f32.mrf.mxu0
  %v1616 = vadd.f32 %v1587, %v1615
  %1617 = vmatmul.bf16.gmra.mxu0 %v619
  %v1618 = vpop.f32.mrf.mxu0
  %v1619 = vadd.f32 %v1590, %v1618
  %v1620 = vpop.f32.mrf.mxu0
  %v1621 = vadd.f32 %v1592, %v1620
  %1622 = vmatmul.bf16.gmra.mxu0 %v623
  %v1623 = vpop.f32.mrf.mxu0
  %v1624 = vadd.f32 %v1595, %v1623
  %v1625 = vpop.f32.mrf.mxu0
  %v1626 = vadd.f32 %v1597, %v1625
  %1627 = vdwg.mxu0
  %1628 = vmatpush.bf16.msra.mxu0 %v1170
  %1629 = vmatpush.bf16.msra.mxu0 %v1166
  %1630 = vmatpush.bf16.msra.mxu0 %v1162
  %1631 = vmatpush.bf16.msra.mxu0 %v1158
  %1632 = vmatpush.bf16.msra.mxu0 %v1154
  %1633 = vmatpush.bf16.msra.mxu0 %v1150
  %1634 = vmatpush.bf16.msra.mxu0 %v1146
  %1635 = vmatpush.bf16.msra.mxu0 %v1142
  %1636 = vmatmul.bf16.gmra.mxu0 %v608
  %v1637 = vpop.f32.mrf.mxu0
  %v1638 = vadd.f32 %v754, %v1637
  %v1639 = vpop.f32.mrf.mxu0
  %v1640 = vadd.f32 %v754, %v1639
  %1641 = vmatmul.bf16.gmra.mxu0 %v612
  %v1642 = vpop.f32.mrf.mxu0
  %v1643 = vadd.f32 %v754, %v1642
  %v1644 = vpop.f32.mrf.mxu0
  %v1645 = vadd.f32 %v754, %v1644
  %1646 = vmatmul.bf16.gmra.mxu0 %v616
  %v1647 = vpop.f32.mrf.mxu0
  %v1648 = vadd.f32 %v754, %v1647
  %v1649 = vpop.f32.mrf.mxu0
  %v1650 = vadd.f32 %v754, %v1649
  %1651 = vmatmul.bf16.gmra.mxu0 %v620
  %v1652 = vpop.f32.mrf.mxu0
  %v1653 = vadd.f32 %v754, %v1652
  %v1654 = vpop.f32.mrf.mxu0
  %v1655 = vadd.f32 %v754, %v1654
  %1656 = vdwg.mxu0
  %1657 = vmatpush.bf16.msra.mxu0 %v1202
  %1658 = vmatpush.bf16.msra.mxu0 %v1198
  %1659 = vmatpush.bf16.msra.mxu0 %v1194
  %1660 = vmatpush.bf16.msra.mxu0 %v1190
  %1661 = vmatpush.bf16.msra.mxu0 %v1186
  %1662 = vmatpush.bf16.msra.mxu0 %v1182
  %1663 = vmatpush.bf16.msra.mxu0 %v1178
  %1664 = vmatpush.bf16.msra.mxu0 %v1174
  %1665 = vmatmul.bf16.gmra.mxu0 %v609
  %v1666 = vpop.f32.mrf.mxu0
  %v1667 = vadd.f32 %v1638, %v1666
  %v1668 = vpop.f32.mrf.mxu0
  %v1669 = vadd.f32 %v1640, %v1668
  %1670 = vmatmul.bf16.gmra.mxu0 %v613
  %v1671 = vpop.f32.mrf.mxu0
  %v1672 = vadd.f32 %v1643, %v1671
  %v1673 = vpop.f32.mrf.mxu0
  %v1674 = vadd.f32 %v1645, %v1673
  %1675 = vmatmul.bf16.gmra.mxu0 %v617
  %v1676 = vpop.f32.mrf.mxu0
  %v1677 = vadd.f32 %v1648, %v1676
  %v1678 = vpop.f32.mrf.mxu0
  %v1679 = vadd.f32 %v1650, %v1678
  %1680 = vmatmul.bf16.gmra.mxu0 %v621
  %v1681 = vpop.f32.mrf.mxu0
  %v1682 = vadd.f32 %v1653, %v1681
  %v1683 = vpop.f32.mrf.mxu0
  %v1684 = vadd.f32 %v1655, %v1683
  %1685 = vdwg.mxu0
  %1686 = vmatpush.bf16.msra.mxu0 %v1234
  %1687 = vmatpush.bf16.msra.mxu0 %v1230
  %1688 = vmatpush.bf16.msra.mxu0 %v1226
  %1689 = vmatpush.bf16.msra.mxu0 %v1222
  %1690 = vmatpush.bf16.msra.mxu0 %v1218
  %1691 = vmatpush.bf16.msra.mxu0 %v1214
  %1692 = vmatpush.bf16.msra.mxu0 %v1210
  %1693 = vmatpush.bf16.msra.mxu0 %v1206
  %1694 = vmatmul.bf16.gmra.mxu0 %v610
  %v1695 = vpop.f32.mrf.mxu0
  %v1696 = vadd.f32 %v1667, %v1695
  %v1697 = vpop.f32.mrf.mxu0
  %v1698 = vadd.f32 %v1669, %v1697
  %1699 = vmatmul.bf16.gmra.mxu0 %v614
  %v1700 = vpop.f32.mrf.mxu0
  %v1701 = vadd.f32 %v1672, %v1700
  %v1702 = vpop.f32.mrf.mxu0
  %v1703 = vadd.f32 %v1674, %v1702
  %1704 = vmatmul.bf16.gmra.mxu0 %v618
  %v1705 = vpop.f32.mrf.mxu0
  %v1706 = vadd.f32 %v1677, %v1705
  %v1707 = vpop.f32.mrf.mxu0
  %v1708 = vadd.f32 %v1679, %v1707
  %1709 = vmatmul.bf16.gmra.mxu0 %v622
  %v1710 = vpop.f32.mrf.mxu0
  %v1711 = vadd.f32 %v1682, %v1710
  %v1712 = vpop.f32.mrf.mxu0
  %v1713 = vadd.f32 %v1684, %v1712
  %1714 = vdwg.mxu0
  %1715 = vmatpush.bf16.msra.mxu0 %v1266
  %1716 = vmatpush.bf16.msra.mxu0 %v1262
  %1717 = vmatpush.bf16.msra.mxu0 %v1258
  %1718 = vmatpush.bf16.msra.mxu0 %v1254
  %1719 = vmatpush.bf16.msra.mxu0 %v1250
  %1720 = vmatpush.bf16.msra.mxu0 %v1246
  %1721 = vmatpush.bf16.msra.mxu0 %v1242
  %1722 = vmatpush.bf16.msra.mxu0 %v1238
  %1723 = vmatmul.bf16.gmra.mxu0 %v611
  %v1724 = vpop.f32.mrf.mxu0
  %v1725 = vadd.f32 %v1696, %v1724
  %v1726 = vpop.f32.mrf.mxu0
  %v1727 = vadd.f32 %v1698, %v1726
  %1728 = vmatmul.bf16.gmra.mxu0 %v615
  %v1729 = vpop.f32.mrf.mxu0
  %v1730 = vadd.f32 %v1701, %v1729
  %v1731 = vpop.f32.mrf.mxu0
  %v1732 = vadd.f32 %v1703, %v1731
  %1733 = vmatmul.bf16.gmra.mxu0 %v619
  %v1734 = vpop.f32.mrf.mxu0
  %v1735 = vadd.f32 %v1706, %v1734
  %v1736 = vpop.f32.mrf.mxu0
  %v1737 = vadd.f32 %v1708, %v1736
  %1738 = vmatmul.bf16.gmra.mxu0 %v623
  %v1739 = vpop.f32.mrf.mxu0
  %v1740 = vadd.f32 %v1711, %v1739
  %v1741 = vpop.f32.mrf.mxu0
  %v1742 = vadd.f32 %v1713, %v1741
  %1743 = vdwg.mxu0
  %1744 = vmatpush.bf16.msra.mxu0 %v1171
  %1745 = vmatpush.bf16.msra.mxu0 %v1167
  %1746 = vmatpush.bf16.msra.mxu0 %v1163
  %1747 = vmatpush.bf16.msra.mxu0 %v1159
  %1748 = vmatpush.bf16.msra.mxu0 %v1155
  %1749 = vmatpush.bf16.msra.mxu0 %v1151
  %1750 = vmatpush.bf16.msra.mxu0 %v1147
  %1751 = vmatpush.bf16.msra.mxu0 %v1143
  %1752 = vmatmul.bf16.gmra.mxu0 %v608
  %v1753 = vpop.f32.mrf.mxu0
  %v1754 = vadd.f32 %v755, %v1753
  %v1755 = vpop.f32.mrf.mxu0
  %v1756 = vadd.f32 %v755, %v1755
  %1757 = vmatmul.bf16.gmra.mxu0 %v612
  %v1758 = vpop.f32.mrf.mxu0
  %v1759 = vadd.f32 %v755, %v1758
  %v1760 = vpop.f32.mrf.mxu0
  %v1761 = vadd.f32 %v755, %v1760
  %1762 = vmatmul.bf16.gmra.mxu0 %v616
  %v1763 = vpop.f32.mrf.mxu0
  %v1764 = vadd.f32 %v755, %v1763
  %v1765 = vpop.f32.mrf.mxu0
  %v1766 = vadd.f32 %v755, %v1765
  %1767 = vmatmul.bf16.gmra.mxu0 %v620
  %v1768 = vpop.f32.mrf.mxu0
  %v1769 = vadd.f32 %v755, %v1768
  %v1770 = vpop.f32.mrf.mxu0
  %v1771 = vadd.f32 %v755, %v1770
  %1772 = vdwg.mxu0
  %1773 = vmatpush.bf16.msra.mxu0 %v1203
  %1774 = vmatpush.bf16.msra.mxu0 %v1199
  %1775 = vmatpush.bf16.msra.mxu0 %v1195
  %1776 = vmatpush.bf16.msra.mxu0 %v1191
  %1777 = vmatpush.bf16.msra.mxu0 %v1187
  %1778 = vmatpush.bf16.msra.mxu0 %v1183
  %1779 = vmatpush.bf16.msra.mxu0 %v1179
  %1780 = vmatpush.bf16.msra.mxu0 %v1175
  %1781 = vmatmul.bf16.gmra.mxu0 %v609
  %v1782 = vpop.f32.mrf.mxu0
  %v1783 = vadd.f32 %v1754, %v1782
  %v1784 = vpop.f32.mrf.mxu0
  %v1785 = vadd.f32 %v1756, %v1784
  %1786 = vmatmul.bf16.gmra.mxu0 %v613
  %v1787 = vpop.f32.mrf.mxu0
  %v1788 = vadd.f32 %v1759, %v1787
  %v1789 = vpop.f32.mrf.mxu0
  %v1790 = vadd.f32 %v1761, %v1789
  %1791 = vmatmul.bf16.gmra.mxu0 %v617
  %v1792 = vpop.f32.mrf.mxu0
  %v1793 = vadd.f32 %v1764, %v1792
  %v1794 = vpop.f32.mrf.mxu0
  %v1795 = vadd.f32 %v1766, %v1794
  %1796 = vmatmul.bf16.gmra.mxu0 %v621
  %v1797 = vpop.f32.mrf.mxu0
  %v1798 = vadd.f32 %v1769, %v1797
  %v1799 = vpop.f32.mrf.mxu0
  %v1800 = vadd.f32 %v1771, %v1799
  %1801 = vdwg.mxu0
  %1802 = vmatpush.bf16.msra.mxu0 %v1235
  %1803 = vmatpush.bf16.msra.mxu0 %v1231
  %1804 = vmatpush.bf16.msra.mxu0 %v1227
  %1805 = vmatpush.bf16.msra.mxu0 %v1223
  %1806 = vmatpush.bf16.msra.mxu0 %v1219
  %1807 = vmatpush.bf16.msra.mxu0 %v1215
  %1808 = vmatpush.bf16.msra.mxu0 %v1211
  %1809 = vmatpush.bf16.msra.mxu0 %v1207
  %1810 = vmatmul.bf16.gmra.mxu0 %v610
  %v1811 = vpop.f32.mrf.mxu0
  %v1812 = vadd.f32 %v1783, %v1811
  %v1813 = vpop.f32.mrf.mxu0
  %v1814 = vadd.f32 %v1785, %v1813
  %1815 = vmatmul.bf16.gmra.mxu0 %v614
  %v1816 = vpop.f32.mrf.mxu0
  %v1817 = vadd.f32 %v1788, %v1816
  %v1818 = vpop.f32.mrf.mxu0
  %v1819 = vadd.f32 %v1790, %v1818
  %1820 = vmatmul.bf16.gmra.mxu0 %v618
  %v1821 = vpop.f32.mrf.mxu0
  %v1822 = vadd.f32 %v1793, %v1821
  %v1823 = vpop.f32.mrf.mxu0
  %v1824 = vadd.f32 %v1795, %v1823
  %1825 = vmatmul.bf16.gmra.mxu0 %v622
  %v1826 = vpop.f32.mrf.mxu0
  %v1827 = vadd.f32 %v1798, %v1826
  %v1828 = vpop.f32.mrf.mxu0
  %v1829 = vadd.f32 %v1800, %v1828
  %1830 = vdwg.mxu0
  %1831 = vmatpush.bf16.msra.mxu0 %v1267
  %1832 = vmatpush.bf16.msra.mxu0 %v1263
  %1833 = vmatpush.bf16.msra.mxu0 %v1259
  %1834 = vmatpush.bf16.msra.mxu0 %v1255
  %1835 = vmatpush.bf16.msra.mxu0 %v1251
  %1836 = vmatpush.bf16.msra.mxu0 %v1247
  %1837 = vmatpush.bf16.msra.mxu0 %v1243
  %1838 = vmatpush.bf16.msra.mxu0 %v1239
  %1839 = vmatmul.bf16.gmra.mxu0 %v611
  %v1840 = vpop.f32.mrf.mxu0
  %v1841 = vadd.f32 %v1812, %v1840
  %v1842 = vpop.f32.mrf.mxu0
  %v1843 = vadd.f32 %v1814, %v1842
  %1844 = vmatmul.bf16.gmra.mxu0 %v615
  %v1845 = vpop.f32.mrf.mxu0
  %v1846 = vadd.f32 %v1817, %v1845
  %v1847 = vpop.f32.mrf.mxu0
  %v1848 = vadd.f32 %v1819, %v1847
  %1849 = vmatmul.bf16.gmra.mxu0 %v619
  %v1850 = vpop.f32.mrf.mxu0
  %v1851 = vadd.f32 %v1822, %v1850
  %v1852 = vpop.f32.mrf.mxu0
  %v1853 = vadd.f32 %v1824, %v1852
  %1854 = vmatmul.bf16.gmra.mxu0 %v623
  %v1855 = vpop.f32.mrf.mxu0
  %v1856 = vadd.f32 %v1827, %v1855
  %v1857 = vpop.f32.mrf.mxu0
  %v1858 = vadd.f32 %v1829, %v1857
  %1859 = vdwg.mxu0
  %v1860 = vadd.f32 %v1493, %v1495
  %v1861 = vadd.f32 %v1860, %v1498
  %v1862 = vadd.f32 %v1861, %v1500
  %v1863 = vadd.f32 %v1862, %v1503
  %v1864 = vadd.f32 %v1863, %v1505
  %v1865 = vadd.f32 %v1864, %v1508
  %v1866 = vadd.f32 %v1865, %v1510
  %v1867 = vrot.slane %v1866, 4
  %v1868 = vadd.f32 %v1866, %v1867
  %v1869 = vrot.slane %v1868, 2
  %v1870 = vadd.f32 %v1868, %v1869
  %v1871 = vrot.slane %v1870, 1
  %v1872 = vadd.f32 %v1870, %v1871
  %v1873 = vadd.f32 %v1609, %v1611
  %v1874 = vadd.f32 %v1873, %v1614
  %v1875 = vadd.f32 %v1874, %v1616
  %v1876 = vadd.f32 %v1875, %v1619
  %v1877 = vadd.f32 %v1876, %v1621
  %v1878 = vadd.f32 %v1877, %v1624
  %v1879 = vadd.f32 %v1878, %v1626
  %v1880 = vrot.slane %v1879, 4
  %v1881 = vadd.f32 %v1879, %v1880
  %v1882 = vrot.slane %v1881, 2
  %v1883 = vadd.f32 %v1881, %v1882
  %v1884 = vrot.slane %v1883, 1
  %v1885 = vadd.f32 %v1883, %v1884
  %v1886 = vadd.f32 %v1725, %v1727
  %v1887 = vadd.f32 %v1886, %v1730
  %v1888 = vadd.f32 %v1887, %v1732
  %v1889 = vadd.f32 %v1888, %v1735
  %v1890 = vadd.f32 %v1889, %v1737
  %v1891 = vadd.f32 %v1890, %v1740
  %v1892 = vadd.f32 %v1891, %v1742
  %v1893 = vrot.slane %v1892, 4
  %v1894 = vadd.f32 %v1892, %v1893
  %v1895 = vrot.slane %v1894, 2
  %v1896 = vadd.f32 %v1894, %v1895
  %v1897 = vrot.slane %v1896, 1
  %v1898 = vadd.f32 %v1896, %v1897
  %v1899 = vadd.f32 %v1841, %v1843
  %v1900 = vadd.f32 %v1899, %v1846
  %v1901 = vadd.f32 %v1900, %v1848
  %v1902 = vadd.f32 %v1901, %v1851
  %v1903 = vadd.f32 %v1902, %v1853
  %v1904 = vadd.f32 %v1903, %v1856
  %v1905 = vadd.f32 %v1904, %v1858
  %v1906 = vrot.slane %v1905, 4
  %v1907 = vadd.f32 %v1905, %v1906
  %v1908 = vrot.slane %v1907, 2
  %v1909 = vadd.f32 %v1907, %v1908
  %v1910 = vrot.slane %v1909, 1
  %v1911 = vadd.f32 %v1909, %v1910
  %v1912 = vmul.f32 %v1872, 0.015625
  %v1913 = vmul.f32 %v1885, 0.015625
  %v1914 = vmul.f32 %v1898, 0.015625
  %v1915 = vmul.f32 %v1911, 0.015625
  %v1916 = vmul.f32 %v1493, %v1493
  %v1917 = vmul.f32 %v1609, %v1609
  %v1918 = vmul.f32 %v1725, %v1725
  %v1919 = vmul.f32 %v1841, %v1841
  %v1920 = vmul.f32 %v1495, %v1495
  %v1921 = vmul.f32 %v1611, %v1611
  %v1922 = vmul.f32 %v1727, %v1727
  %v1923 = vmul.f32 %v1843, %v1843
  %v1924 = vmul.f32 %v1498, %v1498
  %v1925 = vmul.f32 %v1614, %v1614
  %v1926 = vmul.f32 %v1730, %v1730
  %v1927 = vmul.f32 %v1846, %v1846
  %v1928 = vmul.f32 %v1500, %v1500
  %v1929 = vmul.f32 %v1616, %v1616
  %v1930 = vmul.f32 %v1732, %v1732
  %v1931 = vmul.f32 %v1848, %v1848
  %v1932 = vmul.f32 %v1503, %v1503
  %v1933 = vmul.f32 %v1619, %v1619
  %v1934 = vmul.f32 %v1735, %v1735
  %v1935 = vmul.f32 %v1851, %v1851
  %v1936 = vmul.f32 %v1505, %v1505
  %v1937 = vmul.f32 %v1621, %v1621
  %v1938 = vmul.f32 %v1737, %v1737
  %v1939 = vmul.f32 %v1853, %v1853
  %v1940 = vmul.f32 %v1508, %v1508
  %v1941 = vmul.f32 %v1624, %v1624
  %v1942 = vmul.f32 %v1740, %v1740
  %v1943 = vmul.f32 %v1856, %v1856
  %v1944 = vmul.f32 %v1510, %v1510
  %v1945 = vmul.f32 %v1626, %v1626
  %v1946 = vmul.f32 %v1742, %v1742
  %v1947 = vmul.f32 %v1858, %v1858
  %v1948 = vadd.f32 %v1916, %v1920
  %v1949 = vadd.f32 %v1948, %v1924
  %v1950 = vadd.f32 %v1949, %v1928
  %v1951 = vadd.f32 %v1950, %v1932
  %v1952 = vadd.f32 %v1951, %v1936
  %v1953 = vadd.f32 %v1952, %v1940
  %v1954 = vadd.f32 %v1953, %v1944
  %v1955 = vrot.slane %v1954, 4
  %v1956 = vadd.f32 %v1954, %v1955
  %v1957 = vrot.slane %v1956, 2
  %v1958 = vadd.f32 %v1956, %v1957
  %v1959 = vrot.slane %v1958, 1
  %v1960 = vadd.f32 %v1958, %v1959
  %v1961 = vadd.f32 %v1917, %v1921
  %v1962 = vadd.f32 %v1961, %v1925
  %v1963 = vadd.f32 %v1962, %v1929
  %v1964 = vadd.f32 %v1963, %v1933
  %v1965 = vadd.f32 %v1964, %v1937
  %v1966 = vadd.f32 %v1965, %v1941
  %v1967 = vadd.f32 %v1966, %v1945
  %v1968 = vrot.slane %v1967, 4
  %v1969 = vadd.f32 %v1967, %v1968
  %v1970 = vrot.slane %v1969, 2
  %v1971 = vadd.f32 %v1969, %v1970
  %v1972 = vrot.slane %v1971, 1
  %v1973 = vadd.f32 %v1971, %v1972
  %v1974 = vadd.f32 %v1918, %v1922
  %v1975 = vadd.f32 %v1974, %v1926
  %v1976 = vadd.f32 %v1975, %v1930
  %v1977 = vadd.f32 %v1976, %v1934
  %v1978 = vadd.f32 %v1977, %v1938
  %v1979 = vadd.f32 %v1978, %v1942
  %v1980 = vadd.f32 %v1979, %v1946
  %v1981 = vrot.slane %v1980, 4
  %v1982 = vadd.f32 %v1980, %v1981
  %v1983 = vrot.slane %v1982, 2
  %v1984 = vadd.f32 %v1982, %v1983
  %v1985 = vrot.slane %v1984, 1
  %v1986 = vadd.f32 %v1984, %v1985
  %v1987 = vadd.f32 %v1919, %v1923
  %v1988 = vadd.f32 %v1987, %v1927
  %v1989 = vadd.f32 %v1988, %v1931
  %v1990 = vadd.f32 %v1989, %v1935
  %v1991 = vadd.f32 %v1990, %v1939
  %v1992 = vadd.f32 %v1991, %v1943
  %v1993 = vadd.f32 %v1992, %v1947
  %v1994 = vrot.slane %v1993, 4
  %v1995 = vadd.f32 %v1993, %v1994
  %v1996 = vrot.slane %v1995, 2
  %v1997 = vadd.f32 %v1995, %v1996
  %v1998 = vrot.slane %v1997, 1
  %v1999 = vadd.f32 %v1997, %v1998
  %v2000 = vmul.f32 %v1960, 0.015625
  %v2001 = vmul.f32 %v1973, 0.015625
  %v2002 = vmul.f32 %v1986, 0.015625
  %v2003 = vmul.f32 %v1999, 0.015625
  %v2004 = vmul.f32 %v1912, %v1912
  %v2005 = vmul.f32 %v1913, %v1913
  %v2006 = vmul.f32 %v1914, %v1914
  %v2007 = vmul.f32 %v1915, %v1915
  %v2008 = vsub.f32 %v2000, %v2004
  %v2009 = vsub.f32 %v2001, %v2005
  %v2010 = vsub.f32 %v2002, %v2006
  %v2011 = vsub.f32 %v2003, %v2007
  %v2012 = vadd.f32 %v2008, 1e-05
  %v2013 = vadd.f32 %v2009, 1e-05
  %v2014 = vadd.f32 %v2010, 1e-05
  %v2015 = vadd.f32 %v2011, 1e-05
  %v2016 = vrsqrt.pop %v2012
  %v2017 = vmul.f32 %v2016, %v2012
  %v2018 = vmul.f32 %v2017, %v2016
  %v2019 = vmul.f32 0.5, %v2018
  %v2020 = vsub.f32 1.5, %v2019
  %v2021 = vmul.f32 %v2016, %v2020
  %vm2022 = vweird.f32 %v2012
  %vm2023 = vweird.f32 %v2016
  %vm2024 = vmor %vm2022, %vm2023
  %v2025 = vsel %vm2024, %v2016, %v2021
  %v2026 = vrsqrt.pop %v2013
  %v2027 = vmul.f32 %v2026, %v2013
  %v2028 = vmul.f32 %v2027, %v2026
  %v2029 = vmul.f32 0.5, %v2028
  %v2030 = vsub.f32 1.5, %v2029
  %v2031 = vmul.f32 %v2026, %v2030
  %vm2032 = vweird.f32 %v2013
  %vm2033 = vweird.f32 %v2026
  %vm2034 = vmor %vm2032, %vm2033
  %v2035 = vsel %vm2034, %v2026, %v2031
  %v2036 = vrsqrt.pop %v2014
  %v2037 = vmul.f32 %v2036, %v2014
  %v2038 = vmul.f32 %v2037, %v2036
  %v2039 = vmul.f32 0.5, %v2038
  %v2040 = vsub.f32 1.5, %v2039
  %v2041 = vmul.f32 %v2036, %v2040
  %vm2042 = vweird.f32 %v2014
  %vm2043 = vweird.f32 %v2036
  %vm2044 = vmor %vm2042, %vm2043
  %v2045 = vsel %vm2044, %v2036, %v2041
  %v2046 = vrsqrt.pop %v2015
  %v2047 = vmul.f32 %v2046, %v2015
  %v2048 = vmul.f32 %v2047, %v2046
  %v2049 = vmul.f32 0.5, %v2048
  %v2050 = vsub.f32 1.5, %v2049
  %v2051 = vmul.f32 %v2046, %v2050
  %vm2052 = vweird.f32 %v2015
  %vm2053 = vweird.f32 %v2046
  %vm2054 = vmor %vm2052, %vm2053
  %v2055 = vsel %vm2054, %v2046, %v2051
  %v2056 = vmul.f32 %v62, %v2025
  %v2057 = vmul.f32 %v63, %v2035
  %v2058 = vmul.f32 %v64, %v2045
  %v2059 = vmul.f32 %v65, %v2055
  %v2060 = vmul.f32 %v1912, %v2056
  %v2061 = vmul.f32 %v1913, %v2057
  %v2062 = vmul.f32 %v1914, %v2058
  %v2063 = vmul.f32 %v1915, %v2059
  %v2068 = vrot.slane %v2060, 7
  %v2069 = vrot.slane %v2061, 7
  %v2070 = vrot.slane %v2062, 7
  %v2071 = vrot.slane %v2063, 7
  %v2076 = vsub.f32 %v62, %v2068
  %v2077 = vsub.f32 %v63, %v2069
  %v2078 = vsub.f32 %v64, %v2070
  %v2079 = vsub.f32 %v65, %v2071
  %v2080 = vperm.slane %v2056, 4
  %v2081 = vperm.slane %v2057, 4
  %v2082 = vperm.slane %v2058, 4
  %v2083 = vperm.slane %v2059, 4
  %v2084 = vmul.f32 %v1493, %v2080
  %v2085 = vmul.f32 %v1609, %v2081
  %v2086 = vmul.f32 %v1725, %v2082
  %v2087 = vmul.f32 %v1841, %v2083
  %v2088 = vmul.f32 %v1495, %v2080
  %v2089 = vmul.f32 %v1611, %v2081
  %v2090 = vmul.f32 %v1727, %v2082
  %v2091 = vmul.f32 %v1843, %v2083
  %v2092 = vmul.f32 %v1498, %v2080
  %v2093 = vmul.f32 %v1614, %v2081
  %v2094 = vmul.f32 %v1730, %v2082
  %v2095 = vmul.f32 %v1846, %v2083
  %v2096 = vmul.f32 %v1500, %v2080
  %v2097 = vmul.f32 %v1616, %v2081
  %v2098 = vmul.f32 %v1732, %v2082
  %v2099 = vmul.f32 %v1848, %v2083
  %v2100 = vmul.f32 %v1503, %v2080
  %v2101 = vmul.f32 %v1619, %v2081
  %v2102 = vmul.f32 %v1735, %v2082
  %v2103 = vmul.f32 %v1851, %v2083
  %v2104 = vmul.f32 %v1505, %v2080
  %v2105 = vmul.f32 %v1621, %v2081
  %v2106 = vmul.f32 %v1737, %v2082
  %v2107 = vmul.f32 %v1853, %v2083
  %v2108 = vmul.f32 %v1508, %v2080
  %v2109 = vmul.f32 %v1624, %v2081
  %v2110 = vmul.f32 %v1740, %v2082
  %v2111 = vmul.f32 %v1856, %v2083
  %v2112 = vmul.f32 %v1510, %v2080
  %v2113 = vmul.f32 %v1626, %v2081
  %v2114 = vmul.f32 %v1742, %v2082
  %v2115 = vmul.f32 %v1858, %v2083
  %v2116 = vperm.slane %v2076, 5
  %v2117 = vperm.slane %v2077, 5
  %v2118 = vperm.slane %v2078, 5
  %v2119 = vperm.slane %v2079, 5
  %v2120 = vadd.f32 %v2084, %v2116
  %v2121 = vadd.f32 %v2085, %v2117
  %v2122 = vadd.f32 %v2086, %v2118
  %v2123 = vadd.f32 %v2087, %v2119
  %v2124 = vadd.f32 %v2088, %v2116
  %v2125 = vadd.f32 %v2089, %v2117
  %v2126 = vadd.f32 %v2090, %v2118
  %v2127 = vadd.f32 %v2091, %v2119
  %v2128 = vadd.f32 %v2092, %v2116
  %v2129 = vadd.f32 %v2093, %v2117
  %v2130 = vadd.f32 %v2094, %v2118
  %v2131 = vadd.f32 %v2095, %v2119
  %v2132 = vadd.f32 %v2096, %v2116
  %v2133 = vadd.f32 %v2097, %v2117
  %v2134 = vadd.f32 %v2098, %v2118
  %v2135 = vadd.f32 %v2099, %v2119
  %v2136 = vadd.f32 %v2100, %v2116
  %v2137 = vadd.f32 %v2101, %v2117
  %v2138 = vadd.f32 %v2102, %v2118
  %v2139 = vadd.f32 %v2103, %v2119
  %v2140 = vadd.f32 %v2104, %v2116
  %v2141 = vadd.f32 %v2105, %v2117
  %v2142 = vadd.f32 %v2106, %v2118
  %v2143 = vadd.f32 %v2107, %v2119
  %v2144 = vadd.f32 %v2108, %v2116
  %v2145 = vadd.f32 %v2109, %v2117
  %v2146 = vadd.f32 %v2110, %v2118
  %v2147 = vadd.f32 %v2111, %v2119
  %v2148 = vadd.f32 %v2112, %v2116
  %v2149 = vadd.f32 %v2113, %v2117
  %v2150 = vadd.f32 %v2114, %v2118
  %v2151 = vadd.f32 %v2115, %v2119
  %v2152 = vmax.f32 %v2120, 0.0
  %v2153 = vmax.f32 %v2121, 0.0
  %v2154 = vmax.f32 %v2122, 0.0
  %v2155 = vmax.f32 %v2123, 0.0
  %v2156 = vmax.f32 %v2124, 0.0
  %v2157 = vmax.f32 %v2125, 0.0
  %v2158 = vmax.f32 %v2126, 0.0
  %v2159 = vmax.f32 %v2127, 0.0
  %v2160 = vmax.f32 %v2128, 0.0
  %v2161 = vmax.f32 %v2129, 0.0
  %v2162 = vmax.f32 %v2130, 0.0
  %v2163 = vmax.f32 %v2131, 0.0
  %v2164 = vmax.f32 %v2132, 0.0
  %v2165 = vmax.f32 %v2133, 0.0
  %v2166 = vmax.f32 %v2134, 0.0
  %v2167 = vmax.f32 %v2135, 0.0
  %v2168 = vmax.f32 %v2136, 0.0
  %v2169 = vmax.f32 %v2137, 0.0
  %v2170 = vmax.f32 %v2138, 0.0
  %v2171 = vmax.f32 %v2139, 0.0
  %v2172 = vmax.f32 %v2140, 0.0
  %v2173 = vmax.f32 %v2141, 0.0
  %v2174 = vmax.f32 %v2142, 0.0
  %v2175 = vmax.f32 %v2143, 0.0
  %v2176 = vmax.f32 %v2144, 0.0
  %v2177 = vmax.f32 %v2145, 0.0
  %v2178 = vmax.f32 %v2146, 0.0
  %v2179 = vmax.f32 %v2147, 0.0
  %v2180 = vmax.f32 %v2148, 0.0
  %v2181 = vmax.f32 %v2149, 0.0
  %v2182 = vmax.f32 %v2150, 0.0
  %v2183 = vmax.f32 %v2151, 0.0
  %s2184 = sshll.u32 %s605, 4
  %2185 = dma.done %s34, %s2184
  %v2186 = vpack.c.bf16 %v2156, %v2152
  %v2187 = vpack.c.bf16 %v2157, %v2153
  %v2188 = vpack.c.bf16 %v2158, %v2154
  %v2189 = vpack.c.bf16 %v2159, %v2155
  %v2190 = vpack.c.bf16 %v2164, %v2160
  %v2191 = vpack.c.bf16 %v2165, %v2161
  %v2192 = vpack.c.bf16 %v2166, %v2162
  %v2193 = vpack.c.bf16 %v2167, %v2163
  %v2194 = vpack.c.bf16 %v2172, %v2168
  %v2195 = vpack.c.bf16 %v2173, %v2169
  %v2196 = vpack.c.bf16 %v2174, %v2170
  %v2197 = vpack.c.bf16 %v2175, %v2171
  %v2198 = vpack.c.bf16 %v2180, %v2176
  %v2199 = vpack.c.bf16 %v2181, %v2177
  %v2200 = vpack.c.bf16 %v2182, %v2178
  %v2201 = vpack.c.bf16 %v2183, %v2179
  %v2202 = vld [vmem:[#allocation3] sm:$0xff]
  %v2203 = vld [vmem:[#allocation3 + $0x8] sm:$0xff]
  %v2204 = vld [vmem:[#allocation3 + $0x10] sm:$0xff]
  %v2205 = vld [vmem:[#allocation3 + $0x18] sm:$0xff]
  %v2206 = vld [vmem:[#allocation3 + $0x20] sm:$0xff]
  %v2207 = vld [vmem:[#allocation3 + $0x28] sm:$0xff]
  %v2208 = vld [vmem:[#allocation3 + $0x30] sm:$0xff]
  %v2209 = vld [vmem:[#allocation3 + $0x38] sm:$0xff]
  %v2210 = vld [vmem:[#allocation3 + $0x40] sm:$0xff]
  %v2211 = vld [vmem:[#allocation3 + $0x48] sm:$0xff]
  %v2212 = vld [vmem:[#allocation3 + $0x50] sm:$0xff]
  %v2213 = vld [vmem:[#allocation3 + $0x58] sm:$0xff]
  %v2214 = vld [vmem:[#allocation3 + $0x60] sm:$0xff]
  %v2215 = vld [vmem:[#allocation3 + $0x68] sm:$0xff]
  %v2216 = vld [vmem:[#allocation3 + $0x70] sm:$0xff]
  %v2217 = vld [vmem:[#allocation3 + $0x78] sm:$0xff]
  %v2218 = vld [vmem:[#allocation3 + $0x80] sm:$0xff]
  %v2219 = vld [vmem:[#allocation3 + $0x88] sm:$0xff]
  %v2220 = vld [vmem:[#allocation3 + $0x90] sm:$0xff]
  %v2221 = vld [vmem:[#allocation3 + $0x98] sm:$0xff]
  %v2222 = vld [vmem:[#allocation3 + $0xa0] sm:$0xff]
  %v2223 = vld [vmem:[#allocation3 + $0xa8] sm:$0xff]
  %v2224 = vld [vmem:[#allocation3 + $0xb0] sm:$0xff]
  %v2225 = vld [vmem:[#allocation3 + $0xb8] sm:$0xff]
  %v2226 = vld [vmem:[#allocation3 + $0xc0] sm:$0xff]
  %v2227 = vld [vmem:[#allocation3 + $0xc8] sm:$0xff]
  %v2228 = vld [vmem:[#allocation3 + $0xd0] sm:$0xff]
  %v2229 = vld [vmem:[#allocation3 + $0xd8] sm:$0xff]
  %v2230 = vld [vmem:[#allocation3 + $0xe0] sm:$0xff]
  %v2231 = vld [vmem:[#allocation3 + $0xe8] sm:$0xff]
  %v2232 = vld [vmem:[#allocation3 + $0xf0] sm:$0xff]
  %v2233 = vld [vmem:[#allocation3 + $0xf8] sm:$0xff]
  %v2234 = vld [vmem:[#allocation3 + $0x100] sm:$0xff]
  %v2235 = vld [vmem:[#allocation3 + $0x108] sm:$0xff]
  %v2236 = vld [vmem:[#allocation3 + $0x110] sm:$0xff]
  %v2237 = vld [vmem:[#allocation3 + $0x118] sm:$0xff]
  %v2238 = vld [vmem:[#allocation3 + $0x120] sm:$0xff]
  %v2239 = vld [vmem:[#allocation3 + $0x128] sm:$0xff]
  %v2240 = vld [vmem:[#allocation3 + $0x130] sm:$0xff]
  %v2241 = vld [vmem:[#allocation3 + $0x138] sm:$0xff]
  %v2242 = vld [vmem:[#allocation3 + $0x140] sm:$0xff]
  %v2243 = vld [vmem:[#allocation3 + $0x148] sm:$0xff]
  %v2244 = vld [vmem:[#allocation3 + $0x150] sm:$0xff]
  %v2245 = vld [vmem:[#allocation3 + $0x158] sm:$0xff]
  %v2246 = vld [vmem:[#allocation3 + $0x160] sm:$0xff]
  %v2247 = vld [vmem:[#allocation3 + $0x168] sm:$0xff]
  %v2248 = vld [vmem:[#allocation3 + $0x170] sm:$0xff]
  %v2249 = vld [vmem:[#allocation3 + $0x178] sm:$0xff]
  %v2250 = vld [vmem:[#allocation3 + $0x180] sm:$0xff]
  %v2251 = vld [vmem:[#allocation3 + $0x188] sm:$0xff]
  %v2252 = vld [vmem:[#allocation3 + $0x190] sm:$0xff]
  %v2253 = vld [vmem:[#allocation3 + $0x198] sm:$0xff]
  %v2254 = vld [vmem:[#allocation3 + $0x1a0] sm:$0xff]
  %v2255 = vld [vmem:[#allocation3 + $0x1a8] sm:$0xff]
  %v2256 = vld [vmem:[#allocation3 + $0x1b0] sm:$0xff]
  %v2257 = vld [vmem:[#allocation3 + $0x1b8] sm:$0xff]
  %v2258 = vld [vmem:[#allocation3 + $0x1c0] sm:$0xff]
  %v2259 = vld [vmem:[#allocation3 + $0x1c8] sm:$0xff]
  %v2260 = vld [vmem:[#allocation3 + $0x1d0] sm:$0xff]
  %v2261 = vld [vmem:[#allocation3 + $0x1d8] sm:$0xff]
  %v2262 = vld [vmem:[#allocation3 + $0x1e0] sm:$0xff]
  %v2263 = vld [vmem:[#allocation3 + $0x1e8] sm:$0xff]
  %v2264 = vld [vmem:[#allocation3 + $0x1f0] sm:$0xff]
  %v2265 = vld [vmem:[#allocation3 + $0x1f8] sm:$0xff]
  %v2266 = vld [vmem:[#allocation3 + $0x200] sm:$0xff]
  %v2267 = vld [vmem:[#allocation3 + $0x208] sm:$0xff]
  %v2268 = vld [vmem:[#allocation3 + $0x210] sm:$0xff]
  %v2269 = vld [vmem:[#allocation3 + $0x218] sm:$0xff]
  %v2270 = vld [vmem:[#allocation3 + $0x220] sm:$0xff]
  %v2271 = vld [vmem:[#allocation3 + $0x228] sm:$0xff]
  %v2272 = vld [vmem:[#allocation3 + $0x230] sm:$0xff]
  %v2273 = vld [vmem:[#allocation3 + $0x238] sm:$0xff]
  %v2274 = vld [vmem:[#allocation3 + $0x240] sm:$0xff]
  %v2275 = vld [vmem:[#allocation3 + $0x248] sm:$0xff]
  %v2276 = vld [vmem:[#allocation3 + $0x250] sm:$0xff]
  %v2277 = vld [vmem:[#allocation3 + $0x258] sm:$0xff]
  %v2278 = vld [vmem:[#allocation3 + $0x260] sm:$0xff]
  %v2279 = vld [vmem:[#allocation3 + $0x268] sm:$0xff]
  %v2280 = vld [vmem:[#allocation3 + $0x270] sm:$0xff]
  %v2281 = vld [vmem:[#allocation3 + $0x278] sm:$0xff]
  %v2282 = vld [vmem:[#allocation3 + $0x280] sm:$0xff]
  %v2283 = vld [vmem:[#allocation3 + $0x288] sm:$0xff]
  %v2284 = vld [vmem:[#allocation3 + $0x290] sm:$0xff]
  %v2285 = vld [vmem:[#allocation3 + $0x298] sm:$0xff]
  %v2286 = vld [vmem:[#allocation3 + $0x2a0] sm:$0xff]
  %v2287 = vld [vmem:[#allocation3 + $0x2a8] sm:$0xff]
  %v2288 = vld [vmem:[#allocation3 + $0x2b0] sm:$0xff]
  %v2289 = vld [vmem:[#allocation3 + $0x2b8] sm:$0xff]
  %v2290 = vld [vmem:[#allocation3 + $0x2c0] sm:$0xff]
  %v2291 = vld [vmem:[#allocation3 + $0x2c8] sm:$0xff]
  %v2292 = vld [vmem:[#allocation3 + $0x2d0] sm:$0xff]
  %v2293 = vld [vmem:[#allocation3 + $0x2d8] sm:$0xff]
  %v2294 = vld [vmem:[#allocation3 + $0x2e0] sm:$0xff]
  %v2295 = vld [vmem:[#allocation3 + $0x2e8] sm:$0xff]
  %v2296 = vld [vmem:[#allocation3 + $0x2f0] sm:$0xff]
  %v2297 = vld [vmem:[#allocation3 + $0x2f8] sm:$0xff]
  %v2298 = vld [vmem:[#allocation3 + $0x300] sm:$0xff]
  %v2299 = vld [vmem:[#allocation3 + $0x308] sm:$0xff]
  %v2300 = vld [vmem:[#allocation3 + $0x310] sm:$0xff]
  %v2301 = vld [vmem:[#allocation3 + $0x318] sm:$0xff]
  %v2302 = vld [vmem:[#allocation3 + $0x320] sm:$0xff]
  %v2303 = vld [vmem:[#allocation3 + $0x328] sm:$0xff]
  %v2304 = vld [vmem:[#allocation3 + $0x330] sm:$0xff]
  %v2305 = vld [vmem:[#allocation3 + $0x338] sm:$0xff]
  %v2306 = vld [vmem:[#allocation3 + $0x340] sm:$0xff]
  %v2307 = vld [vmem:[#allocation3 + $0x348] sm:$0xff]
  %v2308 = vld [vmem:[#allocation3 + $0x350] sm:$0xff]
  %v2309 = vld [vmem:[#allocation3 + $0x358] sm:$0xff]
  %v2310 = vld [vmem:[#allocation3 + $0x360] sm:$0xff]
  %v2311 = vld [vmem:[#allocation3 + $0x368] sm:$0xff]
  %v2312 = vld [vmem:[#allocation3 + $0x370] sm:$0xff]
  %v2313 = vld [vmem:[#allocation3 + $0x378] sm:$0xff]
  %v2314 = vld [vmem:[#allocation3 + $0x380] sm:$0xff]
  %v2315 = vld [vmem:[#allocation3 + $0x388] sm:$0xff]
  %v2316 = vld [vmem:[#allocation3 + $0x390] sm:$0xff]
  %v2317 = vld [vmem:[#allocation3 + $0x398] sm:$0xff]
  %v2318 = vld [vmem:[#allocation3 + $0x3a0] sm:$0xff]
  %v2319 = vld [vmem:[#allocation3 + $0x3a8] sm:$0xff]
  %v2320 = vld [vmem:[#allocation3 + $0x3b0] sm:$0xff]
  %v2321 = vld [vmem:[#allocation3 + $0x3b8] sm:$0xff]
  %v2322 = vld [vmem:[#allocation3 + $0x3c0] sm:$0xff]
  %v2323 = vld [vmem:[#allocation3 + $0x3c8] sm:$0xff]
  %v2324 = vld [vmem:[#allocation3 + $0x3d0] sm:$0xff]
  %v2325 = vld [vmem:[#allocation3 + $0x3d8] sm:$0xff]
  %v2326 = vld [vmem:[#allocation3 + $0x3e0] sm:$0xff]
  %v2327 = vld [vmem:[#allocation3 + $0x3e8] sm:$0xff]
  %v2328 = vld [vmem:[#allocation3 + $0x3f0] sm:$0xff]
  %v2329 = vld [vmem:[#allocation3 + $0x3f8] sm:$0xff]
  %v2330 = vperm.slane %v62, 6
  %v2331 = vperm.slane %v63, 6
  %v2332 = vperm.slane %v64, 6
  %v2333 = vperm.slane %v65, 6
  %v2462 = vunpack.c.l.b16 %v2202
  %v2463 = vunpack.c.h.b16 %v2202
  %v2464 = vunpack.c.l.b16 %v2203
  %v2465 = vunpack.c.h.b16 %v2203
  %v2466 = vunpack.c.l.b16 %v2204
  %v2467 = vunpack.c.h.b16 %v2204
  %v2468 = vunpack.c.l.b16 %v2205
  %v2469 = vunpack.c.h.b16 %v2205
  %v2470 = vunpack.c.l.b16 %v2206
  %v2471 = vunpack.c.h.b16 %v2206
  %v2472 = vunpack.c.l.b16 %v2207
  %v2473 = vunpack.c.h.b16 %v2207
  %v2474 = vunpack.c.l.b16 %v2208
  %v2475 = vunpack.c.h.b16 %v2208
  %v2476 = vunpack.c.l.b16 %v2209
  %v2477 = vunpack.c.h.b16 %v2209
  %v2478 = vunpack.c.l.b16 %v2210
  %v2479 = vunpack.c.h.b16 %v2210
  %v2480 = vunpack.c.l.b16 %v2211
  %v2481 = vunpack.c.h.b16 %v2211
  %v2482 = vunpack.c.l.b16 %v2212
  %v2483 = vunpack.c.h.b16 %v2212
  %v2484 = vunpack.c.l.b16 %v2213
  %v2485 = vunpack.c.h.b16 %v2213
  %v2486 = vunpack.c.l.b16 %v2214
  %v2487 = vunpack.c.h.b16 %v2214
  %v2488 = vunpack.c.l.b16 %v2215
  %v2489 = vunpack.c.h.b16 %v2215
  %v2490 = vunpack.c.l.b16 %v2216
  %v2491 = vunpack.c.h.b16 %v2216
  %v2492 = vunpack.c.l.b16 %v2217
  %v2493 = vunpack.c.h.b16 %v2217
  %v2494 = vunpack.c.l.b16 %v2218
  %v2495 = vunpack.c.h.b16 %v2218
  %v2496 = vunpack.c.l.b16 %v2219
  %v2497 = vunpack.c.h.b16 %v2219
  %v2498 = vunpack.c.l.b16 %v2220
  %v2499 = vunpack.c.h.b16 %v2220
  %v2500 = vunpack.c.l.b16 %v2221
  %v2501 = vunpack.c.h.b16 %v2221
  %v2502 = vunpack.c.l.b16 %v2222
  %v2503 = vunpack.c.h.b16 %v2222
  %v2504 = vunpack.c.l.b16 %v2223
  %v2505 = vunpack.c.h.b16 %v2223
  %v2506 = vunpack.c.l.b16 %v2224
  %v2507 = vunpack.c.h.b16 %v2224
  %v2508 = vunpack.c.l.b16 %v2225
  %v2509 = vunpack.c.h.b16 %v2225
  %v2510 = vunpack.c.l.b16 %v2226
  %v2511 = vunpack.c.h.b16 %v2226
  %v2512 = vunpack.c.l.b16 %v2227
  %v2513 = vunpack.c.h.b16 %v2227
  %v2514 = vunpack.c.l.b16 %v2228
  %v2515 = vunpack.c.h.b16 %v2228
  %v2516 = vunpack.c.l.b16 %v2229
  %v2517 = vunpack.c.h.b16 %v2229
  %v2518 = vunpack.c.l.b16 %v2230
  %v2519 = vunpack.c.h.b16 %v2230
  %v2520 = vunpack.c.l.b16 %v2231
  %v2521 = vunpack.c.h.b16 %v2231
  %v2522 = vunpack.c.l.b16 %v2232
  %v2523 = vunpack.c.h.b16 %v2232
  %v2524 = vunpack.c.l.b16 %v2233
  %v2525 = vunpack.c.h.b16 %v2233
  %v2526 = vunpack.c.l.b16 %v2234
  %v2527 = vunpack.c.h.b16 %v2234
  %v2528 = vunpack.c.l.b16 %v2235
  %v2529 = vunpack.c.h.b16 %v2235
  %v2530 = vunpack.c.l.b16 %v2236
  %v2531 = vunpack.c.h.b16 %v2236
  %v2532 = vunpack.c.l.b16 %v2237
  %v2533 = vunpack.c.h.b16 %v2237
  %v2534 = vunpack.c.l.b16 %v2238
  %v2535 = vunpack.c.h.b16 %v2238
  %v2536 = vunpack.c.l.b16 %v2239
  %v2537 = vunpack.c.h.b16 %v2239
  %v2538 = vunpack.c.l.b16 %v2240
  %v2539 = vunpack.c.h.b16 %v2240
  %v2540 = vunpack.c.l.b16 %v2241
  %v2541 = vunpack.c.h.b16 %v2241
  %v2542 = vunpack.c.l.b16 %v2242
  %v2543 = vunpack.c.h.b16 %v2242
  %v2544 = vunpack.c.l.b16 %v2243
  %v2545 = vunpack.c.h.b16 %v2243
  %v2546 = vunpack.c.l.b16 %v2244
  %v2547 = vunpack.c.h.b16 %v2244
  %v2548 = vunpack.c.l.b16 %v2245
  %v2549 = vunpack.c.h.b16 %v2245
  %v2550 = vunpack.c.l.b16 %v2246
  %v2551 = vunpack.c.h.b16 %v2246
  %v2552 = vunpack.c.l.b16 %v2247
  %v2553 = vunpack.c.h.b16 %v2247
  %v2554 = vunpack.c.l.b16 %v2248
  %v2555 = vunpack.c.h.b16 %v2248
  %v2556 = vunpack.c.l.b16 %v2249
  %v2557 = vunpack.c.h.b16 %v2249
  %v2558 = vunpack.c.l.b16 %v2250
  %v2559 = vunpack.c.h.b16 %v2250
  %v2560 = vunpack.c.l.b16 %v2251
  %v2561 = vunpack.c.h.b16 %v2251
  %v2562 = vunpack.c.l.b16 %v2252
  %v2563 = vunpack.c.h.b16 %v2252
  %v2564 = vunpack.c.l.b16 %v2253
  %v2565 = vunpack.c.h.b16 %v2253
  %v2566 = vunpack.c.l.b16 %v2254
  %v2567 = vunpack.c.h.b16 %v2254
  %v2568 = vunpack.c.l.b16 %v2255
  %v2569 = vunpack.c.h.b16 %v2255
  %v2570 = vunpack.c.l.b16 %v2256
  %v2571 = vunpack.c.h.b16 %v2256
  %v2572 = vunpack.c.l.b16 %v2257
  %v2573 = vunpack.c.h.b16 %v2257
  %v2574 = vunpack.c.l.b16 %v2258
  %v2575 = vunpack.c.h.b16 %v2258
  %v2576 = vunpack.c.l.b16 %v2259
  %v2577 = vunpack.c.h.b16 %v2259
  %v2578 = vunpack.c.l.b16 %v2260
  %v2579 = vunpack.c.h.b16 %v2260
  %v2580 = vunpack.c.l.b16 %v2261
  %v2581 = vunpack.c.h.b16 %v2261
  %v2582 = vunpack.c.l.b16 %v2262
  %v2583 = vunpack.c.h.b16 %v2262
  %v2584 = vunpack.c.l.b16 %v2263
  %v2585 = vunpack.c.h.b16 %v2263
  %v2586 = vunpack.c.l.b16 %v2264
  %v2587 = vunpack.c.h.b16 %v2264
  %v2588 = vunpack.c.l.b16 %v2265
  %v2589 = vunpack.c.h.b16 %v2265
  %v2590 = vunpack.c.l.b16 %v2266
  %v2591 = vunpack.c.h.b16 %v2266
  %v2592 = vunpack.c.l.b16 %v2267
  %v2593 = vunpack.c.h.b16 %v2267
  %v2594 = vunpack.c.l.b16 %v2268
  %v2595 = vunpack.c.h.b16 %v2268
  %v2596 = vunpack.c.l.b16 %v2269
  %v2597 = vunpack.c.h.b16 %v2269
  %v2598 = vunpack.c.l.b16 %v2270
  %v2599 = vunpack.c.h.b16 %v2270
  %v2600 = vunpack.c.l.b16 %v2271
  %v2601 = vunpack.c.h.b16 %v2271
  %v2602 = vunpack.c.l.b16 %v2272
  %v2603 = vunpack.c.h.b16 %v2272
  %v2604 = vunpack.c.l.b16 %v2273
  %v2605 = vunpack.c.h.b16 %v2273
  %v2606 = vunpack.c.l.b16 %v2274
  %v2607 = vunpack.c.h.b16 %v2274
  %v2608 = vunpack.c.l.b16 %v2275
  %v2609 = vunpack.c.h.b16 %v2275
  %v2610 = vunpack.c.l.b16 %v2276
  %v2611 = vunpack.c.h.b16 %v2276
  %v2612 = vunpack.c.l.b16 %v2277
  %v2613 = vunpack.c.h.b16 %v2277
  %v2614 = vunpack.c.l.b16 %v2278
  %v2615 = vunpack.c.h.b16 %v2278
  %v2616 = vunpack.c.l.b16 %v2279
  %v2617 = vunpack.c.h.b16 %v2279
  %v2618 = vunpack.c.l.b16 %v2280
  %v2619 = vunpack.c.h.b16 %v2280
  %v2620 = vunpack.c.l.b16 %v2281
  %v2621 = vunpack.c.h.b16 %v2281
  %v2622 = vunpack.c.l.b16 %v2282
  %v2623 = vunpack.c.h.b16 %v2282
  %v2624 = vunpack.c.l.b16 %v2283
  %v2625 = vunpack.c.h.b16 %v2283
  %v2626 = vunpack.c.l.b16 %v2284
  %v2627 = vunpack.c.h.b16 %v2284
  %v2628 = vunpack.c.l.b16 %v2285
  %v2629 = vunpack.c.h.b16 %v2285
  %v2630 = vunpack.c.l.b16 %v2286
  %v2631 = vunpack.c.h.b16 %v2286
  %v2632 = vunpack.c.l.b16 %v2287
  %v2633 = vunpack.c.h.b16 %v2287
  %v2634 = vunpack.c.l.b16 %v2288
  %v2635 = vunpack.c.h.b16 %v2288
  %v2636 = vunpack.c.l.b16 %v2289
  %v2637 = vunpack.c.h.b16 %v2289
  %v2638 = vunpack.c.l.b16 %v2290
  %v2639 = vunpack.c.h.b16 %v2290
  %v2640 = vunpack.c.l.b16 %v2291
  %v2641 = vunpack.c.h.b16 %v2291
  %v2642 = vunpack.c.l.b16 %v2292
  %v2643 = vunpack.c.h.b16 %v2292
  %v2644 = vunpack.c.l.b16 %v2293
  %v2645 = vunpack.c.h.b16 %v2293
  %v2646 = vunpack.c.l.b16 %v2294
  %v2647 = vunpack.c.h.b16 %v2294
  %v2648 = vunpack.c.l.b16 %v2295
  %v2649 = vunpack.c.h.b16 %v2295
  %v2650 = vunpack.c.l.b16 %v2296
  %v2651 = vunpack.c.h.b16 %v2296
  %v2652 = vunpack.c.l.b16 %v2297
  %v2653 = vunpack.c.h.b16 %v2297
  %v2654 = vunpack.c.l.b16 %v2298
  %v2655 = vunpack.c.h.b16 %v2298
  %v2656 = vunpack.c.l.b16 %v2299
  %v2657 = vunpack.c.h.b16 %v2299
  %v2658 = vunpack.c.l.b16 %v2300
  %v2659 = vunpack.c.h.b16 %v2300
  %v2660 = vunpack.c.l.b16 %v2301
  %v2661 = vunpack.c.h.b16 %v2301
  %v2662 = vunpack.c.l.b16 %v2302
  %v2663 = vunpack.c.h.b16 %v2302
  %v2664 = vunpack.c.l.b16 %v2303
  %v2665 = vunpack.c.h.b16 %v2303
  %v2666 = vunpack.c.l.b16 %v2304
  %v2667 = vunpack.c.h.b16 %v2304
  %v2668 = vunpack.c.l.b16 %v2305
  %v2669 = vunpack.c.h.b16 %v2305
  %v2670 = vunpack.c.l.b16 %v2306
  %v2671 = vunpack.c.h.b16 %v2306
  %v2672 = vunpack.c.l.b16 %v2307
  %v2673 = vunpack.c.h.b16 %v2307
  %v2674 = vunpack.c.l.b16 %v2308
  %v2675 = vunpack.c.h.b16 %v2308
  %v2676 = vunpack.c.l.b16 %v2309
  %v2677 = vunpack.c.h.b16 %v2309
  %v2678 = vunpack.c.l.b16 %v2310
  %v2679 = vunpack.c.h.b16 %v2310
  %v2680 = vunpack.c.l.b16 %v2311
  %v2681 = vunpack.c.h.b16 %v2311
  %v2682 = vunpack.c.l.b16 %v2312
  %v2683 = vunpack.c.h.b16 %v2312
  %v2684 = vunpack.c.l.b16 %v2313
  %v2685 = vunpack.c.h.b16 %v2313
  %v2686 = vunpack.c.l.b16 %v2314
  %v2687 = vunpack.c.h.b16 %v2314
  %v2688 = vunpack.c.l.b16 %v2315
  %v2689 = vunpack.c.h.b16 %v2315
  %v2690 = vunpack.c.l.b16 %v2316
  %v2691 = vunpack.c.h.b16 %v2316
  %v2692 = vunpack.c.l.b16 %v2317
  %v2693 = vunpack.c.h.b16 %v2317
  %v2694 = vunpack.c.l.b16 %v2318
  %v2695 = vunpack.c.h.b16 %v2318
  %v2696 = vunpack.c.l.b16 %v2319
  %v2697 = vunpack.c.h.b16 %v2319
  %v2698 = vunpack.c.l.b16 %v2320
  %v2699 = vunpack.c.h.b16 %v2320
  %v2700 = vunpack.c.l.b16 %v2321
  %v2701 = vunpack.c.h.b16 %v2321
  %v2702 = vunpack.c.l.b16 %v2322
  %v2703 = vunpack.c.h.b16 %v2322
  %v2704 = vunpack.c.l.b16 %v2323
  %v2705 = vunpack.c.h.b16 %v2323
  %v2706 = vunpack.c.l.b16 %v2324
  %v2707 = vunpack.c.h.b16 %v2324
  %v2708 = vunpack.c.l.b16 %v2325
  %v2709 = vunpack.c.h.b16 %v2325
  %v2710 = vunpack.c.l.b16 %v2326
  %v2711 = vunpack.c.h.b16 %v2326
  %v2712 = vunpack.c.l.b16 %v2327
  %v2713 = vunpack.c.h.b16 %v2327
  %v2714 = vunpack.c.l.b16 %v2328
  %v2715 = vunpack.c.h.b16 %v2328
  %v2716 = vunpack.c.l.b16 %v2329
  %v2717 = vunpack.c.h.b16 %v2329
  %v2718 = vpack.c.b16 %v2466, %v2462
  %v2719 = vpack.c.b16 %v2467, %v2463
  %v2720 = vpack.c.b16 %v2468, %v2464
  %v2721 = vpack.c.b16 %v2469, %v2465
  %v2722 = vpack.c.b16 %v2474, %v2470
  %v2723 = vpack.c.b16 %v2475, %v2471
  %v2724 = vpack.c.b16 %v2476, %v2472
  %v2725 = vpack.c.b16 %v2477, %v2473
  %v2726 = vpack.c.b16 %v2482, %v2478
  %v2727 = vpack.c.b16 %v2483, %v2479
  %v2728 = vpack.c.b16 %v2484, %v2480
  %v2729 = vpack.c.b16 %v2485, %v2481
  %v2730 = vpack.c.b16 %v2490, %v2486
  %v2731 = vpack.c.b16 %v2491, %v2487
  %v2732 = vpack.c.b16 %v2492, %v2488
  %v2733 = vpack.c.b16 %v2493, %v2489
  %v2734 = vpack.c.b16 %v2498, %v2494
  %v2735 = vpack.c.b16 %v2499, %v2495
  %v2736 = vpack.c.b16 %v2500, %v2496
  %v2737 = vpack.c.b16 %v2501, %v2497
  %v2738 = vpack.c.b16 %v2506, %v2502
  %v2739 = vpack.c.b16 %v2507, %v2503
  %v2740 = vpack.c.b16 %v2508, %v2504
  %v2741 = vpack.c.b16 %v2509, %v2505
  %v2742 = vpack.c.b16 %v2514, %v2510
  %v2743 = vpack.c.b16 %v2515, %v2511
  %v2744 = vpack.c.b16 %v2516, %v2512
  %v2745 = vpack.c.b16 %v2517, %v2513
  %v2746 = vpack.c.b16 %v2522, %v2518
  %v2747 = vpack.c.b16 %v2523, %v2519
  %v2748 = vpack.c.b16 %v2524, %v2520
  %v2749 = vpack.c.b16 %v2525, %v2521
  %v2750 = vpack.c.b16 %v2530, %v2526
  %v2751 = vpack.c.b16 %v2531, %v2527
  %v2752 = vpack.c.b16 %v2532, %v2528
  %v2753 = vpack.c.b16 %v2533, %v2529
  %v2754 = vpack.c.b16 %v2538, %v2534
  %v2755 = vpack.c.b16 %v2539, %v2535
  %v2756 = vpack.c.b16 %v2540, %v2536
  %v2757 = vpack.c.b16 %v2541, %v2537
  %v2758 = vpack.c.b16 %v2546, %v2542
  %v2759 = vpack.c.b16 %v2547, %v2543
  %v2760 = vpack.c.b16 %v2548, %v2544
  %v2761 = vpack.c.b16 %v2549, %v2545
  %v2762 = vpack.c.b16 %v2554, %v2550
  %v2763 = vpack.c.b16 %v2555, %v2551
  %v2764 = vpack.c.b16 %v2556, %v2552
  %v2765 = vpack.c.b16 %v2557, %v2553
  %v2766 = vpack.c.b16 %v2562, %v2558
  %v2767 = vpack.c.b16 %v2563, %v2559
  %v2768 = vpack.c.b16 %v2564, %v2560
  %v2769 = vpack.c.b16 %v2565, %v2561
  %v2770 = vpack.c.b16 %v2570, %v2566
  %v2771 = vpack.c.b16 %v2571, %v2567
  %v2772 = vpack.c.b16 %v2572, %v2568
  %v2773 = vpack.c.b16 %v2573, %v2569
  %v2774 = vpack.c.b16 %v2578, %v2574
  %v2775 = vpack.c.b16 %v2579, %v2575
  %v2776 = vpack.c.b16 %v2580, %v2576
  %v2777 = vpack.c.b16 %v2581, %v2577
  %v2778 = vpack.c.b16 %v2586, %v2582
  %v2779 = vpack.c.b16 %v2587, %v2583
  %v2780 = vpack.c.b16 %v2588, %v2584
  %v2781 = vpack.c.b16 %v2589, %v2585
  %v2782 = vpack.c.b16 %v2594, %v2590
  %v2783 = vpack.c.b16 %v2595, %v2591
  %v2784 = vpack.c.b16 %v2596, %v2592
  %v2785 = vpack.c.b16 %v2597, %v2593
  %v2786 = vpack.c.b16 %v2602, %v2598
  %v2787 = vpack.c.b16 %v2603, %v2599
  %v2788 = vpack.c.b16 %v2604, %v2600
  %v2789 = vpack.c.b16 %v2605, %v2601
  %v2790 = vpack.c.b16 %v2610, %v2606
  %v2791 = vpack.c.b16 %v2611, %v2607
  %v2792 = vpack.c.b16 %v2612, %v2608
  %v2793 = vpack.c.b16 %v2613, %v2609
  %v2794 = vpack.c.b16 %v2618, %v2614
  %v2795 = vpack.c.b16 %v2619, %v2615
  %v2796 = vpack.c.b16 %v2620, %v2616
  %v2797 = vpack.c.b16 %v2621, %v2617
  %v2798 = vpack.c.b16 %v2626, %v2622
  %v2799 = vpack.c.b16 %v2627, %v2623
  %v2800 = vpack.c.b16 %v2628, %v2624
  %v2801 = vpack.c.b16 %v2629, %v2625
  %v2802 = vpack.c.b16 %v2634, %v2630
  %v2803 = vpack.c.b16 %v2635, %v2631
  %v2804 = vpack.c.b16 %v2636, %v2632
  %v2805 = vpack.c.b16 %v2637, %v2633
  %v2806 = vpack.c.b16 %v2642, %v2638
  %v2807 = vpack.c.b16 %v2643, %v2639
  %v2808 = vpack.c.b16 %v2644, %v2640
  %v2809 = vpack.c.b16 %v2645, %v2641
  %v2810 = vpack.c.b16 %v2650, %v2646
  %v2811 = vpack.c.b16 %v2651, %v2647
  %v2812 = vpack.c.b16 %v2652, %v2648
  %v2813 = vpack.c.b16 %v2653, %v2649
  %v2814 = vpack.c.b16 %v2658, %v2654
  %v2815 = vpack.c.b16 %v2659, %v2655
  %v2816 = vpack.c.b16 %v2660, %v2656
  %v2817 = vpack.c.b16 %v2661, %v2657
  %v2818 = vpack.c.b16 %v2666, %v2662
  %v2819 = vpack.c.b16 %v2667, %v2663
  %v2820 = vpack.c.b16 %v2668, %v2664
  %v2821 = vpack.c.b16 %v2669, %v2665
  %v2822 = vpack.c.b16 %v2674, %v2670
  %v2823 = vpack.c.b16 %v2675, %v2671
  %v2824 = vpack.c.b16 %v2676, %v2672
  %v2825 = vpack.c.b16 %v2677, %v2673
  %v2826 = vpack.c.b16 %v2682, %v2678
  %v2827 = vpack.c.b16 %v2683, %v2679
  %v2828 = vpack.c.b16 %v2684, %v2680
  %v2829 = vpack.c.b16 %v2685, %v2681
  %v2830 = vpack.c.b16 %v2690, %v2686
  %v2831 = vpack.c.b16 %v2691, %v2687
  %v2832 = vpack.c.b16 %v2692, %v2688
  %v2833 = vpack.c.b16 %v2693, %v2689
  %v2834 = vpack.c.b16 %v2698, %v2694
  %v2835 = vpack.c.b16 %v2699, %v2695
  %v2836 = vpack.c.b16 %v2700, %v2696
  %v2837 = vpack.c.b16 %v2701, %v2697
  %v2838 = vpack.c.b16 %v2706, %v2702
  %v2839 = vpack.c.b16 %v2707, %v2703
  %v2840 = vpack.c.b16 %v2708, %v2704
  %v2841 = vpack.c.b16 %v2709, %v2705
  %v2842 = vpack.c.b16 %v2714, %v2710
  %v2843 = vpack.c.b16 %v2715, %v2711
  %v2844 = vpack.c.b16 %v2716, %v2712
  %v2845 = vpack.c.b16 %v2717, %v2713
  %2974 = vmatpush.bf16.msra.mxu0 %v2746
  %2975 = vmatpush.bf16.msra.mxu0 %v2742
  %2976 = vmatpush.bf16.msra.mxu0 %v2738
  %2977 = vmatpush.bf16.msra.mxu0 %v2734
  %2978 = vmatpush.bf16.msra.mxu0 %v2730
  %2979 = vmatpush.bf16.msra.mxu0 %v2726
  %2980 = vmatpush.bf16.msra.mxu0 %v2722
  %2981 = vmatpush.bf16.msra.mxu0 %v2718
  %2982 = vmatmul.bf16.gmra.mxu0 %v2186
  %v2983 = vpop.f32.mrf.mxu0
  %v2984 = vadd.f32 %v2330, %v2983
  %v2985 = vpop.f32.mrf.mxu0
  %v2986 = vadd.f32 %v2330, %v2985
  %2987 = vmatmul.bf16.gmra.mxu0 %v2190
  %v2988 = vpop.f32.mrf.mxu0
  %v2989 = vadd.f32 %v2330, %v2988
  %v2990 = vpop.f32.mrf.mxu0
  %v2991 = vadd.f32 %v2330, %v2990
  %2992 = vmatmul.bf16.gmra.mxu0 %v2194
  %v2993 = vpop.f32.mrf.mxu0
  %v2994 = vadd.f32 %v2330, %v2993
  %v2995 = vpop.f32.mrf.mxu0
  %v2996 = vadd.f32 %v2330, %v2995
  %2997 = vmatmul.bf16.gmra.mxu0 %v2198
  %v2998 = vpop.f32.mrf.mxu0
  %v2999 = vadd.f32 %v2330, %v2998
  %v3000 = vpop.f32.mrf.mxu0
  %v3001 = vadd.f32 %v2330, %v3000
  %3002 = vdwg.mxu0
  %3003 = vmatpush.bf16.msra.mxu0 %v2778
  %3004 = vmatpush.bf16.msra.mxu0 %v2774
  %3005 = vmatpush.bf16.msra.mxu0 %v2770
  %3006 = vmatpush.bf16.msra.mxu0 %v2766
  %3007 = vmatpush.bf16.msra.mxu0 %v2762
  %3008 = vmatpush.bf16.msra.mxu0 %v2758
  %3009 = vmatpush.bf16.msra.mxu0 %v2754
  %3010 = vmatpush.bf16.msra.mxu0 %v2750
  %3011 = vmatmul.bf16.gmra.mxu0 %v2187
  %v3012 = vpop.f32.mrf.mxu0
  %v3013 = vadd.f32 %v2984, %v3012
  %v3014 = vpop.f32.mrf.mxu0
  %v3015 = vadd.f32 %v2986, %v3014
  %3016 = vmatmul.bf16.gmra.mxu0 %v2191
  %v3017 = vpop.f32.mrf.mxu0
  %v3018 = vadd.f32 %v2989, %v3017
  %v3019 = vpop.f32.mrf.mxu0
  %v3020 = vadd.f32 %v2991, %v3019
  %3021 = vmatmul.bf16.gmra.mxu0 %v2195
  %v3022 = vpop.f32.mrf.mxu0
  %v3023 = vadd.f32 %v2994, %v3022
  %v3024 = vpop.f32.mrf.mxu0
  %v3025 = vadd.f32 %v2996, %v3024
  %3026 = vmatmul.bf16.gmra.mxu0 %v2199
  %v3027 = vpop.f32.mrf.mxu0
  %v3028 = vadd.f32 %v2999, %v3027
  %v3029 = vpop.f32.mrf.mxu0
  %v3030 = vadd.f32 %v3001, %v3029
  %3031 = vdwg.mxu0
  %3032 = vmatpush.bf16.msra.mxu0 %v2810
  %3033 = vmatpush.bf16.msra.mxu0 %v2806
  %3034 = vmatpush.bf16.msra.mxu0 %v2802
  %3035 = vmatpush.bf16.msra.mxu0 %v2798
  %3036 = vmatpush.bf16.msra.mxu0 %v2794
  %3037 = vmatpush.bf16.msra.mxu0 %v2790
  %3038 = vmatpush.bf16.msra.mxu0 %v2786
  %3039 = vmatpush.bf16.msra.mxu0 %v2782
  %3040 = vmatmul.bf16.gmra.mxu0 %v2188
  %v3041 = vpop.f32.mrf.mxu0
  %v3042 = vadd.f32 %v3013, %v3041
  %v3043 = vpop.f32.mrf.mxu0
  %v3044 = vadd.f32 %v3015, %v3043
  %3045 = vmatmul.bf16.gmra.mxu0 %v2192
  %v3046 = vpop.f32.mrf.mxu0
  %v3047 = vadd.f32 %v3018, %v3046
  %v3048 = vpop.f32.mrf.mxu0
  %v3049 = vadd.f32 %v3020, %v3048
  %3050 = vmatmul.bf16.gmra.mxu0 %v2196
  %v3051 = vpop.f32.mrf.mxu0
  %v3052 = vadd.f32 %v3023, %v3051
  %v3053 = vpop.f32.mrf.mxu0
  %v3054 = vadd.f32 %v3025, %v3053
  %3055 = vmatmul.bf16.gmra.mxu0 %v2200
  %v3056 = vpop.f32.mrf.mxu0
  %v3057 = vadd.f32 %v3028, %v3056
  %v3058 = vpop.f32.mrf.mxu0
  %v3059 = vadd.f32 %v3030, %v3058
  %3060 = vdwg.mxu0
  %3061 = vmatpush.bf16.msra.mxu0 %v2842
  %3062 = vmatpush.bf16.msra.mxu0 %v2838
  %3063 = vmatpush.bf16.msra.mxu0 %v2834
  %3064 = vmatpush.bf16.msra.mxu0 %v2830
  %3065 = vmatpush.bf16.msra.mxu0 %v2826
  %3066 = vmatpush.bf16.msra.mxu0 %v2822
  %3067 = vmatpush.bf16.msra.mxu0 %v2818
  %3068 = vmatpush.bf16.msra.mxu0 %v2814
  %3069 = vmatmul.bf16.gmra.mxu0 %v2189
  %v3070 = vpop.f32.mrf.mxu0
  %v3071 = vadd.f32 %v3042, %v3070
  %v3072 = vpop.f32.mrf.mxu0
  %v3073 = vadd.f32 %v3044, %v3072
  %3074 = vmatmul.bf16.gmra.mxu0 %v2193
  %v3075 = vpop.f32.mrf.mxu0
  %v3076 = vadd.f32 %v3047, %v3075
  %v3077 = vpop.f32.mrf.mxu0
  %v3078 = vadd.f32 %v3049, %v3077
  %3079 = vmatmul.bf16.gmra.mxu0 %v2197
  %v3080 = vpop.f32.mrf.mxu0
  %v3081 = vadd.f32 %v3052, %v3080
  %v3082 = vpop.f32.mrf.mxu0
  %v3083 = vadd.f32 %v3054, %v3082
  %3084 = vmatmul.bf16.gmra.mxu0 %v2201
  %v3085 = vpop.f32.mrf.mxu0
  %v3086 = vadd.f32 %v3057, %v3085
  %v3087 = vpop.f32.mrf.mxu0
  %v3088 = vadd.f32 %v3059, %v3087
  %3089 = vdwg.mxu0
  %3090 = vmatpush.bf16.msra.mxu0 %v2747
  %3091 = vmatpush.bf16.msra.mxu0 %v2743
  %3092 = vmatpush.bf16.msra.mxu0 %v2739
  %3093 = vmatpush.bf16.msra.mxu0 %v2735
  %3094 = vmatpush.bf16.msra.mxu0 %v2731
  %3095 = vmatpush.bf16.msra.mxu0 %v2727
  %3096 = vmatpush.bf16.msra.mxu0 %v2723
  %3097 = vmatpush.bf16.msra.mxu0 %v2719
  %3098 = vmatmul.bf16.gmra.mxu0 %v2186
  %v3099 = vpop.f32.mrf.mxu0
  %v3100 = vadd.f32 %v2331, %v3099
  %v3101 = vpop.f32.mrf.mxu0
  %v3102 = vadd.f32 %v2331, %v3101
  %3103 = vmatmul.bf16.gmra.mxu0 %v2190
  %v3104 = vpop.f32.mrf.mxu0
  %v3105 = vadd.f32 %v2331, %v3104
  %v3106 = vpop.f32.mrf.mxu0
  %v3107 = vadd.f32 %v2331, %v3106
  %3108 = vmatmul.bf16.gmra.mxu0 %v2194
  %v3109 = vpop.f32.mrf.mxu0
  %v3110 = vadd.f32 %v2331, %v3109
  %v3111 = vpop.f32.mrf.mxu0
  %v3112 = vadd.f32 %v2331, %v3111
  %3113 = vmatmul.bf16.gmra.mxu0 %v2198
  %v3114 = vpop.f32.mrf.mxu0
  %v3115 = vadd.f32 %v2331, %v3114
  %v3116 = vpop.f32.mrf.mxu0
  %v3117 = vadd.f32 %v2331, %v3116
  %3118 = vdwg.mxu0
  %3119 = vmatpush.bf16.msra.mxu0 %v2779
  %3120 = vmatpush.bf16.msra.mxu0 %v2775
  %3121 = vmatpush.bf16.msra.mxu0 %v2771
  %3122 = vmatpush.bf16.msra.mxu0 %v2767
  %3123 = vmatpush.bf16.msra.mxu0 %v2763
  %3124 = vmatpush.bf16.msra.mxu0 %v2759
  %3125 = vmatpush.bf16.msra.mxu0 %v2755
  %3126 = vmatpush.bf16.msra.mxu0 %v2751
  %3127 = vmatmul.bf16.gmra.mxu0 %v2187
  %v3128 = vpop.f32.mrf.mxu0
  %v3129 = vadd.f32 %v3100, %v3128
  %v3130 = vpop.f32.mrf.mxu0
  %v3131 = vadd.f32 %v3102, %v3130
  %3132 = vmatmul.bf16.gmra.mxu0 %v2191
  %v3133 = vpop.f32.mrf.mxu0
  %v3134 = vadd.f32 %v3105, %v3133
  %v3135 = vpop.f32.mrf.mxu0
  %v3136 = vadd.f32 %v3107, %v3135
  %3137 = vmatmul.bf16.gmra.mxu0 %v2195
  %v3138 = vpop.f32.mrf.mxu0
  %v3139 = vadd.f32 %v3110, %v3138
  %v3140 = vpop.f32.mrf.mxu0
  %v3141 = vadd.f32 %v3112, %v3140
  %3142 = vmatmul.bf16.gmra.mxu0 %v2199
  %v3143 = vpop.f32.mrf.mxu0
  %v3144 = vadd.f32 %v3115, %v3143
  %v3145 = vpop.f32.mrf.mxu0
  %v3146 = vadd.f32 %v3117, %v3145
  %3147 = vdwg.mxu0
  %3148 = vmatpush.bf16.msra.mxu0 %v2811
  %3149 = vmatpush.bf16.msra.mxu0 %v2807
  %3150 = vmatpush.bf16.msra.mxu0 %v2803
  %3151 = vmatpush.bf16.msra.mxu0 %v2799
  %3152 = vmatpush.bf16.msra.mxu0 %v2795
  %3153 = vmatpush.bf16.msra.mxu0 %v2791
  %3154 = vmatpush.bf16.msra.mxu0 %v2787
  %3155 = vmatpush.bf16.msra.mxu0 %v2783
  %3156 = vmatmul.bf16.gmra.mxu0 %v2188
  %v3157 = vpop.f32.mrf.mxu0
  %v3158 = vadd.f32 %v3129, %v3157
  %v3159 = vpop.f32.mrf.mxu0
  %v3160 = vadd.f32 %v3131, %v3159
  %3161 = vmatmul.bf16.gmra.mxu0 %v2192
  %v3162 = vpop.f32.mrf.mxu0
  %v3163 = vadd.f32 %v3134, %v3162
  %v3164 = vpop.f32.mrf.mxu0
  %v3165 = vadd.f32 %v3136, %v3164
  %3166 = vmatmul.bf16.gmra.mxu0 %v2196
  %v3167 = vpop.f32.mrf.mxu0
  %v3168 = vadd.f32 %v3139, %v3167
  %v3169 = vpop.f32.mrf.mxu0
  %v3170 = vadd.f32 %v3141, %v3169
  %3171 = vmatmul.bf16.gmra.mxu0 %v2200
  %v3172 = vpop.f32.mrf.mxu0
  %v3173 = vadd.f32 %v3144, %v3172
  %v3174 = vpop.f32.mrf.mxu0
  %v3175 = vadd.f32 %v3146, %v3174
  %3176 = vdwg.mxu0
  %3177 = vmatpush.bf16.msra.mxu0 %v2843
  %3178 = vmatpush.bf16.msra.mxu0 %v2839
  %3179 = vmatpush.bf16.msra.mxu0 %v2835
  %3180 = vmatpush.bf16.msra.mxu0 %v2831
  %3181 = vmatpush.bf16.msra.mxu0 %v2827
  %3182 = vmatpush.bf16.msra.mxu0 %v2823
  %3183 = vmatpush.bf16.msra.mxu0 %v2819
  %3184 = vmatpush.bf16.msra.mxu0 %v2815
  %3185 = vmatmul.bf16.gmra.mxu0 %v2189
  %v3186 = vpop.f32.mrf.mxu0
  %v3187 = vadd.f32 %v3158, %v3186
  %v3188 = vpop.f32.mrf.mxu0
  %v3189 = vadd.f32 %v3160, %v3188
  %3190 = vmatmul.bf16.gmra.mxu0 %v2193
  %v3191 = vpop.f32.mrf.mxu0
  %v3192 = vadd.f32 %v3163, %v3191
  %v3193 = vpop.f32.mrf.mxu0
  %v3194 = vadd.f32 %v3165, %v3193
  %3195 = vmatmul.bf16.gmra.mxu0 %v2197
  %v3196 = vpop.f32.mrf.mxu0
  %v3197 = vadd.f32 %v3168, %v3196
  %v3198 = vpop.f32.mrf.mxu0
  %v3199 = vadd.f32 %v3170, %v3198
  %3200 = vmatmul.bf16.gmra.mxu0 %v2201
  %v3201 = vpop.f32.mrf.mxu0
  %v3202 = vadd.f32 %v3173, %v3201
  %v3203 = vpop.f32.mrf.mxu0
  %v3204 = vadd.f32 %v3175, %v3203
  %3205 = vdwg.mxu0
  %3206 = vmatpush.bf16.msra.mxu0 %v2748
  %3207 = vmatpush.bf16.msra.mxu0 %v2744
  %3208 = vmatpush.bf16.msra.mxu0 %v2740
  %3209 = vmatpush.bf16.msra.mxu0 %v2736
  %3210 = vmatpush.bf16.msra.mxu0 %v2732
  %3211 = vmatpush.bf16.msra.mxu0 %v2728
  %3212 = vmatpush.bf16.msra.mxu0 %v2724
  %3213 = vmatpush.bf16.msra.mxu0 %v2720
  %3214 = vmatmul.bf16.gmra.mxu0 %v2186
  %v3215 = vpop.f32.mrf.mxu0
  %v3216 = vadd.f32 %v2332, %v3215
  %v3217 = vpop.f32.mrf.mxu0
  %v3218 = vadd.f32 %v2332, %v3217
  %3219 = vmatmul.bf16.gmra.mxu0 %v2190
  %v3220 = vpop.f32.mrf.mxu0
  %v3221 = vadd.f32 %v2332, %v3220
  %v3222 = vpop.f32.mrf.mxu0
  %v3223 = vadd.f32 %v2332, %v3222
  %3224 = vmatmul.bf16.gmra.mxu0 %v2194
  %v3225 = vpop.f32.mrf.mxu0
  %v3226 = vadd.f32 %v2332, %v3225
  %v3227 = vpop.f32.mrf.mxu0
  %v3228 = vadd.f32 %v2332, %v3227
  %3229 = vmatmul.bf16.gmra.mxu0 %v2198
  %v3230 = vpop.f32.mrf.mxu0
  %v3231 = vadd.f32 %v2332, %v3230
  %v3232 = vpop.f32.mrf.mxu0
  %v3233 = vadd.f32 %v2332, %v3232
  %3234 = vdwg.mxu0
  %3235 = vmatpush.bf16.msra.mxu0 %v2780
  %3236 = vmatpush.bf16.msra.mxu0 %v2776
  %3237 = vmatpush.bf16.msra.mxu0 %v2772
  %3238 = vmatpush.bf16.msra.mxu0 %v2768
  %3239 = vmatpush.bf16.msra.mxu0 %v2764
  %3240 = vmatpush.bf16.msra.mxu0 %v2760
  %3241 = vmatpush.bf16.msra.mxu0 %v2756
  %3242 = vmatpush.bf16.msra.mxu0 %v2752
  %3243 = vmatmul.bf16.gmra.mxu0 %v2187
  %v3244 = vpop.f32.mrf.mxu0
  %v3245 = vadd.f32 %v3216, %v3244
  %v3246 = vpop.f32.mrf.mxu0
  %v3247 = vadd.f32 %v3218, %v3246
  %3248 = vmatmul.bf16.gmra.mxu0 %v2191
  %v3249 = vpop.f32.mrf.mxu0
  %v3250 = vadd.f32 %v3221, %v3249
  %v3251 = vpop.f32.mrf.mxu0
  %v3252 = vadd.f32 %v3223, %v3251
  %3253 = vmatmul.bf16.gmra.mxu0 %v2195
  %v3254 = vpop.f32.mrf.mxu0
  %v3255 = vadd.f32 %v3226, %v3254
  %v3256 = vpop.f32.mrf.mxu0
  %v3257 = vadd.f32 %v3228, %v3256
  %3258 = vmatmul.bf16.gmra.mxu0 %v2199
  %v3259 = vpop.f32.mrf.mxu0
  %v3260 = vadd.f32 %v3231, %v3259
  %v3261 = vpop.f32.mrf.mxu0
  %v3262 = vadd.f32 %v3233, %v3261
  %3263 = vdwg.mxu0
  %3264 = vmatpush.bf16.msra.mxu0 %v2812
  %3265 = vmatpush.bf16.msra.mxu0 %v2808
  %3266 = vmatpush.bf16.msra.mxu0 %v2804
  %3267 = vmatpush.bf16.msra.mxu0 %v2800
  %3268 = vmatpush.bf16.msra.mxu0 %v2796
  %3269 = vmatpush.bf16.msra.mxu0 %v2792
  %3270 = vmatpush.bf16.msra.mxu0 %v2788
  %3271 = vmatpush.bf16.msra.mxu0 %v2784
  %3272 = vmatmul.bf16.gmra.mxu0 %v2188
  %v3273 = vpop.f32.mrf.mxu0
  %v3274 = vadd.f32 %v3245, %v3273
  %v3275 = vpop.f32.mrf.mxu0
  %v3276 = vadd.f32 %v3247, %v3275
  %3277 = vmatmul.bf16.gmra.mxu0 %v2192
  %v3278 = vpop.f32.mrf.mxu0
  %v3279 = vadd.f32 %v3250, %v3278
  %v3280 = vpop.f32.mrf.mxu0
  %v3281 = vadd.f32 %v3252, %v3280
  %3282 = vmatmul.bf16.gmra.mxu0 %v2196
  %v3283 = vpop.f32.mrf.mxu0
  %v3284 = vadd.f32 %v3255, %v3283
  %v3285 = vpop.f32.mrf.mxu0
  %v3286 = vadd.f32 %v3257, %v3285
  %3287 = vmatmul.bf16.gmra.mxu0 %v2200
  %v3288 = vpop.f32.mrf.mxu0
  %v3289 = vadd.f32 %v3260, %v3288
  %v3290 = vpop.f32.mrf.mxu0
  %v3291 = vadd.f32 %v3262, %v3290
  %3292 = vdwg.mxu0
  %3293 = vmatpush.bf16.msra.mxu0 %v2844
  %3294 = vmatpush.bf16.msra.mxu0 %v2840
  %3295 = vmatpush.bf16.msra.mxu0 %v2836
  %3296 = vmatpush.bf16.msra.mxu0 %v2832
  %3297 = vmatpush.bf16.msra.mxu0 %v2828
  %3298 = vmatpush.bf16.msra.mxu0 %v2824
  %3299 = vmatpush.bf16.msra.mxu0 %v2820
  %3300 = vmatpush.bf16.msra.mxu0 %v2816
  %3301 = vmatmul.bf16.gmra.mxu0 %v2189
  %v3302 = vpop.f32.mrf.mxu0
  %v3303 = vadd.f32 %v3274, %v3302
  %v3304 = vpop.f32.mrf.mxu0
  %v3305 = vadd.f32 %v3276, %v3304
  %3306 = vmatmul.bf16.gmra.mxu0 %v2193
  %v3307 = vpop.f32.mrf.mxu0
  %v3308 = vadd.f32 %v3279, %v3307
  %v3309 = vpop.f32.mrf.mxu0
  %v3310 = vadd.f32 %v3281, %v3309
  %3311 = vmatmul.bf16.gmra.mxu0 %v2197
  %v3312 = vpop.f32.mrf.mxu0
  %v3313 = vadd.f32 %v3284, %v3312
  %v3314 = vpop.f32.mrf.mxu0
  %v3315 = vadd.f32 %v3286, %v3314
  %3316 = vmatmul.bf16.gmra.mxu0 %v2201
  %v3317 = vpop.f32.mrf.mxu0
  %v3318 = vadd.f32 %v3289, %v3317
  %v3319 = vpop.f32.mrf.mxu0
  %v3320 = vadd.f32 %v3291, %v3319
  %3321 = vdwg.mxu0
  %3322 = vmatpush.bf16.msra.mxu0 %v2749
  %3323 = vmatpush.bf16.msra.mxu0 %v2745
  %3324 = vmatpush.bf16.msra.mxu0 %v2741
  %3325 = vmatpush.bf16.msra.mxu0 %v2737
  %3326 = vmatpush.bf16.msra.mxu0 %v2733
  %3327 = vmatpush.bf16.msra.mxu0 %v2729
  %3328 = vmatpush.bf16.msra.mxu0 %v2725
  %3329 = vmatpush.bf16.msra.mxu0 %v2721
  %3330 = vmatmul.bf16.gmra.mxu0 %v2186
  %v3331 = vpop.f32.mrf.mxu0
  %v3332 = vadd.f32 %v2333, %v3331
  %v3333 = vpop.f32.mrf.mxu0
  %v3334 = vadd.f32 %v2333, %v3333
  %3335 = vmatmul.bf16.gmra.mxu0 %v2190
  %v3336 = vpop.f32.mrf.mxu0
  %v3337 = vadd.f32 %v2333, %v3336
  %v3338 = vpop.f32.mrf.mxu0
  %v3339 = vadd.f32 %v2333, %v3338
  %3340 = vmatmul.bf16.gmra.mxu0 %v2194
  %v3341 = vpop.f32.mrf.mxu0
  %v3342 = vadd.f32 %v2333, %v3341
  %v3343 = vpop.f32.mrf.mxu0
  %v3344 = vadd.f32 %v2333, %v3343
  %3345 = vmatmul.bf16.gmra.mxu0 %v2198
  %v3346 = vpop.f32.mrf.mxu0
  %v3347 = vadd.f32 %v2333, %v3346
  %v3348 = vpop.f32.mrf.mxu0
  %v3349 = vadd.f32 %v2333, %v3348
  %3350 = vdwg.mxu0
  %3351 = vmatpush.bf16.msra.mxu0 %v2781
  %3352 = vmatpush.bf16.msra.mxu0 %v2777
  %3353 = vmatpush.bf16.msra.mxu0 %v2773
  %3354 = vmatpush.bf16.msra.mxu0 %v2769
  %3355 = vmatpush.bf16.msra.mxu0 %v2765
  %3356 = vmatpush.bf16.msra.mxu0 %v2761
  %3357 = vmatpush.bf16.msra.mxu0 %v2757
  %3358 = vmatpush.bf16.msra.mxu0 %v2753
  %3359 = vmatmul.bf16.gmra.mxu0 %v2187
  %v3360 = vpop.f32.mrf.mxu0
  %v3361 = vadd.f32 %v3332, %v3360
  %v3362 = vpop.f32.mrf.mxu0
  %v3363 = vadd.f32 %v3334, %v3362
  %3364 = vmatmul.bf16.gmra.mxu0 %v2191
  %v3365 = vpop.f32.mrf.mxu0
  %v3366 = vadd.f32 %v3337, %v3365
  %v3367 = vpop.f32.mrf.mxu0
  %v3368 = vadd.f32 %v3339, %v3367
  %3369 = vmatmul.bf16.gmra.mxu0 %v2195
  %v3370 = vpop.f32.mrf.mxu0
  %v3371 = vadd.f32 %v3342, %v3370
  %v3372 = vpop.f32.mrf.mxu0
  %v3373 = vadd.f32 %v3344, %v3372
  %3374 = vmatmul.bf16.gmra.mxu0 %v2199
  %v3375 = vpop.f32.mrf.mxu0
  %v3376 = vadd.f32 %v3347, %v3375
  %v3377 = vpop.f32.mrf.mxu0
  %v3378 = vadd.f32 %v3349, %v3377
  %3379 = vdwg.mxu0
  %3380 = vmatpush.bf16.msra.mxu0 %v2813
  %3381 = vmatpush.bf16.msra.mxu0 %v2809
  %3382 = vmatpush.bf16.msra.mxu0 %v2805
  %3383 = vmatpush.bf16.msra.mxu0 %v2801
  %3384 = vmatpush.bf16.msra.mxu0 %v2797
  %3385 = vmatpush.bf16.msra.mxu0 %v2793
  %3386 = vmatpush.bf16.msra.mxu0 %v2789
  %3387 = vmatpush.bf16.msra.mxu0 %v2785
  %3388 = vmatmul.bf16.gmra.mxu0 %v2188
  %v3389 = vpop.f32.mrf.mxu0
  %v3390 = vadd.f32 %v3361, %v3389
  %v3391 = vpop.f32.mrf.mxu0
  %v3392 = vadd.f32 %v3363, %v3391
  %3393 = vmatmul.bf16.gmra.mxu0 %v2192
  %v3394 = vpop.f32.mrf.mxu0
  %v3395 = vadd.f32 %v3366, %v3394
  %v3396 = vpop.f32.mrf.mxu0
  %v3397 = vadd.f32 %v3368, %v3396
  %3398 = vmatmul.bf16.gmra.mxu0 %v2196
  %v3399 = vpop.f32.mrf.mxu0
  %v3400 = vadd.f32 %v3371, %v3399
  %v3401 = vpop.f32.mrf.mxu0
  %v3402 = vadd.f32 %v3373, %v3401
  %3403 = vmatmul.bf16.gmra.mxu0 %v2200
  %v3404 = vpop.f32.mrf.mxu0
  %v3405 = vadd.f32 %v3376, %v3404
  %v3406 = vpop.f32.mrf.mxu0
  %v3407 = vadd.f32 %v3378, %v3406
  %3408 = vdwg.mxu0
  %3409 = vmatpush.bf16.msra.mxu0 %v2845
  %3410 = vmatpush.bf16.msra.mxu0 %v2841
  %3411 = vmatpush.bf16.msra.mxu0 %v2837
  %3412 = vmatpush.bf16.msra.mxu0 %v2833
  %3413 = vmatpush.bf16.msra.mxu0 %v2829
  %3414 = vmatpush.bf16.msra.mxu0 %v2825
  %3415 = vmatpush.bf16.msra.mxu0 %v2821
  %3416 = vmatpush.bf16.msra.mxu0 %v2817
  %3417 = vmatmul.bf16.gmra.mxu0 %v2189
  %v3418 = vpop.f32.mrf.mxu0
  %v3419 = vadd.f32 %v3390, %v3418
  %v3420 = vpop.f32.mrf.mxu0
  %v3421 = vadd.f32 %v3392, %v3420
  %3422 = vmatmul.bf16.gmra.mxu0 %v2193
  %v3423 = vpop.f32.mrf.mxu0
  %v3424 = vadd.f32 %v3395, %v3423
  %v3425 = vpop.f32.mrf.mxu0
  %v3426 = vadd.f32 %v3397, %v3425
  %3427 = vmatmul.bf16.gmra.mxu0 %v2197
  %v3428 = vpop.f32.mrf.mxu0
  %v3429 = vadd.f32 %v3400, %v3428
  %v3430 = vpop.f32.mrf.mxu0
  %v3431 = vadd.f32 %v3402, %v3430
  %3432 = vmatmul.bf16.gmra.mxu0 %v2201
  %v3433 = vpop.f32.mrf.mxu0
  %v3434 = vadd.f32 %v3405, %v3433
  %v3435 = vpop.f32.mrf.mxu0
  %v3436 = vadd.f32 %v3407, %v3435
  %3437 = vdwg.mxu0
  %v3438 = vadd.f32 %v3071, %v3073
  %v3439 = vadd.f32 %v3438, %v3076
  %v3440 = vadd.f32 %v3439, %v3078
  %v3441 = vadd.f32 %v3440, %v3081
  %v3442 = vadd.f32 %v3441, %v3083
  %v3443 = vadd.f32 %v3442, %v3086
  %v3444 = vadd.f32 %v3443, %v3088
  %v3445 = vrot.slane %v3444, 4
  %v3446 = vadd.f32 %v3444, %v3445
  %v3447 = vrot.slane %v3446, 2
  %v3448 = vadd.f32 %v3446, %v3447
  %v3449 = vrot.slane %v3448, 1
  %v3450 = vadd.f32 %v3448, %v3449
  %v3451 = vadd.f32 %v3187, %v3189
  %v3452 = vadd.f32 %v3451, %v3192
  %v3453 = vadd.f32 %v3452, %v3194
  %v3454 = vadd.f32 %v3453, %v3197
  %v3455 = vadd.f32 %v3454, %v3199
  %v3456 = vadd.f32 %v3455, %v3202
  %v3457 = vadd.f32 %v3456, %v3204
  %v3458 = vrot.slane %v3457, 4
  %v3459 = vadd.f32 %v3457, %v3458
  %v3460 = vrot.slane %v3459, 2
  %v3461 = vadd.f32 %v3459, %v3460
  %v3462 = vrot.slane %v3461, 1
  %v3463 = vadd.f32 %v3461, %v3462
  %v3464 = vadd.f32 %v3303, %v3305
  %v3465 = vadd.f32 %v3464, %v3308
  %v3466 = vadd.f32 %v3465, %v3310
  %v3467 = vadd.f32 %v3466, %v3313
  %v3468 = vadd.f32 %v3467, %v3315
  %v3469 = vadd.f32 %v3468, %v3318
  %v3470 = vadd.f32 %v3469, %v3320
  %v3471 = vrot.slane %v3470, 4
  %v3472 = vadd.f32 %v3470, %v3471
  %v3473 = vrot.slane %v3472, 2
  %v3474 = vadd.f32 %v3472, %v3473
  %v3475 = vrot.slane %v3474, 1
  %v3476 = vadd.f32 %v3474, %v3475
  %v3477 = vadd.f32 %v3419, %v3421
  %v3478 = vadd.f32 %v3477, %v3424
  %v3479 = vadd.f32 %v3478, %v3426
  %v3480 = vadd.f32 %v3479, %v3429
  %v3481 = vadd.f32 %v3480, %v3431
  %v3482 = vadd.f32 %v3481, %v3434
  %v3483 = vadd.f32 %v3482, %v3436
  %v3484 = vrot.slane %v3483, 4
  %v3485 = vadd.f32 %v3483, %v3484
  %v3486 = vrot.slane %v3485, 2
  %v3487 = vadd.f32 %v3485, %v3486
  %v3488 = vrot.slane %v3487, 1
  %v3489 = vadd.f32 %v3487, %v3488
  %v3490 = vmul.f32 %v3450, 0.015625
  %v3491 = vmul.f32 %v3463, 0.015625
  %v3492 = vmul.f32 %v3476, 0.015625
  %v3493 = vmul.f32 %v3489, 0.015625
  %v3494 = vmul.f32 %v3071, %v3071
  %v3495 = vmul.f32 %v3187, %v3187
  %v3496 = vmul.f32 %v3303, %v3303
  %v3497 = vmul.f32 %v3419, %v3419
  %v3498 = vmul.f32 %v3073, %v3073
  %v3499 = vmul.f32 %v3189, %v3189
  %v3500 = vmul.f32 %v3305, %v3305
  %v3501 = vmul.f32 %v3421, %v3421
  %v3502 = vmul.f32 %v3076, %v3076
  %v3503 = vmul.f32 %v3192, %v3192
  %v3504 = vmul.f32 %v3308, %v3308
  %v3505 = vmul.f32 %v3424, %v3424
  %v3506 = vmul.f32 %v3078, %v3078
  %v3507 = vmul.f32 %v3194, %v3194
  %v3508 = vmul.f32 %v3310, %v3310
  %v3509 = vmul.f32 %v3426, %v3426
  %v3510 = vmul.f32 %v3081, %v3081
  %v3511 = vmul.f32 %v3197, %v3197
  %v3512 = vmul.f32 %v3313, %v3313
  %v3513 = vmul.f32 %v3429, %v3429
  %v3514 = vmul.f32 %v3083, %v3083
  %v3515 = vmul.f32 %v3199, %v3199
  %v3516 = vmul.f32 %v3315, %v3315
  %v3517 = vmul.f32 %v3431, %v3431
  %v3518 = vmul.f32 %v3086, %v3086
  %v3519 = vmul.f32 %v3202, %v3202
  %v3520 = vmul.f32 %v3318, %v3318
  %v3521 = vmul.f32 %v3434, %v3434
  %v3522 = vmul.f32 %v3088, %v3088
  %v3523 = vmul.f32 %v3204, %v3204
  %v3524 = vmul.f32 %v3320, %v3320
  %v3525 = vmul.f32 %v3436, %v3436
  %v3526 = vadd.f32 %v3494, %v3498
  %v3527 = vadd.f32 %v3526, %v3502
  %v3528 = vadd.f32 %v3527, %v3506
  %v3529 = vadd.f32 %v3528, %v3510
  %v3530 = vadd.f32 %v3529, %v3514
  %v3531 = vadd.f32 %v3530, %v3518
  %v3532 = vadd.f32 %v3531, %v3522
  %v3533 = vrot.slane %v3532, 4
  %v3534 = vadd.f32 %v3532, %v3533
  %v3535 = vrot.slane %v3534, 2
  %v3536 = vadd.f32 %v3534, %v3535
  %v3537 = vrot.slane %v3536, 1
  %v3538 = vadd.f32 %v3536, %v3537
  %v3539 = vadd.f32 %v3495, %v3499
  %v3540 = vadd.f32 %v3539, %v3503
  %v3541 = vadd.f32 %v3540, %v3507
  %v3542 = vadd.f32 %v3541, %v3511
  %v3543 = vadd.f32 %v3542, %v3515
  %v3544 = vadd.f32 %v3543, %v3519
  %v3545 = vadd.f32 %v3544, %v3523
  %v3546 = vrot.slane %v3545, 4
  %v3547 = vadd.f32 %v3545, %v3546
  %v3548 = vrot.slane %v3547, 2
  %v3549 = vadd.f32 %v3547, %v3548
  %v3550 = vrot.slane %v3549, 1
  %v3551 = vadd.f32 %v3549, %v3550
  %v3552 = vadd.f32 %v3496, %v3500
  %v3553 = vadd.f32 %v3552, %v3504
  %v3554 = vadd.f32 %v3553, %v3508
  %v3555 = vadd.f32 %v3554, %v3512
  %v3556 = vadd.f32 %v3555, %v3516
  %v3557 = vadd.f32 %v3556, %v3520
  %v3558 = vadd.f32 %v3557, %v3524
  %v3559 = vrot.slane %v3558, 4
  %v3560 = vadd.f32 %v3558, %v3559
  %v3561 = vrot.slane %v3560, 2
  %v3562 = vadd.f32 %v3560, %v3561
  %v3563 = vrot.slane %v3562, 1
  %v3564 = vadd.f32 %v3562, %v3563
  %v3565 = vadd.f32 %v3497, %v3501
  %v3566 = vadd.f32 %v3565, %v3505
  %v3567 = vadd.f32 %v3566, %v3509
  %v3568 = vadd.f32 %v3567, %v3513
  %v3569 = vadd.f32 %v3568, %v3517
  %v3570 = vadd.f32 %v3569, %v3521
  %v3571 = vadd.f32 %v3570, %v3525
  %v3572 = vrot.slane %v3571, 4
  %v3573 = vadd.f32 %v3571, %v3572
  %v3574 = vrot.slane %v3573, 2
  %v3575 = vadd.f32 %v3573, %v3574
  %v3576 = vrot.slane %v3575, 1
  %v3577 = vadd.f32 %v3575, %v3576
  %v3578 = vmul.f32 %v3538, 0.015625
  %v3579 = vmul.f32 %v3551, 0.015625
  %v3580 = vmul.f32 %v3564, 0.015625
  %v3581 = vmul.f32 %v3577, 0.015625
  %v3582 = vmul.f32 %v3490, %v3490
  %v3583 = vmul.f32 %v3491, %v3491
  %v3584 = vmul.f32 %v3492, %v3492
  %v3585 = vmul.f32 %v3493, %v3493
  %v3586 = vsub.f32 %v3578, %v3582
  %v3587 = vsub.f32 %v3579, %v3583
  %v3588 = vsub.f32 %v3580, %v3584
  %v3589 = vsub.f32 %v3581, %v3585
  %v3590 = vadd.f32 %v3586, 1e-05
  %v3591 = vadd.f32 %v3587, 1e-05
  %v3592 = vadd.f32 %v3588, 1e-05
  %v3593 = vadd.f32 %v3589, 1e-05
  %v3594 = vrsqrt.pop %v3590
  %v3595 = vmul.f32 %v3594, %v3590
  %v3596 = vmul.f32 %v3595, %v3594
  %v3597 = vmul.f32 0.5, %v3596
  %v3598 = vsub.f32 1.5, %v3597
  %v3599 = vmul.f32 %v3594, %v3598
  %vm3600 = vweird.f32 %v3590
  %vm3601 = vweird.f32 %v3594
  %vm3602 = vmor %vm3600, %vm3601
  %v3603 = vsel %vm3602, %v3594, %v3599
  %v3604 = vrsqrt.pop %v3591
  %v3605 = vmul.f32 %v3604, %v3591
  %v3606 = vmul.f32 %v3605, %v3604
  %v3607 = vmul.f32 0.5, %v3606
  %v3608 = vsub.f32 1.5, %v3607
  %v3609 = vmul.f32 %v3604, %v3608
  %vm3610 = vweird.f32 %v3591
  %vm3611 = vweird.f32 %v3604
  %vm3612 = vmor %vm3610, %vm3611
  %v3613 = vsel %vm3612, %v3604, %v3609
  %v3614 = vrsqrt.pop %v3592
  %v3615 = vmul.f32 %v3614, %v3592
  %v3616 = vmul.f32 %v3615, %v3614
  %v3617 = vmul.f32 0.5, %v3616
  %v3618 = vsub.f32 1.5, %v3617
  %v3619 = vmul.f32 %v3614, %v3618
  %vm3620 = vweird.f32 %v3592
  %vm3621 = vweird.f32 %v3614
  %vm3622 = vmor %vm3620, %vm3621
  %v3623 = vsel %vm3622, %v3614, %v3619
  %v3624 = vrsqrt.pop %v3593
  %v3625 = vmul.f32 %v3624, %v3593
  %v3626 = vmul.f32 %v3625, %v3624
  %v3627 = vmul.f32 0.5, %v3626
  %v3628 = vsub.f32 1.5, %v3627
  %v3629 = vmul.f32 %v3624, %v3628
  %vm3630 = vweird.f32 %v3593
  %vm3631 = vweird.f32 %v3624
  %vm3632 = vmor %vm3630, %vm3631
  %v3633 = vsel %vm3632, %v3624, %v3629
  %v3634 = vmul.f32 %v62, %v3603
  %v3635 = vmul.f32 %v63, %v3613
  %v3636 = vmul.f32 %v64, %v3623
  %v3637 = vmul.f32 %v65, %v3633
  %v3638 = vmul.f32 %v3490, %v3634
  %v3639 = vmul.f32 %v3491, %v3635
  %v3640 = vmul.f32 %v3492, %v3636
  %v3641 = vmul.f32 %v3493, %v3637
  %v3646 = vrot.slane %v3638, 7
  %v3647 = vrot.slane %v3639, 7
  %v3648 = vrot.slane %v3640, 7
  %v3649 = vrot.slane %v3641, 7
  %v3654 = vsub.f32 %v66, %v3646
  %v3655 = vsub.f32 %v67, %v3647
  %v3656 = vsub.f32 %v68, %v3648
  %v3657 = vsub.f32 %v69, %v3649
  %v3658 = vperm.slane %v3634, 7
  %v3659 = vperm.slane %v3635, 7
  %v3660 = vperm.slane %v3636, 7
  %v3661 = vperm.slane %v3637, 7
  %v3662 = vmul.f32 %v3071, %v3658
  %v3663 = vmul.f32 %v3187, %v3659
  %v3664 = vmul.f32 %v3303, %v3660
  %v3665 = vmul.f32 %v3419, %v3661
  %v3666 = vmul.f32 %v3073, %v3658
  %v3667 = vmul.f32 %v3189, %v3659
  %v3668 = vmul.f32 %v3305, %v3660
  %v3669 = vmul.f32 %v3421, %v3661
  %v3670 = vmul.f32 %v3076, %v3658
  %v3671 = vmul.f32 %v3192, %v3659
  %v3672 = vmul.f32 %v3308, %v3660
  %v3673 = vmul.f32 %v3424, %v3661
  %v3674 = vmul.f32 %v3078, %v3658
  %v3675 = vmul.f32 %v3194, %v3659
  %v3676 = vmul.f32 %v3310, %v3660
  %v3677 = vmul.f32 %v3426, %v3661
  %v3678 = vmul.f32 %v3081, %v3658
  %v3679 = vmul.f32 %v3197, %v3659
  %v3680 = vmul.f32 %v3313, %v3660
  %v3681 = vmul.f32 %v3429, %v3661
  %v3682 = vmul.f32 %v3083, %v3658
  %v3683 = vmul.f32 %v3199, %v3659
  %v3684 = vmul.f32 %v3315, %v3660
  %v3685 = vmul.f32 %v3431, %v3661
  %v3686 = vmul.f32 %v3086, %v3658
  %v3687 = vmul.f32 %v3202, %v3659
  %v3688 = vmul.f32 %v3318, %v3660
  %v3689 = vmul.f32 %v3434, %v3661
  %v3690 = vmul.f32 %v3088, %v3658
  %v3691 = vmul.f32 %v3204, %v3659
  %v3692 = vmul.f32 %v3320, %v3660
  %v3693 = vmul.f32 %v3436, %v3661
  %v3694 = vperm.slane %v3654, 0
  %v3695 = vperm.slane %v3655, 0
  %v3696 = vperm.slane %v3656, 0
  %v3697 = vperm.slane %v3657, 0
  %v3698 = vadd.f32 %v3662, %v3694
  %v3699 = vadd.f32 %v3663, %v3695
  %v3700 = vadd.f32 %v3664, %v3696
  %v3701 = vadd.f32 %v3665, %v3697
  %v3702 = vadd.f32 %v3666, %v3694
  %v3703 = vadd.f32 %v3667, %v3695
  %v3704 = vadd.f32 %v3668, %v3696
  %v3705 = vadd.f32 %v3669, %v3697
  %v3706 = vadd.f32 %v3670, %v3694
  %v3707 = vadd.f32 %v3671, %v3695
  %v3708 = vadd.f32 %v3672, %v3696
  %v3709 = vadd.f32 %v3673, %v3697
  %v3710 = vadd.f32 %v3674, %v3694
  %v3711 = vadd.f32 %v3675, %v3695
  %v3712 = vadd.f32 %v3676, %v3696
  %v3713 = vadd.f32 %v3677, %v3697
  %v3714 = vadd.f32 %v3678, %v3694
  %v3715 = vadd.f32 %v3679, %v3695
  %v3716 = vadd.f32 %v3680, %v3696
  %v3717 = vadd.f32 %v3681, %v3697
  %v3718 = vadd.f32 %v3682, %v3694
  %v3719 = vadd.f32 %v3683, %v3695
  %v3720 = vadd.f32 %v3684, %v3696
  %v3721 = vadd.f32 %v3685, %v3697
  %v3722 = vadd.f32 %v3686, %v3694
  %v3723 = vadd.f32 %v3687, %v3695
  %v3724 = vadd.f32 %v3688, %v3696
  %v3725 = vadd.f32 %v3689, %v3697
  %v3726 = vadd.f32 %v3690, %v3694
  %v3727 = vadd.f32 %v3691, %v3695
  %v3728 = vadd.f32 %v3692, %v3696
  %v3729 = vadd.f32 %v3693, %v3697
  %v3730 = vmax.f32 %v3698, 0.0
  %v3731 = vmax.f32 %v3699, 0.0
  %v3732 = vmax.f32 %v3700, 0.0
  %v3733 = vmax.f32 %v3701, 0.0
  %v3734 = vmax.f32 %v3702, 0.0
  %v3735 = vmax.f32 %v3703, 0.0
  %v3736 = vmax.f32 %v3704, 0.0
  %v3737 = vmax.f32 %v3705, 0.0
  %v3738 = vmax.f32 %v3706, 0.0
  %v3739 = vmax.f32 %v3707, 0.0
  %v3740 = vmax.f32 %v3708, 0.0
  %v3741 = vmax.f32 %v3709, 0.0
  %v3742 = vmax.f32 %v3710, 0.0
  %v3743 = vmax.f32 %v3711, 0.0
  %v3744 = vmax.f32 %v3712, 0.0
  %v3745 = vmax.f32 %v3713, 0.0
  %v3746 = vmax.f32 %v3714, 0.0
  %v3747 = vmax.f32 %v3715, 0.0
  %v3748 = vmax.f32 %v3716, 0.0
  %v3749 = vmax.f32 %v3717, 0.0
  %v3750 = vmax.f32 %v3718, 0.0
  %v3751 = vmax.f32 %v3719, 0.0
  %v3752 = vmax.f32 %v3720, 0.0
  %v3753 = vmax.f32 %v3721, 0.0
  %v3754 = vmax.f32 %v3722, 0.0
  %v3755 = vmax.f32 %v3723, 0.0
  %v3756 = vmax.f32 %v3724, 0.0
  %v3757 = vmax.f32 %v3725, 0.0
  %v3758 = vmax.f32 %v3726, 0.0
  %v3759 = vmax.f32 %v3727, 0.0
  %v3760 = vmax.f32 %v3728, 0.0
  %v3761 = vmax.f32 %v3729, 0.0
  %s3762 = smul.u32 %s604, 1
  %s3763 = sshll.u32 %s3762, 4
  %3764 = dma.done %s48, %s3763
  %v3765 = vld [vmem:[%s6 + $0x21] ss:$0 sm:$0xff]
  %v3766 = vpack.c.bf16 %v3734, %v3730
  %v3767 = vpack.c.bf16 %v3735, %v3731
  %v3768 = vpack.c.bf16 %v3736, %v3732
  %v3769 = vpack.c.bf16 %v3737, %v3733
  %v3770 = vpack.c.bf16 %v3742, %v3738
  %v3771 = vpack.c.bf16 %v3743, %v3739
  %v3772 = vpack.c.bf16 %v3744, %v3740
  %v3773 = vpack.c.bf16 %v3745, %v3741
  %v3774 = vpack.c.bf16 %v3750, %v3746
  %v3775 = vpack.c.bf16 %v3751, %v3747
  %v3776 = vpack.c.bf16 %v3752, %v3748
  %v3777 = vpack.c.bf16 %v3753, %v3749
  %v3778 = vpack.c.bf16 %v3758, %v3754
  %v3779 = vpack.c.bf16 %v3759, %v3755
  %v3780 = vpack.c.bf16 %v3760, %v3756
  %v3781 = vpack.c.bf16 %v3761, %v3757
  %v3782 = vld [vmem:[#allocation4] sm:$0xf]
  %v3783 = vld [vmem:[#allocation4 + $0x4] sm:$0xf]
  %v3784 = vld [vmem:[#allocation4 + $0x8] sm:$0xf]
  %v3785 = vld [vmem:[#allocation4 + $0xc] sm:$0xf]
  %v3786 = vld [vmem:[#allocation4 + $0x10] sm:$0xf]
  %v3787 = vld [vmem:[#allocation4 + $0x14] sm:$0xf]
  %v3788 = vld [vmem:[#allocation4 + $0x18] sm:$0xf]
  %v3789 = vld [vmem:[#allocation4 + $0x1c] sm:$0xf]
  %v3790 = vld [vmem:[#allocation4 + $0x20] sm:$0xf]
  %v3791 = vld [vmem:[#allocation4 + $0x24] sm:$0xf]
  %v3792 = vld [vmem:[#allocation4 + $0x28] sm:$0xf]
  %v3793 = vld [vmem:[#allocation4 + $0x2c] sm:$0xf]
  %v3794 = vld [vmem:[#allocation4 + $0x30] sm:$0xf]
  %v3795 = vld [vmem:[#allocation4 + $0x34] sm:$0xf]
  %v3796 = vld [vmem:[#allocation4 + $0x38] sm:$0xf]
  %v3797 = vld [vmem:[#allocation4 + $0x3c] sm:$0xf]
  %v3798 = vld [vmem:[#allocation4 + $0x40] sm:$0xf]
  %v3799 = vld [vmem:[#allocation4 + $0x44] sm:$0xf]
  %v3800 = vld [vmem:[#allocation4 + $0x48] sm:$0xf]
  %v3801 = vld [vmem:[#allocation4 + $0x4c] sm:$0xf]
  %v3802 = vld [vmem:[#allocation4 + $0x50] sm:$0xf]
  %v3803 = vld [vmem:[#allocation4 + $0x54] sm:$0xf]
  %v3804 = vld [vmem:[#allocation4 + $0x58] sm:$0xf]
  %v3805 = vld [vmem:[#allocation4 + $0x5c] sm:$0xf]
  %v3806 = vld [vmem:[#allocation4 + $0x60] sm:$0xf]
  %v3807 = vld [vmem:[#allocation4 + $0x64] sm:$0xf]
  %v3808 = vld [vmem:[#allocation4 + $0x68] sm:$0xf]
  %v3809 = vld [vmem:[#allocation4 + $0x6c] sm:$0xf]
  %v3810 = vld [vmem:[#allocation4 + $0x70] sm:$0xf]
  %v3811 = vld [vmem:[#allocation4 + $0x74] sm:$0xf]
  %v3812 = vld [vmem:[#allocation4 + $0x78] sm:$0xf]
  %v3813 = vld [vmem:[#allocation4 + $0x7c] sm:$0xf]
  %v3814 = vld [vmem:[#allocation4 + $0x80] sm:$0xf]
  %v3815 = vld [vmem:[#allocation4 + $0x84] sm:$0xf]
  %v3816 = vld [vmem:[#allocation4 + $0x88] sm:$0xf]
  %v3817 = vld [vmem:[#allocation4 + $0x8c] sm:$0xf]
  %v3818 = vld [vmem:[#allocation4 + $0x90] sm:$0xf]
  %v3819 = vld [vmem:[#allocation4 + $0x94] sm:$0xf]
  %v3820 = vld [vmem:[#allocation4 + $0x98] sm:$0xf]
  %v3821 = vld [vmem:[#allocation4 + $0x9c] sm:$0xf]
  %v3822 = vld [vmem:[#allocation4 + $0xa0] sm:$0xf]
  %v3823 = vld [vmem:[#allocation4 + $0xa4] sm:$0xf]
  %v3824 = vld [vmem:[#allocation4 + $0xa8] sm:$0xf]
  %v3825 = vld [vmem:[#allocation4 + $0xac] sm:$0xf]
  %v3826 = vld [vmem:[#allocation4 + $0xb0] sm:$0xf]
  %v3827 = vld [vmem:[#allocation4 + $0xb4] sm:$0xf]
  %v3828 = vld [vmem:[#allocation4 + $0xb8] sm:$0xf]
  %v3829 = vld [vmem:[#allocation4 + $0xbc] sm:$0xf]
  %v3830 = vld [vmem:[#allocation4 + $0xc0] sm:$0xf]
  %v3831 = vld [vmem:[#allocation4 + $0xc4] sm:$0xf]
  %v3832 = vld [vmem:[#allocation4 + $0xc8] sm:$0xf]
  %v3833 = vld [vmem:[#allocation4 + $0xcc] sm:$0xf]
  %v3834 = vld [vmem:[#allocation4 + $0xd0] sm:$0xf]
  %v3835 = vld [vmem:[#allocation4 + $0xd4] sm:$0xf]
  %v3836 = vld [vmem:[#allocation4 + $0xd8] sm:$0xf]
  %v3837 = vld [vmem:[#allocation4 + $0xdc] sm:$0xf]
  %v3838 = vld [vmem:[#allocation4 + $0xe0] sm:$0xf]
  %v3839 = vld [vmem:[#allocation4 + $0xe4] sm:$0xf]
  %v3840 = vld [vmem:[#allocation4 + $0xe8] sm:$0xf]
  %v3841 = vld [vmem:[#allocation4 + $0xec] sm:$0xf]
  %v3842 = vld [vmem:[#allocation4 + $0xf0] sm:$0xf]
  %v3843 = vld [vmem:[#allocation4 + $0xf4] sm:$0xf]
  %v3844 = vld [vmem:[#allocation4 + $0xf8] sm:$0xf]
  %v3845 = vld [vmem:[#allocation4 + $0xfc] sm:$0xf]
  %v3910 = vunpack.c.l.b16 %v3782
  %v3911 = vunpack.c.l.b16 %v3783
  %v3912 = vunpack.c.l.b16 %v3784
  %v3913 = vunpack.c.l.b16 %v3785
  %v3914 = vunpack.c.l.b16 %v3786
  %v3915 = vunpack.c.l.b16 %v3787
  %v3916 = vunpack.c.l.b16 %v3788
  %v3917 = vunpack.c.l.b16 %v3789
  %v3918 = vunpack.c.l.b16 %v3790
  %v3919 = vunpack.c.l.b16 %v3791
  %v3920 = vunpack.c.l.b16 %v3792
  %v3921 = vunpack.c.l.b16 %v3793
  %v3922 = vunpack.c.l.b16 %v3794
  %v3923 = vunpack.c.l.b16 %v3795
  %v3924 = vunpack.c.l.b16 %v3796
  %v3925 = vunpack.c.l.b16 %v3797
  %v3926 = vunpack.c.l.b16 %v3798
  %v3927 = vunpack.c.l.b16 %v3799
  %v3928 = vunpack.c.l.b16 %v3800
  %v3929 = vunpack.c.l.b16 %v3801
  %v3930 = vunpack.c.l.b16 %v3802
  %v3931 = vunpack.c.l.b16 %v3803
  %v3932 = vunpack.c.l.b16 %v3804
  %v3933 = vunpack.c.l.b16 %v3805
  %v3934 = vunpack.c.l.b16 %v3806
  %v3935 = vunpack.c.l.b16 %v3807
  %v3936 = vunpack.c.l.b16 %v3808
  %v3937 = vunpack.c.l.b16 %v3809
  %v3938 = vunpack.c.l.b16 %v3810
  %v3939 = vunpack.c.l.b16 %v3811
  %v3940 = vunpack.c.l.b16 %v3812
  %v3941 = vunpack.c.l.b16 %v3813
  %v3942 = vunpack.c.l.b16 %v3814
  %v3943 = vunpack.c.l.b16 %v3815
  %v3944 = vunpack.c.l.b16 %v3816
  %v3945 = vunpack.c.l.b16 %v3817
  %v3946 = vunpack.c.l.b16 %v3818
  %v3947 = vunpack.c.l.b16 %v3819
  %v3948 = vunpack.c.l.b16 %v3820
  %v3949 = vunpack.c.l.b16 %v3821
  %v3950 = vunpack.c.l.b16 %v3822
  %v3951 = vunpack.c.l.b16 %v3823
  %v3952 = vunpack.c.l.b16 %v3824
  %v3953 = vunpack.c.l.b16 %v3825
  %v3954 = vunpack.c.l.b16 %v3826
  %v3955 = vunpack.c.l.b16 %v3827
  %v3956 = vunpack.c.l.b16 %v3828
  %v3957 = vunpack.c.l.b16 %v3829
  %v3958 = vunpack.c.l.b16 %v3830
  %v3959 = vunpack.c.l.b16 %v3831
  %v3960 = vunpack.c.l.b16 %v3832
  %v3961 = vunpack.c.l.b16 %v3833
  %v3962 = vunpack.c.l.b16 %v3834
  %v3963 = vunpack.c.l.b16 %v3835
  %v3964 = vunpack.c.l.b16 %v3836
  %v3965 = vunpack.c.l.b16 %v3837
  %v3966 = vunpack.c.l.b16 %v3838
  %v3967 = vunpack.c.l.b16 %v3839
  %v3968 = vunpack.c.l.b16 %v3840
  %v3969 = vunpack.c.l.b16 %v3841
  %v3970 = vunpack.c.l.b16 %v3842
  %v3971 = vunpack.c.l.b16 %v3843
  %v3972 = vunpack.c.l.b16 %v3844
  %v3973 = vunpack.c.l.b16 %v3845
  %v3974 = vpack.c.b16 %v3911, %v3910
  %v3975 = vpack.c.b16 %v3913, %v3912
  %v3976 = vpack.c.b16 %v3915, %v3914
  %v3977 = vpack.c.b16 %v3917, %v3916
  %v3978 = vpack.c.b16 %v3919, %v3918
  %v3979 = vpack.c.b16 %v3921, %v3920
  %v3980 = vpack.c.b16 %v3923, %v3922
  %v3981 = vpack.c.b16 %v3925, %v3924
  %v3982 = vpack.c.b16 %v3927, %v3926
  %v3983 = vpack.c.b16 %v3929, %v3928
  %v3984 = vpack.c.b16 %v3931, %v3930
  %v3985 = vpack.c.b16 %v3933, %v3932
  %v3986 = vpack.c.b16 %v3935, %v3934
  %v3987 = vpack.c.b16 %v3937, %v3936
  %v3988 = vpack.c.b16 %v3939, %v3938
  %v3989 = vpack.c.b16 %v3941, %v3940
  %v3990 = vpack.c.b16 %v3943, %v3942
  %v3991 = vpack.c.b16 %v3945, %v3944
  %v3992 = vpack.c.b16 %v3947, %v3946
  %v3993 = vpack.c.b16 %v3949, %v3948
  %v3994 = vpack.c.b16 %v3951, %v3950
  %v3995 = vpack.c.b16 %v3953, %v3952
  %v3996 = vpack.c.b16 %v3955, %v3954
  %v3997 = vpack.c.b16 %v3957, %v3956
  %v3998 = vpack.c.b16 %v3959, %v3958
  %v3999 = vpack.c.b16 %v3961, %v3960
  %v4000 = vpack.c.b16 %v3963, %v3962
  %v4001 = vpack.c.b16 %v3965, %v3964
  %v4002 = vpack.c.b16 %v3967, %v3966
  %v4003 = vpack.c.b16 %v3969, %v3968
  %v4004 = vpack.c.b16 %v3971, %v3970
  %v4005 = vpack.c.b16 %v3973, %v3972
  %4038 = vmatpush.bf16.msra.mxu0 %v3981
  %4039 = vmatpush.bf16.msra.mxu0 %v3980
  %4040 = vmatpush.bf16.msra.mxu0 %v3979
  %4041 = vmatpush.bf16.msra.mxu0 %v3978
  %4042 = vmatpush.bf16.msra.mxu0 %v3977
  %4043 = vmatpush.bf16.msra.mxu0 %v3976
  %4044 = vmatpush.bf16.msra.mxu0 %v3975
  %4045 = vmatpush.bf16.msra.mxu0 %v3974
  %4046 = vmatmul.bf16.gmra.mxu0 %v3766
  %v4047 = vpop.f32.mrf.mxu0
  %v4048 = vadd.f32 %v3765, %v4047
  %v4049 = vpop.f32.mrf.mxu0
  %v4050 = vadd.f32 %v3765, %v4049
  %4051 = vmatmul.bf16.gmra.mxu0 %v3770
  %v4052 = vpop.f32.mrf.mxu0
  %v4053 = vadd.f32 %v3765, %v4052
  %v4054 = vpop.f32.mrf.mxu0
  %v4055 = vadd.f32 %v3765, %v4054
  %4056 = vmatmul.bf16.gmra.mxu0 %v3774
  %v4057 = vpop.f32.mrf.mxu0
  %v4058 = vadd.f32 %v3765, %v4057
  %v4059 = vpop.f32.mrf.mxu0
  %v4060 = vadd.f32 %v3765, %v4059
  %4061 = vmatmul.bf16.gmra.mxu0 %v3778
  %v4062 = vpop.f32.mrf.mxu0
  %v4063 = vadd.f32 %v3765, %v4062
  %v4064 = vpop.f32.mrf.mxu0
  %v4065 = vadd.f32 %v3765, %v4064
  %4066 = vdwg.mxu0
  %4067 = vmatpush.bf16.msra.mxu0 %v3989
  %4068 = vmatpush.bf16.msra.mxu0 %v3988
  %4069 = vmatpush.bf16.msra.mxu0 %v3987
  %4070 = vmatpush.bf16.msra.mxu0 %v3986
  %4071 = vmatpush.bf16.msra.mxu0 %v3985
  %4072 = vmatpush.bf16.msra.mxu0 %v3984
  %4073 = vmatpush.bf16.msra.mxu0 %v3983
  %4074 = vmatpush.bf16.msra.mxu0 %v3982
  %4075 = vmatmul.bf16.gmra.mxu0 %v3767
  %v4076 = vpop.f32.mrf.mxu0
  %v4077 = vadd.f32 %v4048, %v4076
  %v4078 = vpop.f32.mrf.mxu0
  %v4079 = vadd.f32 %v4050, %v4078
  %4080 = vmatmul.bf16.gmra.mxu0 %v3771
  %v4081 = vpop.f32.mrf.mxu0
  %v4082 = vadd.f32 %v4053, %v4081
  %v4083 = vpop.f32.mrf.mxu0
  %v4084 = vadd.f32 %v4055, %v4083
  %4085 = vmatmul.bf16.gmra.mxu0 %v3775
  %v4086 = vpop.f32.mrf.mxu0
  %v4087 = vadd.f32 %v4058, %v4086
  %v4088 = vpop.f32.mrf.mxu0
  %v4089 = vadd.f32 %v4060, %v4088
  %4090 = vmatmul.bf16.gmra.mxu0 %v3779
  %v4091 = vpop.f32.mrf.mxu0
  %v4092 = vadd.f32 %v4063, %v4091
  %v4093 = vpop.f32.mrf.mxu0
  %v4094 = vadd.f32 %v4065, %v4093
  %4095 = vdwg.mxu0
  %4096 = vmatpush.bf16.msra.mxu0 %v3997
  %4097 = vmatpush.bf16.msra.mxu0 %v3996
  %4098 = vmatpush.bf16.msra.mxu0 %v3995
  %4099 = vmatpush.bf16.msra.mxu0 %v3994
  %4100 = vmatpush.bf16.msra.mxu0 %v3993
  %4101 = vmatpush.bf16.msra.mxu0 %v3992
  %4102 = vmatpush.bf16.msra.mxu0 %v3991
  %4103 = vmatpush.bf16.msra.mxu0 %v3990
  %4104 = vmatmul.bf16.gmra.mxu0 %v3768
  %v4105 = vpop.f32.mrf.mxu0
  %v4106 = vadd.f32 %v4077, %v4105
  %v4107 = vpop.f32.mrf.mxu0
  %v4108 = vadd.f32 %v4079, %v4107
  %4109 = vmatmul.bf16.gmra.mxu0 %v3772
  %v4110 = vpop.f32.mrf.mxu0
  %v4111 = vadd.f32 %v4082, %v4110
  %v4112 = vpop.f32.mrf.mxu0
  %v4113 = vadd.f32 %v4084, %v4112
  %4114 = vmatmul.bf16.gmra.mxu0 %v3776
  %v4115 = vpop.f32.mrf.mxu0
  %v4116 = vadd.f32 %v4087, %v4115
  %v4117 = vpop.f32.mrf.mxu0
  %v4118 = vadd.f32 %v4089, %v4117
  %4119 = vmatmul.bf16.gmra.mxu0 %v3780
  %v4120 = vpop.f32.mrf.mxu0
  %v4121 = vadd.f32 %v4092, %v4120
  %v4122 = vpop.f32.mrf.mxu0
  %v4123 = vadd.f32 %v4094, %v4122
  %4124 = vdwg.mxu0
  %4125 = vmatpush.bf16.msra.mxu0 %v4005
  %4126 = vmatpush.bf16.msra.mxu0 %v4004
  %4127 = vmatpush.bf16.msra.mxu0 %v4003
  %4128 = vmatpush.bf16.msra.mxu0 %v4002
  %4129 = vmatpush.bf16.msra.mxu0 %v4001
  %4130 = vmatpush.bf16.msra.mxu0 %v4000
  %4131 = vmatpush.bf16.msra.mxu0 %v3999
  %4132 = vmatpush.bf16.msra.mxu0 %v3998
  %4133 = vmatmul.bf16.gmra.mxu0 %v3769
  %v4134 = vpop.f32.mrf.mxu0
  %v4135 = vadd.f32 %v4106, %v4134
  %v4136 = vpop.f32.mrf.mxu0
  %v4137 = vadd.f32 %v4108, %v4136
  %4138 = vmatmul.bf16.gmra.mxu0 %v3773
  %v4139 = vpop.f32.mrf.mxu0
  %v4140 = vadd.f32 %v4111, %v4139
  %v4141 = vpop.f32.mrf.mxu0
  %v4142 = vadd.f32 %v4113, %v4141
  %4143 = vmatmul.bf16.gmra.mxu0 %v3777
  %v4144 = vpop.f32.mrf.mxu0
  %v4145 = vadd.f32 %v4116, %v4144
  %v4146 = vpop.f32.mrf.mxu0
  %v4147 = vadd.f32 %v4118, %v4146
  %4148 = vmatmul.bf16.gmra.mxu0 %v3781
  %v4149 = vpop.f32.mrf.mxu0
  %v4150 = vadd.f32 %v4121, %v4149
  %v4151 = vpop.f32.mrf.mxu0
  %v4152 = vadd.f32 %v4123, %v4151
  %4153 = vdwg.mxu0
  %v4154 = vadd.f32 %v4135, 1e-09
  %v4155 = vadd.f32 %v4137, 1e-09
  %v4156 = vadd.f32 %v4140, 1e-09
  %v4157 = vadd.f32 %v4142, 1e-09
  %v4158 = vadd.f32 %v4145, 1e-09
  %v4159 = vadd.f32 %v4147, 1e-09
  %v4160 = vadd.f32 %v4150, 1e-09
  %v4161 = vadd.f32 %v4152, 1e-09
  %v4162 = vmin.f32 %v4154, 0.0
  %v4163 = vmin.f32 %v4155, 0.0
  %v4164 = vmin.f32 %v4156, 0.0
  %v4165 = vmin.f32 %v4157, 0.0
  %v4166 = vmin.f32 %v4158, 0.0
  %v4167 = vmin.f32 %v4159, 0.0
  %v4168 = vmin.f32 %v4160, 0.0
  %v4169 = vmin.f32 %v4161, 0.0
  %v4170 = vand.u32 2147483647, %v4154
  %v4171 = vand.u32 2147483647, %v4155
  %v4172 = vand.u32 2147483647, %v4156
  %v4173 = vand.u32 2147483647, %v4157
  %v4174 = vand.u32 2147483647, %v4158
  %v4175 = vand.u32 2147483647, %v4159
  %v4176 = vand.u32 2147483647, %v4160
  %v4177 = vand.u32 2147483647, %v4161
  %v4178 = vsub.f32 0.0, %v4170
  %v4179 = vsub.f32 0.0, %v4171
  %v4180 = vsub.f32 0.0, %v4172
  %v4181 = vsub.f32 0.0, %v4173
  %v4182 = vsub.f32 0.0, %v4174
  %v4183 = vsub.f32 0.0, %v4175
  %v4184 = vsub.f32 0.0, %v4176
  %v4185 = vsub.f32 0.0, %v4177
  %v4186 = vmul.f32 %v4178, 1.442695
  %v4187 = vpow.pop %v4186
  %v4188 = vmul.f32 %v4179, 1.442695
  %v4189 = vpow.pop %v4188
  %v4190 = vmul.f32 %v4180, 1.442695
  %v4191 = vpow.pop %v4190
  %v4192 = vmul.f32 %v4181, 1.442695
  %v4193 = vpow.pop %v4192
  %v4194 = vmul.f32 %v4182, 1.442695
  %v4195 = vpow.pop %v4194
  %v4196 = vmul.f32 %v4183, 1.442695
  %v4197 = vpow.pop %v4196
  %v4198 = vmul.f32 %v4184, 1.442695
  %v4199 = vpow.pop %v4198
  %v4200 = vmul.f32 %v4185, 1.442695
  %v4201 = vpow.pop %v4200
  %v4202 = vadd.f32 %v4187, 1.0
  %v4203 = vlog2.pop %v4202
  %v4204 = vmul.f32 %v4203, 0.6931472
  %v4205 = vmul.f32 -0.5, %v4187
  %v4206 = vadd.f32 %v4205, 1.0
  %v4207 = vmul.f32 %v4206, %v4187
  %v4208 = vand.u32 2147483647, %v4187
  %vm4209 = vcmp.lt.f32.partialorder %v4208, 0.0004427343
  %v4210 = vsel %vm4209, %v4207, %v4204
  %v4211 = vadd.f32 %v4189, 1.0
  %v4212 = vlog2.pop %v4211
  %v4213 = vmul.f32 %v4212, 0.6931472
  %v4214 = vmul.f32 -0.5, %v4189
  %v4215 = vadd.f32 %v4214, 1.0
  %v4216 = vmul.f32 %v4215, %v4189
  %v4217 = vand.u32 2147483647, %v4189
  %vm4218 = vcmp.lt.f32.partialorder %v4217, 0.0004427343
  %v4219 = vsel %vm4218, %v4216, %v4213
  %v4220 = vadd.f32 %v4191, 1.0
  %v4221 = vlog2.pop %v4220
  %v4222 = vmul.f32 %v4221, 0.6931472
  %v4223 = vmul.f32 -0.5, %v4191
  %v4224 = vadd.f32 %v4223, 1.0
  %v4225 = vmul.f32 %v4224, %v4191
  %v4226 = vand.u32 2147483647, %v4191
  %vm4227 = vcmp.lt.f32.partialorder %v4226, 0.0004427343
  %v4228 = vsel %vm4227, %v4225, %v4222
  %v4229 = vadd.f32 %v4193, 1.0
  %v4230 = vlog2.pop %v4229
  %v4231 = vmul.f32 %v4230, 0.6931472
  %v4232 = vmul.f32 -0.5, %v4193
  %v4233 = vadd.f32 %v4232, 1.0
  %v4234 = vmul.f32 %v4233, %v4193
  %v4235 = vand.u32 2147483647, %v4193
  %vm4236 = vcmp.lt.f32.partialorder %v4235, 0.0004427343
  %v4237 = vsel %vm4236, %v4234, %v4231
  %v4238 = vadd.f32 %v4195, 1.0
  %v4239 = vlog2.pop %v4238
  %v4240 = vmul.f32 %v4239, 0.6931472
  %v4241 = vmul.f32 -0.5, %v4195
  %v4242 = vadd.f32 %v4241, 1.0
  %v4243 = vmul.f32 %v4242, %v4195
  %v4244 = vand.u32 2147483647, %v4195
  %vm4245 = vcmp.lt.f32.partialorder %v4244, 0.0004427343
  %v4246 = vsel %vm4245, %v4243, %v4240
  %v4247 = vadd.f32 %v4197, 1.0
  %v4248 = vlog2.pop %v4247
  %v4249 = vmul.f32 %v4248, 0.6931472
  %v4250 = vmul.f32 -0.5, %v4197
  %v4251 = vadd.f32 %v4250, 1.0
  %v4252 = vmul.f32 %v4251, %v4197
  %v4253 = vand.u32 2147483647, %v4197
  %vm4254 = vcmp.lt.f32.partialorder %v4253, 0.0004427343
  %v4255 = vsel %vm4254, %v4252, %v4249
  %v4256 = vadd.f32 %v4199, 1.0
  %v4257 = vlog2.pop %v4256
  %v4258 = vmul.f32 %v4257, 0.6931472
  %v4259 = vmul.f32 -0.5, %v4199
  %v4260 = vadd.f32 %v4259, 1.0
  %v4261 = vmul.f32 %v4260, %v4199
  %v4262 = vand.u32 2147483647, %v4199
  %vm4263 = vcmp.lt.f32.partialorder %v4262, 0.0004427343
  %v4264 = vsel %vm4263, %v4261, %v4258
  %v4265 = vadd.f32 %v4201, 1.0
  %v4266 = vlog2.pop %v4265
  %v4267 = vmul.f32 %v4266, 0.6931472
  %v4268 = vmul.f32 -0.5, %v4201
  %v4269 = vadd.f32 %v4268, 1.0
  %v4270 = vmul.f32 %v4269, %v4201
  %v4271 = vand.u32 2147483647, %v4201
  %vm4272 = vcmp.lt.f32.partialorder %v4271, 0.0004427343
  %v4273 = vsel %vm4272, %v4270, %v4267
  %v4274 = vsub.f32 %v4162, %v4210
  %v4275 = vsub.f32 %v4163, %v4219
  %v4276 = vsub.f32 %v4164, %v4228
  %v4277 = vsub.f32 %v4165, %v4237
  %v4278 = vsub.f32 %v4166, %v4246
  %v4279 = vsub.f32 %v4167, %v4255
  %v4280 = vsub.f32 %v4168, %v4264
  %v4281 = vsub.f32 %v4169, %v4273
  %v4282 = vlaneseq
  %v4283 = vand.u32 %v4282, 127
  %vm4284 = vcmp.lt.s32.totalorder %v4283, 18
  %v4285 = vld [vmem:[%s1] sm:$0xff]
  %v4286 = vld [vmem:[%s1 + $0x8] sm:$0xff]
  %v4287 = vld [vmem:[%s1 + $0x10] sm:$0xff]
  %v4288 = vld [vmem:[%s1 + $0x18] sm:$0xff]
  %v4289 = vld [vmem:[%s1 + $0x20] sm:$0xff]
  %v4290 = vld [vmem:[%s1 + $0x28] sm:$0xff]
  %v4291 = vld [vmem:[%s1 + $0x30] sm:$0xff]
  %v4292 = vld [vmem:[%s1 + $0x38] sm:$0xff]
  %v4293 = vmax.f32 %v4274, 0.0
  %v4294 = vmax.f32 %v4275, 0.0
  %v4295 = vmax.f32 %v4276, 0.0
  %v4296 = vmax.f32 %v4277, 0.0
  %v4297 = vmax.f32 %v4278, 0.0
  %v4298 = vmax.f32 %v4279, 0.0
  %v4299 = vmax.f32 %v4280, 0.0
  %v4300 = vmax.f32 %v4281, 0.0
  %v4301 = vmul.f32 %v4274, %v4285
  %v4302 = vmul.f32 %v4275, %v4286
  %v4303 = vmul.f32 %v4276, %v4287
  %v4304 = vmul.f32 %v4277, %v4288
  %v4305 = vmul.f32 %v4278, %v4289
  %v4306 = vmul.f32 %v4279, %v4290
  %v4307 = vmul.f32 %v4280, %v4291
  %v4308 = vmul.f32 %v4281, %v4292
  %v4309 = vsub.f32 %v4293, %v4301
  %v4310 = vsub.f32 %v4294, %v4302
  %v4311 = vsub.f32 %v4295, %v4303
  %v4312 = vsub.f32 %v4296, %v4304
  %v4313 = vsub.f32 %v4297, %v4305
  %v4314 = vsub.f32 %v4298, %v4306
  %v4315 = vsub.f32 %v4299, %v4307
  %v4316 = vsub.f32 %v4300, %v4308
  %v4317 = vand.u32 2147483647, %v4274
  %v4318 = vand.u32 2147483647, %v4275
  %v4319 = vand.u32 2147483647, %v4276
  %v4320 = vand.u32 2147483647, %v4277
  %v4321 = vand.u32 2147483647, %v4278
  %v4322 = vand.u32 2147483647, %v4279
  %v4323 = vand.u32 2147483647, %v4280
  %v4324 = vand.u32 2147483647, %v4281
  %v4325 = vsub.f32 0.0, %v4317
  %v4326 = vsub.f32 0.0, %v4318
  %v4327 = vsub.f32 0.0, %v4319
  %v4328 = vsub.f32 0.0, %v4320
  %v4329 = vsub.f32 0.0, %v4321
  %v4330 = vsub.f32 0.0, %v4322
  %v4331 = vsub.f32 0.0, %v4323
  %v4332 = vsub.f32 0.0, %v4324
  %v4333 = vmul.f32 %v4325, 1.442695
  %v4334 = vpow.pop %v4333
  %v4335 = vmul.f32 %v4326, 1.442695
  %v4336 = vpow.pop %v4335
  %v4337 = vmul.f32 %v4327, 1.442695
  %v4338 = vpow.pop %v4337
  %v4339 = vmul.f32 %v4328, 1.442695
  %v4340 = vpow.pop %v4339
  %v4341 = vmul.f32 %v4329, 1.442695
  %v4342 = vpow.pop %v4341
  %v4343 = vmul.f32 %v4330, 1.442695
  %v4344 = vpow.pop %v4343
  %v4345 = vmul.f32 %v4331, 1.442695
  %v4346 = vpow.pop %v4345
  %v4347 = vmul.f32 %v4332, 1.442695
  %v4348 = vpow.pop %v4347
  %v4349 = vadd.f32 %v4334, 1.0
  %v4350 = vlog2.pop %v4349
  %v4351 = vmul.f32 %v4350, 0.6931472
  %v4352 = vmul.f32 -0.5, %v4334
  %v4353 = vadd.f32 %v4352, 1.0
  %v4354 = vmul.f32 %v4353, %v4334
  %v4355 = vand.u32 2147483647, %v4334
  %vm4356 = vcmp.lt.f32.partialorder %v4355, 0.0004427343
  %v4357 = vsel %vm4356, %v4354, %v4351
  %v4358 = vadd.f32 %v4336, 1.0
  %v4359 = vlog2.pop %v4358
  %v4360 = vmul.f32 %v4359, 0.6931472
  %v4361 = vmul.f32 -0.5, %v4336
  %v4362 = vadd.f32 %v4361, 1.0
  %v4363 = vmul.f32 %v4362, %v4336
  %v4364 = vand.u32 2147483647, %v4336
  %vm4365 = vcmp.lt.f32.partialorder %v4364, 0.0004427343
  %v4366 = vsel %vm4365, %v4363, %v4360
  %v4367 = vadd.f32 %v4338, 1.0
  %v4368 = vlog2.pop %v4367
  %v4369 = vmul.f32 %v4368, 0.6931472
  %v4370 = vmul.f32 -0.5, %v4338
  %v4371 = vadd.f32 %v4370, 1.0
  %v4372 = vmul.f32 %v4371, %v4338
  %v4373 = vand.u32 2147483647, %v4338
  %vm4374 = vcmp.lt.f32.partialorder %v4373, 0.0004427343
  %v4375 = vsel %vm4374, %v4372, %v4369
  %v4376 = vadd.f32 %v4340, 1.0
  %v4377 = vlog2.pop %v4376
  %v4378 = vmul.f32 %v4377, 0.6931472
  %v4379 = vmul.f32 -0.5, %v4340
  %v4380 = vadd.f32 %v4379, 1.0
  %v4381 = vmul.f32 %v4380, %v4340
  %v4382 = vand.u32 2147483647, %v4340
  %vm4383 = vcmp.lt.f32.partialorder %v4382, 0.0004427343
  %v4384 = vsel %vm4383, %v4381, %v4378
  %v4385 = vadd.f32 %v4342, 1.0
  %v4386 = vlog2.pop %v4385
  %v4387 = vmul.f32 %v4386, 0.6931472
  %v4388 = vmul.f32 -0.5, %v4342
  %v4389 = vadd.f32 %v4388, 1.0
  %v4390 = vmul.f32 %v4389, %v4342
  %v4391 = vand.u32 2147483647, %v4342
  %vm4392 = vcmp.lt.f32.partialorder %v4391, 0.0004427343
  %v4393 = vsel %vm4392, %v4390, %v4387
  %v4394 = vadd.f32 %v4344, 1.0
  %v4395 = vlog2.pop %v4394
  %v4396 = vmul.f32 %v4395, 0.6931472
  %v4397 = vmul.f32 -0.5, %v4344
  %v4398 = vadd.f32 %v4397, 1.0
  %v4399 = vmul.f32 %v4398, %v4344
  %v4400 = vand.u32 2147483647, %v4344
  %vm4401 = vcmp.lt.f32.partialorder %v4400, 0.0004427343
  %v4402 = vsel %vm4401, %v4399, %v4396
  %v4403 = vadd.f32 %v4346, 1.0
  %v4404 = vlog2.pop %v4403
  %v4405 = vmul.f32 %v4404, 0.6931472
  %v4406 = vmul.f32 -0.5, %v4346
  %v4407 = vadd.f32 %v4406, 1.0
  %v4408 = vmul.f32 %v4407, %v4346
  %v4409 = vand.u32 2147483647, %v4346
  %vm4410 = vcmp.lt.f32.partialorder %v4409, 0.0004427343
  %v4411 = vsel %vm4410, %v4408, %v4405
  %v4412 = vadd.f32 %v4348, 1.0
  %v4413 = vlog2.pop %v4412
  %v4414 = vmul.f32 %v4413, 0.6931472
  %v4415 = vmul.f32 -0.5, %v4348
  %v4416 = vadd.f32 %v4415, 1.0
  %v4417 = vmul.f32 %v4416, %v4348
  %v4418 = vand.u32 2147483647, %v4348
  %vm4419 = vcmp.lt.f32.partialorder %v4418, 0.0004427343
  %v4420 = vsel %vm4419, %v4417, %v4414
  %v4421 = vadd.f32 %v4309, %v4357
  %v4422 = vadd.f32 %v4310, %v4366
  %v4423 = vadd.f32 %v4311, %v4375
  %v4424 = vadd.f32 %v4312, %v4384
  %v4425 = vadd.f32 %v4313, %v4393
  %v4426 = vadd.f32 %v4314, %v4402
  %v4427 = vadd.f32 %v4315, %v4411
  %v4428 = vadd.f32 %v4316, %v4420
  %v4429 = vsel %vm4284, %v4421, 0.0
  %v4430 = vsel %vm4284, %v4422, 0.0
  %v4431 = vsel %vm4284, %v4423, 0.0
  %v4432 = vsel %vm4284, %v4424, 0.0
  %v4433 = vsel %vm4284, %v4425, 0.0
  %v4434 = vsel %vm4284, %v4426, 0.0
  %v4435 = vsel %vm4284, %v4427, 0.0
  %v4436 = vsel %vm4284, %v4428, 0.0
  %4437 = vadd.xlane.f32.xlu0 %v4429
  %v4438 = vpop.xlane.xlu0 %4437
  %4439 = vadd.xlane.f32.xlu0 %v4430
  %v4440 = vpop.xlane.xlu0 %4439
  %4441 = vadd.xlane.f32.xlu0 %v4431
  %v4442 = vpop.xlane.xlu0 %4441
  %4443 = vadd.xlane.f32.xlu0 %v4432
  %v4444 = vpop.xlane.xlu0 %4443
  %4445 = vadd.xlane.f32.xlu0 %v4433
  %v4446 = vpop.xlane.xlu0 %4445
  %4447 = vadd.xlane.f32.xlu0 %v4434
  %v4448 = vpop.xlane.xlu0 %4447
  %4449 = vadd.xlane.f32.xlu0 %v4435
  %v4450 = vpop.xlane.xlu0 %4449
  %4451 = vadd.xlane.f32.xlu0 %v4436
  %v4452 = vpop.xlane.xlu0 %4451
  %v4453 = vsel %vm4284, %v4274, 0.0
  %v4454 = vsel %vm4284, %v4275, 0.0
  %v4455 = vsel %vm4284, %v4276, 0.0
  %v4456 = vsel %vm4284, %v4277, 0.0
  %v4457 = vsel %vm4284, %v4278, 0.0
  %v4458 = vsel %vm4284, %v4279, 0.0
  %v4459 = vsel %vm4284, %v4280, 0.0
  %v4460 = vsel %vm4284, %v4281, 0.0
  %vm4461 = vcmp.eq.s32.totalorder %v4283, 18
  %v4462 = vsel %vm4461, %v4438, 0.0
  %v4463 = vsel %vm4461, %v4440, 0.0
  %v4464 = vsel %vm4461, %v4442, 0.0
  %v4465 = vsel %vm4461, %v4444, 0.0
  %v4466 = vsel %vm4461, %v4446, 0.0
  %v4467 = vsel %vm4461, %v4448, 0.0
  %v4468 = vsel %vm4461, %v4450, 0.0
  %v4469 = vsel %vm4461, %v4452, 0.0
  %v4470 = vadd.f32 %v4453, %v4462
  %v4471 = vadd.f32 %v4454, %v4463
  %v4472 = vadd.f32 %v4455, %v4464
  %v4473 = vadd.f32 %v4456, %v4465
  %v4474 = vadd.f32 %v4457, %v4466
  %v4475 = vadd.f32 %v4458, %v4467
  %v4476 = vadd.f32 %v4459, %v4468
  %v4477 = vadd.f32 %v4460, %v4469
  %4478 = vst [vmem:[%s7] sm:$0xff] %v4470
  %4479 = vst [vmem:[%s7 + $0x8] sm:$0xff] %v4471
  %4480 = vst [vmem:[%s7 + $0x10] sm:$0xff] %v4472
  %4481 = vst [vmem:[%s7 + $0x18] sm:$0xff] %v4473
  %4482 = vst [vmem:[%s7 + $0x20] sm:$0xff] %v4474
  %4483 = vst [vmem:[%s7 + $0x28] sm:$0xff] %v4475
  %4484 = vst [vmem:[%s7 + $0x30] sm:$0xff] %v4476
  %4485 = vst [vmem:[%s7 + $0x38] sm:$0xff] %v4477
  // Predicated region
  $region30: #{decoder_b_forward.1} parent=0 // pred_check
    _
  $region31: #{decoder_b_forward.1} parent=0 // pred_check_branch
    %4487 = sbr.rel (0) target = $region33
  $region32: #{decoder_b_forward.1} parent=0 // pred_region
    _
  $region33: #{decoder_b_forward.1} parent=0 // pred_fallthru
    _
  // Predicated region
  $region34: #{decoder_b_forward.1} parent=0 // pred_check
    _
  $region35: #{decoder_b_forward.1} parent=0 // pred_check_branch
    %4489 = sbr.rel (0) target = $region37
  $region36: #{decoder_b_forward.1} parent=0 // pred_region
    _
  $region37: #{decoder_b_forward.1} parent=0 // pred_fallthru
    _
  %4490 = vsyncmov [#allocation5]
  %s4491 = vpop.sfrf %4490
  %p4492 = scmp.eq.s32.totalorder %s4491, 0
  %p4493 = pneg %p4492
  %4495 = shalt.err (%p4493)
  %s4496 = scalar_lea.sflag [#allocation5], 1
  %4497 = vsyncmov %s4496
  %s4498 = vpop.sfrf %4497
  %p4499 = scmp.eq.s32.totalorder %s4498, 0
  %p4500 = pneg %p4499
  %4502 = shalt.err (%p4500)
  %s4503 = scalar_lea.sflag [#allocation5], 2
  %4504 = vsyncmov %s4503
  %s4505 = vpop.sfrf %4504
  %p4506 = scmp.eq.s32.totalorder %s4505, 0
  %p4507 = pneg %p4506
  %4509 = shalt.err (%p4507)

</llo_original>
